<compile_context>
chip_gen: v7x
topology: tpu7x:2x2x1
jax: 0.10.0
libtpu: 0.0.40
codegen_flags: <defaults>
</compile_context>

<pallas_src>
import functools
import math

import numpy as np
import jax
import jax.numpy as jnp
from jax.experimental import pallas as pl
from jax.experimental.pallas import tpu as pltpu

EPS = 1e-5


# ----------------------------- in-kernel helpers ---------------------------- #

def _conv3x3_im2col(xpad, w_mat, col_ref, H, W, C):
    """3x3 conv (input already zero-padded by 1) as one im2col matmul.

    xpad: (H+2, W+2, C) f32 value; col_ref: (H*W, 9*C) VMEM scratch;
    w_mat: (9*C, Co) value with rows ordered (kh*3+kw)*C + c.
    Returns (H*W, Co) f32.
    """
    for kh in range(3):
        for kw in range(3):
            t = kh * 3 + kw
            col_ref[:, t * C:(t + 1) * C] = (
                xpad[kh:kh + H, kw:kw + W, :].reshape(H * W, C))
    return jnp.dot(col_ref[...], w_mat, preferred_element_type=jnp.float32)


def _mix_then_upsample(a, w_1x1, awt, u_ref, H, W):
    """1x1 conv + bilinear x2 (align_corners=True), separable form.

    a: (H*W, Cin) f32 (NHWC-flat); w_1x1: (Cin, Cout); awt: (W, 2W) = Aw^T.
    Writes u_ref: (Cout, 2H*2W) (NCHW-flat, lane-dense).
    1x1 channel mixing and bilinear upsampling commute, so mixing first keeps the
    big matmul at HW x Cin x Cout; row interpolation uses trace-time lerp weights
    (2 taps), column interpolation is one small (W, 2W) matmul per output row block.
    """
    Ho = 2 * H
    z = jnp.dot(a, w_1x1, preferred_element_type=jnp.float32)     # (HW, Cout)
    zt = z.T                                                       # (Cout, HW)
    for g in range(Ho):
        src = g * (H - 1) / (Ho - 1)
        h0 = int(math.floor(src))
        f = float(src - h0)
        h1 = min(h0 + 1, H - 1)
        row = zt[:, h0 * W:(h0 + 1) * W]                           # (Cout, W)
        if f > 0.0:
            row = (1.0 - f) * row + f * zt[:, h1 * W:(h1 + 1) * W]
        u_ref[:, g * 2 * W:(g + 1) * 2 * W] = jnp.dot(
            row, awt, preferred_element_type=jnp.float32)          # (Cout, 2W)


def _moments_rows(s, count):
    """s: (2, C) = [sum; sum_sq] -> mean (1, C), rsqrt(var + eps) (1, C)."""
    mean = s[0:1, :] * (1.0 / count)
    var = s[1:2, :] * (1.0 / count) - mean * mean
    return mean, jax.lax.rsqrt(var + EPS)


def _moments_cols(s, count):
    """s: (C, 2) = [sum | sum_sq] -> mean (C, 1), rsqrt(var + eps) (C, 1)."""
    mean = s[:, 0:1] * (1.0 / count)
    var = s[:, 1:2] * (1.0 / count) - mean * mean
    return mean, jax.lax.rsqrt(var + EPS)


# ------------------------------ fused kernels ------------------------------- #

def _upres_plain_kernel(xp_ref, w1_ref, w2_ref, o_ref,
                        h1_ref, h2_ref, apad_ref, col_ref, s1_ref, s2_ref,
                        *, B, H, W, Cin, Cout):
    """upsample=False. grid=(phase, batch): p0 conv1 + bn1 stats; p1 bn1->relu->
    conv2 + bn2 stats; p2 bn2 + identity residual + relu -> store (NCHW-flat)."""
    p = pl.program_id(0)
    b = pl.program_id(1)
    HW = H * W

    @pl.when((p == 0) & (b == 0))
    def _():
        s1_ref[...] = jnp.zeros_like(s1_ref)

    @pl.when(p == 0)
    def _():
        xpad = xp_ref[0].astype(jnp.float32)                        # (H+2, W+2, Cin)
        y1 = _conv3x3_im2col(xpad, w1_ref[...], col_ref, H, W, Cin)  # (HW, Cin)
        h1_ref[b] = y1
        s1_ref[0:1, :] += jnp.sum(y1, axis=0, keepdims=True)
        s1_ref[1:2, :] += jnp.sum(y1 * y1, axis=0, keepdims=True)

    @pl.when((p == 1) & (b == 0))
    def _():
        s2_ref[...] = jnp.zeros_like(s2_ref)

    @pl.when(p == 1)
    def _():
        mean1, inv1 = _moments_rows(s1_ref[...], float(B * HW))
        a = jnp.maximum((h1_ref[b] - mean1) * inv1, 0.0)            # (HW, Cin)
        apad_ref[...] = jnp.zeros_like(apad_ref)
        apad_ref[1:H + 1, 1:W + 1, :] = a.reshape(H, W, Cin)
        y2 = _conv3x3_im2col(apad_ref[...], w2_ref[...], col_ref, H, W, Cin)  # (HW, Cout)
        y2t = y2.T                                                  # (Cout, HW) lane-dense
        h2_ref[b] = y2t
        s2_ref[:, 0:1] += jnp.sum(y2t, axis=1, keepdims=True)
        s2_ref[:, 1:2] += jnp.sum(y2t * y2t, axis=1, keepdims=True)

    @pl.when(p == 2)
    def _():
        mean2, inv2 = _moments_cols(s2_ref[...], float(B * HW))
        xres = xp_ref[0][1:H + 1, 1:W + 1, :].astype(jnp.float32).reshape(HW, Cin)
        y = (h2_ref[b] - mean2) * inv2 + xres.T                     # (Cout, HW)
        o_ref[0] = jnp.maximum(y, 0.0).astype(o_ref.dtype)


def _upres_up_kernel(xp_ref, w1_ref, w2_ref, wup_ref, awt_ref, o_ref,
                     h1_ref, h2_ref, r_ref, col_ref, u_ref, s1_ref, s2_ref, sr_ref,
                     *, B, H, W, Cin, Cout):
    """upsample=True. grid=(phase, batch): p0 conv1 + bn1 stats; p1 bn1->relu->
    (upsample+1x1) on both branches + bn2/up_bn stats; p2 normalize + add + relu."""
    p = pl.program_id(0)
    b = pl.program_id(1)
    HW = H * W
    HWo = 4 * HW

    @pl.when((p == 0) & (b == 0))
    def _():
        s1_ref[...] = jnp.zeros_like(s1_ref)

    @pl.when(p == 0)
    def _():
        xpad = xp_ref[0].astype(jnp.float32)
        y1 = _conv3x3_im2col(xpad, w1_ref[...], col_ref, H, W, Cin)  # (HW, Cin)
        h1_ref[b] = y1
        s1_ref[0:1, :] += jnp.sum(y1, axis=0, keepdims=True)
        s1_ref[1:2, :] += jnp.sum(y1 * y1, axis=0, keepdims=True)

    @pl.when((p == 1) & (b == 0))
    def _():
        s2_ref[...] = jnp.zeros_like(s2_ref)
        sr_ref[...] = jnp.zeros_like(sr_ref)

    @pl.when(p == 1)
    def _():
        mean1, inv1 = _moments_rows(s1_ref[...], float(B * HW))
        a = jnp.maximum((h1_ref[b] - mean1) * inv1, 0.0)            # (HW, Cin)
        # main branch: conv2 = bilinear x2 + 1x1 conv
        _mix_then_upsample(a, w2_ref[...], awt_ref[...], u_ref, H, W)
        um = u_ref[...]                                             # (Cout, 4HW)
        h2_ref[b] = um
        s2_ref[:, 0:1] += jnp.sum(um, axis=1, keepdims=True)
        s2_ref[:, 1:2] += jnp.sum(um * um, axis=1, keepdims=True)
        # residual branch: up_conv = bilinear x2 + 1x1 conv on x
        xres = xp_ref[0][1:H + 1, 1:W + 1, :].astype(jnp.float32).reshape(HW, Cin)
        _mix_then_upsample(xres, wup_ref[...], awt_ref[...], u_ref, H, W)
        ur = u_ref[...]
        r_ref[b] = ur
        sr_ref[:, 0:1] += jnp.sum(ur, axis=1, keepdims=True)
        sr_ref[:, 1:2] += jnp.sum(ur * ur, axis=1, keepdims=True)

    @pl.when(p == 2)
    def _():
        mean2, inv2 = _moments_cols(s2_ref[...], float(B * HWo))
        meanr, invr = _moments_cols(sr_ref[...], float(B * HWo))
        y = (h2_ref[b] - mean2) * inv2 + (r_ref[b] - meanr) * invr
        o_ref[0] = jnp.maximum(y, 0.0).astype(o_ref.dtype)


# ------------------------------- UpResBlock --------------------------------- #

def up_res_block(x_nchw, params, upsample, domain=-1):
    """Pallas forward of UpResBlock. Input/output are NCHW like PyTorch."""
    B, Cin, H, W = x_nchw.shape
    # NCHW -> NHWC + zero pad of 1 (for the 3x3 conv windows), applied once on the
    # small input; everything downstream lives in VMEM inside one pallas_call.
    xp = jnp.pad(jnp.transpose(x_nchw, (0, 2, 3, 1)),
                 ((0, 0), (1, 1), (1, 1), (0, 0)))

    if upsample:
        Cout = params["w2_1x1"].shape[1]
        Ho, Wo = 2 * H, 2 * W
        kernel = functools.partial(_upres_up_kernel, B=B, H=H, W=W, Cin=Cin, Cout=Cout)
        grid_spec = pltpu.PrefetchScalarGridSpec(
            num_scalar_prefetch=0,
            grid=(3, B),                               # (phase, batch)
            in_specs=[
                pl.BlockSpec((1, H + 2, W + 2, Cin), lambda p, b: (b, 0, 0, 0)),
                pl.BlockSpec((9 * Cin, Cin), lambda p, b: (0, 0)),
                pl.BlockSpec((Cin, Cout), lambda p, b: (0, 0)),
                pl.BlockSpec((Cin, Cout), lambda p, b: (0, 0)),
                pl.BlockSpec((W, 2 * W), lambda p, b: (0, 0)),
            ],
            out_specs=pl.BlockSpec((1, Cout, Ho * Wo), lambda p, b: (b, 0, 0)),
            scratch_shapes=[
                pltpu.VMEM((B, H * W, Cin), jnp.float32),       # conv1 outputs
                pltpu.VMEM((B, Cout, Ho * Wo), jnp.float32),    # conv2 branch
                pltpu.VMEM((B, Cout, Ho * Wo), jnp.float32),    # residual branch
                pltpu.VMEM((H * W, 9 * Cin), jnp.float32),      # im2col buffer
                pltpu.VMEM((Cout, Ho * Wo), jnp.float32),       # upsample buffer
                pltpu.VMEM((2, Cin), jnp.float32),              # bn1 sum / sumsq
                pltpu.VMEM((Cout, 2), jnp.float32),             # bn2 sum / sumsq
                pltpu.VMEM((Cout, 2), jnp.float32),             # up_bn sum / sumsq
            ],
        )
        args = (xp, params["w1_mat"], params["w2_1x1"], params["wup_1x1"], params["awt"])
    else:
        Cout = params["w2_mat"].shape[1]
        assert Cout == Cin, "identity residual requires in_channel == out_channel"
        Ho, Wo = H, W
        kernel = functools.partial(_upres_plain_kernel, B=B, H=H, W=W, Cin=Cin, Cout=Cout)
        grid_spec = pltpu.PrefetchScalarGridSpec(
            num_scalar_prefetch=0,
            grid=(3, B),
            in_specs=[
                pl.BlockSpec((1, H + 2, W + 2, Cin), lambda p, b: (b, 0, 0, 0)),
                pl.BlockSpec((9 * Cin, Cin), lambda p, b: (0, 0)),
                pl.BlockSpec((9 * Cin, Cout), lambda p, b: (0, 0)),
            ],
            out_specs=pl.BlockSpec((1, Cout, Ho * Wo), lambda p, b: (b, 0, 0)),
            scratch_shapes=[
                pltpu.VMEM((B, H * W, Cin), jnp.float32),         # conv1 outputs
                pltpu.VMEM((B, Cout, H * W), jnp.float32),        # conv2 outputs
                pltpu.VMEM((H + 2, W + 2, Cin), jnp.float32),     # padded activation
                pltpu.VMEM((H * W, 9 * Cin), jnp.float32),        # im2col buffer
                pltpu.VMEM((2, Cin), jnp.float32),                # bn1 sum / sumsq
                pltpu.VMEM((Cout, 2), jnp.float32),               # bn2 sum / sumsq
            ],
        )
        args = (xp, params["w1_mat"], params["w2_mat"])

    out_flat = pl.pallas_call(
        kernel,
        out_shape=jax.ShapeDtypeStruct((B, Cout, Ho * Wo), x_nchw.dtype),
        grid_spec=grid_spec,
        compiler_params=pltpu.CompilerParams(
            # Both grid axes must run sequentially: phases are ordered and BN batch
            # statistics accumulate across the batch axis in VMEM scratch.
            dimension_semantics=("arbitrary", "arbitrary")),
    )(*args)

    # TODO(synk): domain-conditional BN variants (domain >= 0) are not modeled; only
    # the default nn.BatchNorm2d(affine=False) path (domain = -1) is implemented.
    # (B, Cout, Ho*Wo) is already NCHW-flat; splitting the minor dim is a free reshape.
    return out_flat.reshape(B, Cout, Ho, Wo), domain


# -------------------------- params / reference glue ------------------------- #

def _interp_matrix(n):
    """(2n, n) bilinear interpolation matrix, scale_factor=2, align_corners=True."""
    out = 2 * n
    i = np.arange(out)
    src = i * (n - 1) / (out - 1)
    i0 = np.floor(src).astype(np.int64)
    i1 = np.minimum(i0 + 1, n - 1)
    frac = (src - i0).astype(np.float32)
    A = np.zeros((out, n), np.float32)
    np.add.at(A, (i, i0), 1.0 - frac)
    np.add.at(A, (i, i1), frac)
    return A


def init_params(key, in_ch, out_ch, H, W, upsample):
    k1, k2, k3 = jax.random.split(key, 3)
    w1 = 0.1 * jax.random.normal(k1, (in_ch, in_ch, 3, 3), jnp.float32)       # OIHW
    params = {
        "w1_oihw": w1,
        # (9*Cin, Cin): rows ordered (kh*3+kw)*Cin + cin, matching the im2col kernel.
        "w1_mat": jnp.transpose(w1, (2, 3, 1, 0)).reshape(9 * in_ch, in_ch),
        "Ah": jnp.asarray(_interp_matrix(H)),
        "Aw": jnp.asarray(_interp_matrix(W)),
    }
    if upsample:
        w2 = 0.1 * jax.random.normal(k2, (out_ch, in_ch, 1, 1), jnp.float32)
        wup = 0.1 * jax.random.normal(k3, (out_ch, in_ch, 1, 1), jnp.float32)
        params.update({
            "w2_oihw": w2, "wup_oihw": wup,
            "w2_1x1": jnp.transpose(w2[:, :, 0, 0]),               # (Cin, Cout)
            "wup_1x1": jnp.transpose(wup[:, :, 0, 0]),             # (Cin, Cout)
            "awt": jnp.transpose(jnp.asarray(_interp_matrix(W))),  # (W, 2W) = Aw^T
        })
    else:
        w2 = 0.1 * jax.random.normal(k2, (out_ch, in_ch, 3, 3), jnp.float32)
        params.update({
            "w2_oihw": w2,
            "w2_mat": jnp.transpose(w2, (2, 3, 1, 0)).reshape(9 * in_ch, out_ch),
        })
    return params


def ref_forward(x, params, upsample):
    """Plain-JAX NCHW reference matching the PyTorch forward (training-mode BN)."""
    def conv(x, w, pad):
        return jax.lax.conv_general_dilated(
            x, w, (1, 1), [(pad, pad), (pad, pad)],
            dimension_numbers=("NCHW", "OIHW", "NCHW"))

    def bn(x):
        mean = jnp.mean(x, axis=(0, 2, 3), keepdims=True)
        var = jnp.mean((x - mean) ** 2, axis=(0, 2, 3), keepdims=True)
        return (x - mean) / jnp.sqrt(var + EPS)

    def upsamp(x):
        return jnp.einsum("hH,bcHW,wW->bchw", params["Ah"], x, params["Aw"])

    h = jax.nn.relu(bn(conv(x, params["w1_oihw"], 1)))
    if upsample:
        h = bn(conv(upsamp(h), params["w2_oihw"], 0))
        r = bn(conv(upsamp(x), params["wup_oihw"], 0))
    else:
        h = bn(conv(h, params["w2_oihw"], 1))
        r = x
    return jax.nn.relu(h + r)


# ----------------------------------- main ----------------------------------- #

if __name__ == "__main__":
    key = jax.random.PRNGKey(0)
    kx, kp = jax.random.split(key)
    B, C, H, W = 2, 4, 16, 16
    x = jax.random.normal(kx, (B, C, H, W), jnp.float32)

    # Case 1: upsample=False (in_channel == out_channel, identity residual).
    p0 = init_params(kp, C, C, H, W, upsample=False)
    y0, d0 = up_res_block(x, p0, upsample=False)
    y0 = jax.block_until_ready(y0)
    r0 = ref_forward(x, p0, upsample=False)
    assert y0.shape == (B, C, H, W) and d0 == -1
    np.testing.assert_allclose(np.asarray(y0), np.asarray(r0), atol=1e-3, rtol=1e-3)

    # Case 2: upsample=True (bilinear x2 + 1x1 conv on both branches), out_channel=8.
    Cout = 8
    p1 = init_params(kp, C, Cout, H, W, upsample=True)
    y1, d1 = up_res_block(x, p1, upsample=True)
    y1 = jax.block_until_ready(y1)
    r1 = ref_forward(x, p1, upsample=True)
    assert y1.shape == (B, Cout, 2 * H, 2 * W) and d1 == -1
    np.testing.assert_allclose(np.asarray(y1), np.asarray(r1), atol=1e-3, rtol=1e-3)

    print("KERNEL_OK")
</pallas_src>

<mosaic_0001>
module attributes {stable_mosaic.version = 11 : i64} {
  func.func @_upres_plain_kernel(%arg0: i32, %arg1: i32, %arg2: memref<1x18x18x4xf32, #tpu.memory_space<vmem>>, %arg3: memref<36x4xf32, #tpu.memory_space<vmem>>, %arg4: memref<36x4xf32, #tpu.memory_space<vmem>>, %arg5: memref<1x4x256xf32, #tpu.memory_space<vmem>>, %arg6: memref<2x256x4xf32, #tpu.memory_space<vmem>>, %arg7: memref<2x4x256xf32, #tpu.memory_space<vmem>>, %arg8: memref<18x18x4xf32, #tpu.memory_space<vmem>>, %arg9: memref<256x36xf32, #tpu.memory_space<vmem>>, %arg10: memref<2x4xf32, #tpu.memory_space<vmem>>, %arg11: memref<4x2xf32, #tpu.memory_space<vmem>>) attributes {dimension_semantics = [#tpu.dimension_semantics<arbitrary>, #tpu.dimension_semantics<arbitrary>], iteration_bounds = array<i64: 3, 2>, scalar_prefetch = 0 : i64, scratch_operands = 6 : i64, tpu.core_type = #tpu.core_type<tc>, window_params = [{transform_indices = @transform_0, window_bounds = array<i64: 1, 18, 18, 4>}, {pipeline_mode = #tpu.pipeline_mode<synchronous>, transform_indices = @transform_1, window_bounds = array<i64: 36, 4>}, {pipeline_mode = #tpu.pipeline_mode<synchronous>, transform_indices = @transform_2, window_bounds = array<i64: 36, 4>}, {transform_indices = @transform_3, window_bounds = array<i64: 1, 4, 256>}]} {
    %c0_i32 = arith.constant 0 : i32
    %0 = arith.cmpi eq, %arg0, %c0_i32 : i32
    %c0_i32_0 = arith.constant 0 : i32
    %1 = arith.cmpi eq, %arg1, %c0_i32_0 : i32
    %2 = arith.andi %0, %1 : i1
    %3 = arith.extui %2 : i1 to i32
    %c0_i32_1 = arith.constant 0 : i32
    %4 = arith.cmpi ne, %3, %c0_i32_1 : i32
    scf.if %4 {
      %cst = arith.constant 0.000000e+00 : f32
      %19 = vector.broadcast %cst : f32 to vector<2x4xf32>
      %c0 = arith.constant 0 : index
      %c0_9 = arith.constant 0 : index
      %20 = vector.load %arg10[%c0, %c0_9] : memref<2x4xf32, #tpu.memory_space<vmem>>, vector<2x4xf32>
      tpu.vector_store %arg10[%c0, %c0_9], %19 {strides = array<i32>} : memref<2x4xf32, #tpu.memory_space<vmem>>, vector<2x4xf32>,
    } else {
    }
    %c0_i32_2 = arith.constant 0 : i32
    %5 = arith.cmpi eq, %arg0, %c0_i32_2 : i32
    %6 = arith.extui %5 : i1 to i32
    %c0_i32_3 = arith.constant 0 : i32
    %7 = arith.cmpi ne, %6, %c0_i32_3 : i32
    scf.if %7 {
      %c0 = arith.constant 0 : index
      %c0_9 = arith.constant 0 : index
      %c0_10 = arith.constant 0 : index
      %c0_11 = arith.constant 0 : index
      %19 = vector.load %arg2[%c0, %c0_9, %c0_10, %c0_11] : memref<1x18x18x4xf32, #tpu.memory_space<vmem>>, vector<1x18x18x4xf32>
      %20 = vector.shape_cast %19 : vector<1x18x18x4xf32> to vector<18x18x4xf32>
      %c0_12 = arith.constant 0 : index
      %c0_13 = arith.constant 0 : index
      %21 = vector.load %arg3[%c0_12, %c0_13] : memref<36x4xf32, #tpu.memory_space<vmem>>, vector<36x4xf32>
      %22 = vector.extract_strided_slice %20 {offsets = [0, 0, 0], sizes = [16, 16, 4], strides = [1, 1, 1]} : vector<18x18x4xf32> to vector<16x16x4xf32>
      %23 = vector.shape_cast %22 : vector<16x16x4xf32> to vector<256x4xf32>
      %c0_14 = arith.constant 0 : index
      %c0_15 = arith.constant 0 : index
      %24 = vector.load %arg9[%c0_14, %c0_15] : memref<256x36xf32, #tpu.memory_space<vmem>>, vector<256x4xf32>
      tpu.vector_store %arg9[%c0_14, %c0_15], %23 {strides = array<i32>} : memref<256x36xf32, #tpu.memory_space<vmem>>, vector<256x4xf32>,
      %25 = vector.extract_strided_slice %20 {offsets = [0, 1, 0], sizes = [16, 16, 4], strides = [1, 1, 1]} : vector<18x18x4xf32> to vector<16x16x4xf32>
      %26 = vector.shape_cast %25 : vector<16x16x4xf32> to vector<256x4xf32>
      %c0_16 = arith.constant 0 : index
      %c4 = arith.constant 4 : index
      %27 = vector.load %arg9[%c0_16, %c4] : memref<256x36xf32, #tpu.memory_space<vmem>>, vector<256x4xf32>
      tpu.vector_store %arg9[%c0_16, %c4], %26 {strides = array<i32>} : memref<256x36xf32, #tpu.memory_space<vmem>>, vector<256x4xf32>,
      %28 = vector.extract_strided_slice %20 {offsets = [0, 2, 0], sizes = [16, 16, 4], strides = [1, 1, 1]} : vector<18x18x4xf32> to vector<16x16x4xf32>
      %29 = vector.shape_cast %28 : vector<16x16x4xf32> to vector<256x4xf32>
      %c0_17 = arith.constant 0 : index
      %c8 = arith.constant 8 : index
      %30 = vector.load %arg9[%c0_17, %c8] : memref<256x36xf32, #tpu.memory_space<vmem>>, vector<256x4xf32>
      tpu.vector_store %arg9[%c0_17, %c8], %29 {strides = array<i32>} : memref<256x36xf32, #tpu.memory_space<vmem>>, vector<256x4xf32>,
      %31 = vector.extract_strided_slice %20 {offsets = [1, 0, 0], sizes = [16, 16, 4], strides = [1, 1, 1]} : vector<18x18x4xf32> to vector<16x16x4xf32>
      %32 = vector.shape_cast %31 : vector<16x16x4xf32> to vector<256x4xf32>
      %c0_18 = arith.constant 0 : index
      %c12 = arith.constant 12 : index
      %33 = vector.load %arg9[%c0_18, %c12] : memref<256x36xf32, #tpu.memory_space<vmem>>, vector<256x4xf32>
      tpu.vector_store %arg9[%c0_18, %c12], %32 {strides = array<i32>} : memref<256x36xf32, #tpu.memory_space<vmem>>, vector<256x4xf32>,
      %34 = vector.extract_strided_slice %20 {offsets = [1, 1, 0], sizes = [16, 16, 4], strides = [1, 1, 1]} : vector<18x18x4xf32> to vector<16x16x4xf32>
      %35 = vector.shape_cast %34 : vector<16x16x4xf32> to vector<256x4xf32>
      %c0_19 = arith.constant 0 : index
      %c16 = arith.constant 16 : index
      %36 = vector.load %arg9[%c0_19, %c16] : memref<256x36xf32, #tpu.memory_space<vmem>>, vector<256x4xf32>
      tpu.vector_store %arg9[%c0_19, %c16], %35 {strides = array<i32>} : memref<256x36xf32, #tpu.memory_space<vmem>>, vector<256x4xf32>,
      %37 = vector.extract_strided_slice %20 {offsets = [1, 2, 0], sizes = [16, 16, 4], strides = [1, 1, 1]} : vector<18x18x4xf32> to vector<16x16x4xf32>
      %38 = vector.shape_cast %37 : vector<16x16x4xf32> to vector<256x4xf32>
      %c0_20 = arith.constant 0 : index
      %c20 = arith.constant 20 : index
      %39 = vector.load %arg9[%c0_20, %c20] : memref<256x36xf32, #tpu.memory_space<vmem>>, vector<256x4xf32>
      tpu.vector_store %arg9[%c0_20, %c20], %38 {strides = array<i32>} : memref<256x36xf32, #tpu.memory_space<vmem>>, vector<256x4xf32>,
      %40 = vector.extract_strided_slice %20 {offsets = [2, 0, 0], sizes = [16, 16, 4], strides = [1, 1, 1]} : vector<18x18x4xf32> to vector<16x16x4xf32>
      %41 = vector.shape_cast %40 : vector<16x16x4xf32> to vector<256x4xf32>
      %c0_21 = arith.constant 0 : index
      %c24 = arith.constant 24 : index
      %42 = vector.load %arg9[%c0_21, %c24] : memref<256x36xf32, #tpu.memory_space<vmem>>, vector<256x4xf32>
      tpu.vector_store %arg9[%c0_21, %c24], %41 {strides = array<i32>} : memref<256x36xf32, #tpu.memory_space<vmem>>, vector<256x4xf32>,
      %43 = vector.extract_strided_slice %20 {offsets = [2, 1, 0], sizes = [16, 16, 4], strides = [1, 1, 1]} : vector<18x18x4xf32> to vector<16x16x4xf32>
      %44 = vector.shape_cast %43 : vector<16x16x4xf32> to vector<256x4xf32>
      %c0_22 = arith.constant 0 : index
      %c28 = arith.constant 28 : index
      %45 = vector.load %arg9[%c0_22, %c28] : memref<256x36xf32, #tpu.memory_space<vmem>>, vector<256x4xf32>
      tpu.vector_store %arg9[%c0_22, %c28], %44 {strides = array<i32>} : memref<256x36xf32, #tpu.memory_space<vmem>>, vector<256x4xf32>,
      %46 = vector.extract_strided_slice %20 {offsets = [2, 2, 0], sizes = [16, 16, 4], strides = [1, 1, 1]} : vector<18x18x4xf32> to vector<16x16x4xf32>
      %47 = vector.shape_cast %46 : vector<16x16x4xf32> to vector<256x4xf32>
      %c0_23 = arith.constant 0 : index
      %c32 = arith.constant 32 : index
      %48 = vector.load %arg9[%c0_23, %c32] : memref<256x36xf32, #tpu.memory_space<vmem>>, vector<256x4xf32>
      tpu.vector_store %arg9[%c0_23, %c32], %47 {strides = array<i32>} : memref<256x36xf32, #tpu.memory_space<vmem>>, vector<256x4xf32>,
      %c0_24 = arith.constant 0 : index
      %c0_25 = arith.constant 0 : index
      %49 = vector.load %arg9[%c0_24, %c0_25] : memref<256x36xf32, #tpu.memory_space<vmem>>, vector<256x36xf32>
      %cst = arith.constant dense<0.000000e+00> : vector<256x4xf32>
      %50 = tpu.matmul %49, %21, %cst {dimension_numbers = #tpu.dot_dimension_numbers<[1], [0], [0], [1], [0, 0, 1, 1], [], []>} : vector<256x36xf32>, vector<36x4xf32>, vector<256x4xf32> -> vector<256x4xf32>
      %51 = arith.index_cast %arg1 : i32 to index
      %c0_26 = arith.constant 0 : index
      %c0_27 = arith.constant 0 : index
      %52 = vector.load %arg6[%51, %c0_26, %c0_27] : memref<2x256x4xf32, #tpu.memory_space<vmem>>, vector<1x256x4xf32>
      %53 = vector.shape_cast %52 : vector<1x256x4xf32> to vector<256x4xf32>
      %54 = vector.shape_cast %50 : vector<256x4xf32> to vector<1x256x4xf32>
      tpu.vector_store %arg6[%51, %c0_26, %c0_27], %54 {strides = array<i32>} : memref<2x256x4xf32, #tpu.memory_space<vmem>>, vector<1x256x4xf32>,
      %c0_28 = arith.constant 0 : index
      %c0_29 = arith.constant 0 : index
      %55 = vector.load %arg10[%c0_28, %c0_29] : memref<2x4xf32, #tpu.memory_space<vmem>>, vector<1x4xf32>
      %cst_30 = arith.constant dense<0.000000e+00> : vector<4xf32>
      %56 = vector.multi_reduction <add>, %50, %cst_30 [0] : vector<256x4xf32> to vector<4xf32>
      %57 = vector.shape_cast %56 : vector<4xf32> to vector<1x4xf32>
      %58 = arith.addf %55, %57 : vector<1x4xf32>
      %c0_31 = arith.constant 0 : index
      %c0_32 = arith.constant 0 : index
      %59 = vector.load %arg10[%c0_31, %c0_32] : memref<2x4xf32, #tpu.memory_space<vmem>>, vector<1x4xf32>
      tpu.vector_store %arg10[%c0_31, %c0_32], %58 {strides = array<i32>} : memref<2x4xf32, #tpu.memory_space<vmem>>, vector<1x4xf32>,
      %c1 = arith.constant 1 : index
      %c0_33 = arith.constant 0 : index
      %60 = vector.load %arg10[%c1, %c0_33] : memref<2x4xf32, #tpu.memory_space<vmem>>, vector<1x4xf32>
      %61 = arith.mulf %50, %50 : vector<256x4xf32>
      %cst_34 = arith.constant dense<0.000000e+00> : vector<4xf32>
      %62 = vector.multi_reduction <add>, %61, %cst_34 [0] : vector<256x4xf32> to vector<4xf32>
      %63 = vector.shape_cast %62 : vector<4xf32> to vector<1x4xf32>
      %64 = arith.addf %60, %63 : vector<1x4xf32>
      %c1_35 = arith.constant 1 : index
      %c0_36 = arith.constant 0 : index
      %65 = vector.load %arg10[%c1_35, %c0_36] : memref<2x4xf32, #tpu.memory_space<vmem>>, vector<1x4xf32>
      tpu.vector_store %arg10[%c1_35, %c0_36], %64 {strides = array<i32>} : memref<2x4xf32, #tpu.memory_space<vmem>>, vector<1x4xf32>,
    } else {
    }
    %c1_i32 = arith.constant 1 : i32
    %8 = arith.cmpi eq, %arg0, %c1_i32 : i32
    %c0_i32_4 = arith.constant 0 : i32
    %9 = arith.cmpi eq, %arg1, %c0_i32_4 : i32
    %10 = arith.andi %8, %9 : i1
    %11 = arith.extui %10 : i1 to i32
    %c0_i32_5 = arith.constant 0 : i32
    %12 = arith.cmpi ne, %11, %c0_i32_5 : i32
    scf.if %12 {
      %cst = arith.constant 0.000000e+00 : f32
      %19 = vector.broadcast %cst : f32 to vector<4x2xf32>
      %c0 = arith.constant 0 : index
      %c0_9 = arith.constant 0 : index
      %20 = vector.load %arg11[%c0, %c0_9] : memref<4x2xf32, #tpu.memory_space<vmem>>, vector<4x2xf32>
      tpu.vector_store %arg11[%c0, %c0_9], %19 {strides = array<i32>} : memref<4x2xf32, #tpu.memory_space<vmem>>, vector<4x2xf32>,
    } else {
    }
    %c1_i32_6 = arith.constant 1 : i32
    %13 = arith.cmpi eq, %arg0, %c1_i32_6 : i32
    %14 = arith.extui %13 : i1 to i32
    %c0_i32_7 = arith.constant 0 : i32
    %15 = arith.cmpi ne, %14, %c0_i32_7 : i32
    scf.if %15 {
      %c0 = arith.constant 0 : index
      %c0_9 = arith.constant 0 : index
      %19 = vector.load %arg10[%c0, %c0_9] : memref<2x4xf32, #tpu.memory_space<vmem>>, vector<2x4xf32>
      %20 = vector.extract_strided_slice %19 {offsets = [0, 0], sizes = [1, 4], strides = [1, 1]} : vector<2x4xf32> to vector<1x4xf32>
      %cst = arith.constant 0.001953125 : f32
      %21 = vector.broadcast %cst : f32 to vector<1x4xf32>
      %22 = arith.mulf %20, %21 : vector<1x4xf32>
      %23 = vector.extract_strided_slice %19 {offsets = [1, 0], sizes = [1, 4], strides = [1, 1]} : vector<2x4xf32> to vector<1x4xf32>
      %cst_10 = arith.constant 0.001953125 : f32
      %24 = vector.broadcast %cst_10 : f32 to vector<1x4xf32>
      %25 = arith.mulf %23, %24 : vector<1x4xf32>
      %26 = arith.mulf %22, %22 : vector<1x4xf32>
      %27 = arith.subf %25, %26 : vector<1x4xf32>
      %cst_11 = arith.constant 9.99999974E-6 : f32
      %28 = vector.broadcast %cst_11 : f32 to vector<1x4xf32>
      %29 = arith.addf %27, %28 : vector<1x4xf32>
      %30 = math.rsqrt %29 : vector<1x4xf32>
      %31 = arith.index_cast %arg1 : i32 to index
      %c0_12 = arith.constant 0 : index
      %c0_13 = arith.constant 0 : index
      %32 = vector.load %arg6[%31, %c0_12, %c0_13] : memref<2x256x4xf32, #tpu.memory_space<vmem>>, vector<1x256x4xf32>
      %33 = vector.shape_cast %32 : vector<1x256x4xf32> to vector<256x4xf32>
      %34 = vector.broadcast %22 : vector<1x4xf32> to vector<256x4xf32>
      %35 = arith.subf %33, %34 : vector<256x4xf32>
      %36 = vector.broadcast %30 : vector<1x4xf32> to vector<256x4xf32>
      %37 = arith.mulf %35, %36 : vector<256x4xf32>
      %cst_14 = arith.constant 0.000000e+00 : f32
      %38 = vector.broadcast %cst_14 : f32 to vector<256x4xf32>
      %39 = arith.maximumf %37, %38 : vector<256x4xf32>
      %cst_15 = arith.constant 0.000000e+00 : f32
      %40 = vector.broadcast %cst_15 : f32 to vector<18x18x4xf32>
      %c0_16 = arith.constant 0 : index
      %c0_17 = arith.constant 0 : index
      %c0_18 = arith.constant 0 : index
      %41 = vector.load %arg8[%c0_16, %c0_17, %c0_18] : memref<18x18x4xf32, #tpu.memory_space<vmem>>, vector<18x18x4xf32>
      tpu.vector_store %arg8[%c0_16, %c0_17, %c0_18], %40 {strides = array<i32>} : memref<18x18x4xf32, #tpu.memory_space<vmem>>, vector<18x18x4xf32>,
      %42 = vector.shape_cast %39 : vector<256x4xf32> to vector<16x16x4xf32>
      %c1 = arith.constant 1 : index
      %c1_19 = arith.constant 1 : index
      %c0_20 = arith.constant 0 : index
      %43 = vector.load %arg8[%c1, %c1_19, %c0_20] : memref<18x18x4xf32, #tpu.memory_space<vmem>>, vector<16x16x4xf32>
      tpu.vector_store %arg8[%c1, %c1_19, %c0_20], %42 {strides = array<i32>} : memref<18x18x4xf32, #tpu.memory_space<vmem>>, vector<16x16x4xf32>,
      %c0_21 = arith.constant 0 : index
      %c0_22 = arith.constant 0 : index
      %c0_23 = arith.constant 0 : index
      %44 = vector.load %arg8[%c0_21, %c0_22, %c0_23] : memref<18x18x4xf32, #tpu.memory_space<vmem>>, vector<18x18x4xf32>
      %c0_24 = arith.constant 0 : index
      %c0_25 = arith.constant 0 : index
      %45 = vector.load %arg4[%c0_24, %c0_25] : memref<36x4xf32, #tpu.memory_space<vmem>>, vector<36x4xf32>
      %46 = vector.extract_strided_slice %44 {offsets = [0, 0, 0], sizes = [16, 16, 4], strides = [1, 1, 1]} : vector<18x18x4xf32> to vector<16x16x4xf32>
      %47 = vector.shape_cast %46 : vector<16x16x4xf32> to vector<256x4xf32>
      %c0_26 = arith.constant 0 : index
      %c0_27 = arith.constant 0 : index
      %48 = vector.load %arg9[%c0_26, %c0_27] : memref<256x36xf32, #tpu.memory_space<vmem>>, vector<256x4xf32>
      tpu.vector_store %arg9[%c0_26, %c0_27], %47 {strides = array<i32>} : memref<256x36xf32, #tpu.memory_space<vmem>>, vector<256x4xf32>,
      %49 = vector.extract_strided_slice %44 {offsets = [0, 1, 0], sizes = [16, 16, 4], strides = [1, 1, 1]} : vector<18x18x4xf32> to vector<16x16x4xf32>
      %50 = vector.shape_cast %49 : vector<16x16x4xf32> to vector<256x4xf32>
      %c0_28 = arith.constant 0 : index
      %c4 = arith.constant 4 : index
      %51 = vector.load %arg9[%c0_28, %c4] : memref<256x36xf32, #tpu.memory_space<vmem>>, vector<256x4xf32>
      tpu.vector_store %arg9[%c0_28, %c4], %50 {strides = array<i32>} : memref<256x36xf32, #tpu.memory_space<vmem>>, vector<256x4xf32>,
      %52 = vector.extract_strided_slice %44 {offsets = [0, 2, 0], sizes = [16, 16, 4], strides = [1, 1, 1]} : vector<18x18x4xf32> to vector<16x16x4xf32>
      %53 = vector.shape_cast %52 : vector<16x16x4xf32> to vector<256x4xf32>
      %c0_29 = arith.constant 0 : index
      %c8 = arith.constant 8 : index
      %54 = vector.load %arg9[%c0_29, %c8] : memref<256x36xf32, #tpu.memory_space<vmem>>, vector<256x4xf32>
      tpu.vector_store %arg9[%c0_29, %c8], %53 {strides = array<i32>} : memref<256x36xf32, #tpu.memory_space<vmem>>, vector<256x4xf32>,
      %55 = vector.extract_strided_slice %44 {offsets = [1, 0, 0], sizes = [16, 16, 4], strides = [1, 1, 1]} : vector<18x18x4xf32> to vector<16x16x4xf32>
      %56 = vector.shape_cast %55 : vector<16x16x4xf32> to vector<256x4xf32>
      %c0_30 = arith.constant 0 : index
      %c12 = arith.constant 12 : index
      %57 = vector.load %arg9[%c0_30, %c12] : memref<256x36xf32, #tpu.memory_space<vmem>>, vector<256x4xf32>
      tpu.vector_store %arg9[%c0_30, %c12], %56 {strides = array<i32>} : memref<256x36xf32, #tpu.memory_space<vmem>>, vector<256x4xf32>,
      %58 = vector.extract_strided_slice %44 {offsets = [1, 1, 0], sizes = [16, 16, 4], strides = [1, 1, 1]} : vector<18x18x4xf32> to vector<16x16x4xf32>
      %59 = vector.shape_cast %58 : vector<16x16x4xf32> to vector<256x4xf32>
      %c0_31 = arith.constant 0 : index
      %c16 = arith.constant 16 : index
      %60 = vector.load %arg9[%c0_31, %c16] : memref<256x36xf32, #tpu.memory_space<vmem>>, vector<256x4xf32>
      tpu.vector_store %arg9[%c0_31, %c16], %59 {strides = array<i32>} : memref<256x36xf32, #tpu.memory_space<vmem>>, vector<256x4xf32>,
      %61 = vector.extract_strided_slice %44 {offsets = [1, 2, 0], sizes = [16, 16, 4], strides = [1, 1, 1]} : vector<18x18x4xf32> to vector<16x16x4xf32>
      %62 = vector.shape_cast %61 : vector<16x16x4xf32> to vector<256x4xf32>
      %c0_32 = arith.constant 0 : index
      %c20 = arith.constant 20 : index
      %63 = vector.load %arg9[%c0_32, %c20] : memref<256x36xf32, #tpu.memory_space<vmem>>, vector<256x4xf32>
      tpu.vector_store %arg9[%c0_32, %c20], %62 {strides = array<i32>} : memref<256x36xf32, #tpu.memory_space<vmem>>, vector<256x4xf32>,
      %64 = vector.extract_strided_slice %44 {offsets = [2, 0, 0], sizes = [16, 16, 4], strides = [1, 1, 1]} : vector<18x18x4xf32> to vector<16x16x4xf32>
      %65 = vector.shape_cast %64 : vector<16x16x4xf32> to vector<256x4xf32>
      %c0_33 = arith.constant 0 : index
      %c24 = arith.constant 24 : index
      %66 = vector.load %arg9[%c0_33, %c24] : memref<256x36xf32, #tpu.memory_space<vmem>>, vector<256x4xf32>
      tpu.vector_store %arg9[%c0_33, %c24], %65 {strides = array<i32>} : memref<256x36xf32, #tpu.memory_space<vmem>>, vector<256x4xf32>,
      %67 = vector.extract_strided_slice %44 {offsets = [2, 1, 0], sizes = [16, 16, 4], strides = [1, 1, 1]} : vector<18x18x4xf32> to vector<16x16x4xf32>
      %68 = vector.shape_cast %67 : vector<16x16x4xf32> to vector<256x4xf32>
      %c0_34 = arith.constant 0 : index
      %c28 = arith.constant 28 : index
      %69 = vector.load %arg9[%c0_34, %c28] : memref<256x36xf32, #tpu.memory_space<vmem>>, vector<256x4xf32>
      tpu.vector_store %arg9[%c0_34, %c28], %68 {strides = array<i32>} : memref<256x36xf32, #tpu.memory_space<vmem>>, vector<256x4xf32>,
      %70 = vector.extract_strided_slice %44 {offsets = [2, 2, 0], sizes = [16, 16, 4], strides = [1, 1, 1]} : vector<18x18x4xf32> to vector<16x16x4xf32>
      %71 = vector.shape_cast %70 : vector<16x16x4xf32> to vector<256x4xf32>
      %c0_35 = arith.constant 0 : index
      %c32 = arith.constant 32 : index
      %72 = vector.load %arg9[%c0_35, %c32] : memref<256x36xf32, #tpu.memory_space<vmem>>, vector<256x4xf32>
      tpu.vector_store %arg9[%c0_35, %c32], %71 {strides = array<i32>} : memref<256x36xf32, #tpu.memory_space<vmem>>, vector<256x4xf32>,
      %c0_36 = arith.constant 0 : index
      %c0_37 = arith.constant 0 : index
      %73 = vector.load %arg9[%c0_36, %c0_37] : memref<256x36xf32, #tpu.memory_space<vmem>>, vector<256x36xf32>
      %cst_38 = arith.constant dense<0.000000e+00> : vector<256x4xf32>
      %74 = tpu.matmul %73, %45, %cst_38 {dimension_numbers = #tpu.dot_dimension_numbers<[1], [0], [0], [1], [0, 0, 1, 1], [], []>} : vector<256x36xf32>, vector<36x4xf32>, vector<256x4xf32> -> vector<256x4xf32>
      %75 = tpu.transpose %74, [1, 0] : vector<256x4xf32> -> vector<4x256xf32>
      %76 = arith.index_cast %arg1 : i32 to index
      %c0_39 = arith.constant 0 : index
      %c0_40 = arith.constant 0 : index
      %77 = vector.load %arg7[%76, %c0_39, %c0_40] : memref<2x4x256xf32, #tpu.memory_space<vmem>>, vector<1x4x256xf32>
      %78 = vector.shape_cast %77 : vector<1x4x256xf32> to vector<4x256xf32>
      %79 = vector.shape_cast %75 : vector<4x256xf32> to vector<1x4x256xf32>
      tpu.vector_store %arg7[%76, %c0_39, %c0_40], %79 {strides = array<i32>} : memref<2x4x256xf32, #tpu.memory_space<vmem>>, vector<1x4x256xf32>,
      %c0_41 = arith.constant 0 : index
      %c0_42 = arith.constant 0 : index
      %80 = vector.load %arg11[%c0_41, %c0_42] : memref<4x2xf32, #tpu.memory_space<vmem>>, vector<4x1xf32>
      %cst_43 = arith.constant dense<0.000000e+00> : vector<4xf32>
      %81 = vector.multi_reduction <add>, %75, %cst_43 [1] : vector<4x256xf32> to vector<4xf32>
      %82 = vector.shape_cast %81 : vector<4xf32> to vector<4x1xf32>
      %83 = arith.addf %80, %82 : vector<4x1xf32>
      %c0_44 = arith.constant 0 : index
      %c0_45 = arith.constant 0 : index
      %84 = vector.load %arg11[%c0_44, %c0_45] : memref<4x2xf32, #tpu.memory_space<vmem>>, vector<4x1xf32>
      tpu.vector_store %arg11[%c0_44, %c0_45], %83 {strides = array<i32>} : memref<4x2xf32, #tpu.memory_space<vmem>>, vector<4x1xf32>,
      %c0_46 = arith.constant 0 : index
      %c1_47 = arith.constant 1 : index
      %85 = vector.load %arg11[%c0_46, %c1_47] : memref<4x2xf32, #tpu.memory_space<vmem>>, vector<4x1xf32>
      %86 = arith.mulf %75, %75 : vector<4x256xf32>
      %cst_48 = arith.constant dense<0.000000e+00> : vector<4xf32>
      %87 = vector.multi_reduction <add>, %86, %cst_48 [1] : vector<4x256xf32> to vector<4xf32>
      %88 = vector.shape_cast %87 : vector<4xf32> to vector<4x1xf32>
      %89 = arith.addf %85, %88 : vector<4x1xf32>
      %c0_49 = arith.constant 0 : index
      %c1_50 = arith.constant 1 : index
      %90 = vector.load %arg11[%c0_49, %c1_50] : memref<4x2xf32, #tpu.memory_space<vmem>>, vector<4x1xf32>
      tpu.vector_store %arg11[%c0_49, %c1_50], %89 {strides = array<i32>} : memref<4x2xf32, #tpu.memory_space<vmem>>, vector<4x1xf32>,
    } else {
    }
    %c2_i32 = arith.constant 2 : i32
    %16 = arith.cmpi eq, %arg0, %c2_i32 : i32
    %17 = arith.extui %16 : i1 to i32
    %c0_i32_8 = arith.constant 0 : i32
    %18 = arith.cmpi ne, %17, %c0_i32_8 : i32
    scf.if %18 {
      %c0 = arith.constant 0 : index
      %c0_9 = arith.constant 0 : index
      %19 = vector.load %arg11[%c0, %c0_9] : memref<4x2xf32, #tpu.memory_space<vmem>>, vector<4x2xf32>
      %20 = vector.extract_strided_slice %19 {offsets = [0, 0], sizes = [4, 1], strides = [1, 1]} : vector<4x2xf32> to vector<4x1xf32>
      %cst = arith.constant 0.001953125 : f32
      %21 = vector.broadcast %cst : f32 to vector<4x1xf32>
      %22 = arith.mulf %20, %21 : vector<4x1xf32>
      %23 = vector.extract_strided_slice %19 {offsets = [0, 1], sizes = [4, 1], strides = [1, 1]} : vector<4x2xf32> to vector<4x1xf32>
      %cst_10 = arith.constant 0.001953125 : f32
      %24 = vector.broadcast %cst_10 : f32 to vector<4x1xf32>
      %25 = arith.mulf %23, %24 : vector<4x1xf32>
      %26 = arith.mulf %22, %22 : vector<4x1xf32>
      %27 = arith.subf %25, %26 : vector<4x1xf32>
      %cst_11 = arith.constant 9.99999974E-6 : f32
      %28 = vector.broadcast %cst_11 : f32 to vector<4x1xf32>
      %29 = arith.addf %27, %28 : vector<4x1xf32>
      %30 = math.rsqrt %29 : vector<4x1xf32>
      %c0_12 = arith.constant 0 : index
      %c0_13 = arith.constant 0 : index
      %c0_14 = arith.constant 0 : index
      %c0_15 = arith.constant 0 : index
      %31 = vector.load %arg2[%c0_12, %c0_13, %c0_14, %c0_15] : memref<1x18x18x4xf32, #tpu.memory_space<vmem>>, vector<1x18x18x4xf32>
      %32 = vector.shape_cast %31 : vector<1x18x18x4xf32> to vector<18x18x4xf32>
      %33 = vector.extract_strided_slice %32 {offsets = [1, 1, 0], sizes = [16, 16, 4], strides = [1, 1, 1]} : vector<18x18x4xf32> to vector<16x16x4xf32>
      %34 = vector.shape_cast %33 : vector<16x16x4xf32> to vector<256x4xf32>
      %35 = arith.index_cast %arg1 : i32 to index
      %c0_16 = arith.constant 0 : index
      %c0_17 = arith.constant 0 : index
      %36 = vector.load %arg7[%35, %c0_16, %c0_17] : memref<2x4x256xf32, #tpu.memory_space<vmem>>, vector<1x4x256xf32>
      %37 = vector.shape_cast %36 : vector<1x4x256xf32> to vector<4x256xf32>
      %38 = vector.broadcast %22 : vector<4x1xf32> to vector<4x256xf32>
      %39 = arith.subf %37, %38 : vector<4x256xf32>
      %40 = vector.broadcast %30 : vector<4x1xf32> to vector<4x256xf32>
      %41 = arith.mulf %39, %40 : vector<4x256xf32>
      %42 = tpu.transpose %34, [1, 0] : vector<256x4xf32> -> vector<4x256xf32>
      %43 = arith.addf %41, %42 : vector<4x256xf32>
      %cst_18 = arith.constant 0.000000e+00 : f32
      %44 = vector.broadcast %cst_18 : f32 to vector<4x256xf32>
      %45 = arith.maximumf %43, %44 : vector<4x256xf32>
      %c0_19 = arith.constant 0 : index
      %c0_20 = arith.constant 0 : index
      %c0_21 = arith.constant 0 : index
      %46 = vector.load %arg5[%c0_19, %c0_20, %c0_21] : memref<1x4x256xf32, #tpu.memory_space<vmem>>, vector<1x4x256xf32>
      %47 = vector.shape_cast %46 : vector<1x4x256xf32> to vector<4x256xf32>
      %48 = vector.shape_cast %45 : vector<4x256xf32> to vector<1x4x256xf32>
      tpu.vector_store %arg5[%c0_19, %c0_20, %c0_21], %48 {strides = array<i32>} : memref<1x4x256xf32, #tpu.memory_space<vmem>>, vector<1x4x256xf32>,
    } else {
    }
    return
  }
  func.func @transform_0(%arg0: i32, %arg1: i32) -> (i32, i32, i32, i32) {
    %c0_i32 = arith.constant 0 : i32
    %c0_i32_0 = arith.constant 0 : i32
    %c0_i32_1 = arith.constant 0 : i32
    %c0_i32_2 = arith.constant 0 : i32
    return %arg1, %c0_i32, %c0_i32_0, %c0_i32_1 : i32, i32, i32, i32
  }
  func.func @transform_1(%arg0: i32, %arg1: i32) -> (i32, i32) {
    %c0_i32 = arith.constant 0 : i32
    %c0_i32_0 = arith.constant 0 : i32
    %c0_i32_1 = arith.constant 0 : i32
    return %c0_i32, %c0_i32_0 : i32, i32
  }
  func.func @transform_2(%arg0: i32, %arg1: i32) -> (i32, i32) {
    %c0_i32 = arith.constant 0 : i32
    %c0_i32_0 = arith.constant 0 : i32
    %c0_i32_1 = arith.constant 0 : i32
    return %c0_i32, %c0_i32_0 : i32, i32
  }
  func.func @transform_3(%arg0: i32, %arg1: i32) -> (i32, i32, i32) {
    %c0_i32 = arith.constant 0 : i32
    %c0_i32_0 = arith.constant 0 : i32
    %c0_i32_1 = arith.constant 0 : i32
    return %arg1, %c0_i32, %c0_i32_0 : i32, i32, i32
  }
}

</mosaic_0001>

<llo_original>
// kernel: tpu_custom_call.1
$region0: #{tpu_custom_call.1}
  #allocation0 [shape = 'u32[]', space=smem, size = 0x4, offset = 0x4, fixed_abs, tag = 'smem constant byte address 0x4 - core index']
  #allocation1 [shape = 'u32[144,128]{1,0:T(1,128)}', space=vmem, size = 0x12000, scoped, tag = 'internal scratch']
  #allocation2 [shape = 'f32[2,256,4]{2,1,0:T(8,128)}', space=vmem, size = 0x40000, scoped, tag = 'scratch operand']
  #allocation3 [shape = 'f32[2,4,256]{2,1,0:T(4,128)}', space=vmem, size = 0x2000, scoped, tag = 'scratch operand']
  #allocation4 [shape = 'f32[18,18,4]{2,1,0:T(8,128)}', space=vmem, size = 0x36000, scoped, tag = 'scratch operand']
  #allocation5 [shape = 'f32[256,36]{1,0:T(8,128)}', space=vmem, size = 0x20000, scoped, tag = 'scratch operand']
  #allocation6 [shape = 'f32[2,4]{1,0:T(2,128)}', space=vmem, size = 0x400, scoped, tag = 'scratch operand']
  #allocation7 [shape = 'f32[4,2]{1,0:T(4,128)}', space=vmem, size = 0x800, scoped, tag = 'scratch operand']
  %s0 = inlined_call_operand.vmem [shape: f32[2,18,18,4], index: 0, kind: input, shape index: {}]
  %s1 = inlined_call_operand.vmem [shape: f32[36,4], index: 1, kind: input, shape index: {}]
  %s2 = inlined_call_operand.vmem [shape: f32[36,4], index: 2, kind: input, shape index: {}]
  %s3 = inlined_call_operand.hbm [shape: f32[2,4,256], index: 3, kind: output, shape index: {}]
  %s4 = sld [smem:[#allocation0]]
  $region65: #{tpu_custom_call.1} parent=0
    _
  %s6 = ssub.s32 1, %s4
  %s7 = scalar_select 0, %s6, %s4
  $region1: #{tpu_custom_call.1} parent=0
    #allocation8 [shape = 'u8[8192]{0}', space=vmem, size = 0x2000, scoped, tag = 'output window, operand 0']
    #allocation9 [shape = 's32[2]{0}', space=sflag, size = 0x8, scoped, tag = 'scoped memory for tpu_custom_call.1']
    %8 = vsyncpa [#allocation9], 0
    %s9 = scalar_lea.sflag [#allocation9], 1
    %10 = vsyncpa %s9, 0
    loop: start=0, step=1, limit=8
    $region2: #{tpu_custom_call.1} parent=1 // loop_pre_header
      _
    $region3: #{tpu_custom_call.1} parent=1 // loop_header
      %s12 = sphi 0, %s16
      %p13 = scmp.ge.s32.totalorder %s12, 8
      %s19 = sphi 0, %s31
      %s20 = sphi 0, %s27
      %s21 = sphi 0, %s19
      %s22 = sphi 0, %s20
      %s23 = sphi 0, %s21
      %s24 = sphi 0, %s22
      %s34 = sphi 0, %s36
      %s37 = sphi 0, %s34
      %s38 = sphi 0, %s37
      %s54 = sphi 0, %s38
      %s58 = sphi 0, %s58
      %s60 = sphi 0, %s58
      %s61 = sphi 0, %s60
      %s75 = sphi 0, %s61
      %s79 = sphi 0, %s79
      %s81 = sphi 0, %s79
      %s82 = sphi 0, %s81
      %s96 = sphi 0, %s82
      %s102 = sphi 0, %s104
      %s105 = sphi 0, %s102
      %s106 = sphi 0, %s105
      %s122 = sphi 0, %s106
    $region4: #{tpu_custom_call.1} parent=1 // loop_header_branch
      %15 = sbr.rel (%p13) target = $region8
    $region5: #{tpu_custom_call.1} parent=1 // loop_body
      %s17 = ssub.s32 %s12, 1
      %s18 = ssub.s32 %s12, 2
      %s25 = sadd.s32 1, %s20
      %p26 = scmp.ge.s32.totalorder %s25, 2
      %s27 = scalar_select %p26, 0, %s25
      %s28 = sadd.s32 1, %s19
      %s29 = scalar_select %p26, %s28, %s19
      %p30 = scmp.ge.s32.totalorder %s29, 3
      %s31 = scalar_select %p30, 0, %s29
      %s32 = ssub.s32 %s20, %s27
      %p33 = scmp.eq.s32.totalorder %s32, 0
      %s35 = sadd.s32 %s34, 1
      %s36 = scalar_select %p33, %s34, %s35
      %p39 = pneg %p33
      %p40 = scmp.eq.s32.totalorder %s12, 5
      %p41 = por %p39, %p40
      %p42 = scmp.ne.s32.totalorder %s34, %s37
      %p43 = scmp.eq.s32.totalorder %s12, 0
      %p44 = por %p42, %p43
      %p45 = scmp.ne.s32.totalorder %s34, %s37
      %p46 = scmp.eq.s32.totalorder %s17, 5
      %p47 = por %p45, %p46
      %p48 = scmp.ne.s32.totalorder %s37, %s38
      %p49 = scmp.eq.s32.totalorder %s17, 0
      %p50 = por %p48, %p49
      %p51 = scmp.ne.s32.totalorder %s37, %s38
      %p52 = scmp.eq.s32.totalorder %s18, 5
      %p53 = por %p51, %p52
      %p55 = scmp.ne.s32.totalorder %s38, %s54
      %p56 = scmp.eq.s32.totalorder %s18, 0
      %p57 = por %p55, %p56
      %s59 = sadd.s32 %s58, 1
      %p62 = scmp.eq.s32.totalorder %s12, 5
      %p63 = scmp.ne.s32.totalorder %s58, %s60
      %p64 = scmp.eq.s32.totalorder %s12, 0
      %p65 = por %p63, %p64
      %p66 = scmp.ne.s32.totalorder %s58, %s60
      %p67 = scmp.eq.s32.totalorder %s17, 5
      %p68 = por %p66, %p67
      %p69 = scmp.ne.s32.totalorder %s60, %s61
      %p70 = scmp.eq.s32.totalorder %s17, 0
      %p71 = por %p69, %p70
      %p72 = scmp.ne.s32.totalorder %s60, %s61
      %p73 = scmp.eq.s32.totalorder %s18, 5
      %p74 = por %p72, %p73
      %p76 = scmp.ne.s32.totalorder %s61, %s75
      %p77 = scmp.eq.s32.totalorder %s18, 0
      %p78 = por %p76, %p77
      %s80 = sadd.s32 %s79, 1
      %p83 = scmp.eq.s32.totalorder %s12, 5
      %p84 = scmp.ne.s32.totalorder %s79, %s81
      %p85 = scmp.eq.s32.totalorder %s12, 0
      %p86 = por %p84, %p85
      %p87 = scmp.ne.s32.totalorder %s79, %s81
      %p88 = scmp.eq.s32.totalorder %s17, 5
      %p89 = por %p87, %p88
      %p90 = scmp.ne.s32.totalorder %s81, %s82
      %p91 = scmp.eq.s32.totalorder %s17, 0
      %p92 = por %p90, %p91
      %p93 = scmp.ne.s32.totalorder %s81, %s82
      %p94 = scmp.eq.s32.totalorder %s18, 5
      %p95 = por %p93, %p94
      %p97 = scmp.ne.s32.totalorder %s82, %s96
      %p98 = scmp.eq.s32.totalorder %s18, 0
      %p99 = por %p97, %p98
      %s100 = ssub.s32 %s20, %s27
      %p101 = scmp.eq.s32.totalorder %s100, 0
      %s103 = sadd.s32 %s102, 1
      %s104 = scalar_select %p101, %s102, %s103
      %p107 = pneg %p101
      %p108 = scmp.eq.s32.totalorder %s12, 5
      %p109 = por %p107, %p108
      %p110 = scmp.ne.s32.totalorder %s102, %s105
      %p111 = scmp.eq.s32.totalorder %s12, 0
      %p112 = por %p110, %p111
      %p113 = scmp.ne.s32.totalorder %s102, %s105
      %p114 = scmp.eq.s32.totalorder %s17, 5
      %p115 = por %p113, %p114
      %p116 = scmp.ne.s32.totalorder %s105, %s106
      %p117 = scmp.eq.s32.totalorder %s17, 0
      %p118 = por %p116, %p117
      %p119 = scmp.ne.s32.totalorder %s105, %s106
      %p120 = scmp.eq.s32.totalorder %s18, 5
      %p121 = por %p119, %p120
      %p123 = scmp.ne.s32.totalorder %s106, %s122
      %p124 = scmp.eq.s32.totalorder %s18, 0
      %p125 = por %p123, %p124
      %p126 = scmp.le.s32.totalorder 1, %s12
      %p127 = scmp.lt.s32.totalorder %s12, 7
      %p128 = pnand %p126, %p127
      %p129 = pneg %p128
      // Predicated region
      $region9: #{tpu_custom_call.1} parent=5 // pred_check
        _
      $region10: #{tpu_custom_call.1} parent=5 // pred_check_branch
        %131 = sbr.rel (%p128) target = $region12
      $region11: #{tpu_custom_call.1} parent=5 // pred_region
        %s132 = ssub.s32 %s12, 1
        // Predicated region
        $region13: #{tpu_custom_call.1} parent=11 // pred_check
          %p133 = pneg %p71
        $region14: #{tpu_custom_call.1} parent=11 // pred_check_branch
          %135 = sbr.rel (%p133) target = $region16
        $region15: #{tpu_custom_call.1} parent=11 // pred_region
          _
        $region16: #{tpu_custom_call.1} parent=11 // pred_fallthru
          _
        // Predicated region
        $region17: #{tpu_custom_call.1} parent=11 // pred_check
          %p136 = pneg %p92
        $region18: #{tpu_custom_call.1} parent=11 // pred_check_branch
          %138 = sbr.rel (%p136) target = $region20
        $region19: #{tpu_custom_call.1} parent=11 // pred_region
          _
        $region20: #{tpu_custom_call.1} parent=11 // pred_fallthru
          _
      $region12: #{tpu_custom_call.1} parent=5 // pred_fallthru
        _
      %p139 = scmp.lt.s32.totalorder %s12, 6
      // Predicated region
      $region21: #{tpu_custom_call.1} parent=5 // pred_check
        %p140 = pneg %p139
      $region22: #{tpu_custom_call.1} parent=5 // pred_check_branch
        %142 = sbr.rel (%p140) target = $region24
      $region23: #{tpu_custom_call.1} parent=5 // pred_region
        // Predicated region
        $region25: #{tpu_custom_call.1} parent=23 // pred_check
          %p143 = pneg %p44
        $region26: #{tpu_custom_call.1} parent=23 // pred_check_branch
          %145 = sbr.rel (%p143) target = $region28
        $region27: #{tpu_custom_call.1} parent=23 // pred_region
          %p146 = scmp.lt.s32.totalorder %s20, 1
          %s147 = scalar_select %p146, %s20, 1
          %s148 = smul.addr %s147, 54
          %s149 = smul.addr %s148, 8
          %s150 = scalar_lea.vmem %s0, %s149
        $region28: #{tpu_custom_call.1} parent=23 // pred_fallthru
          _
      $region24: #{tpu_custom_call.1} parent=5 // pred_fallthru
        _
      %p151 = scmp.le.s32.totalorder 1, %s12
      %p152 = scmp.lt.s32.totalorder %s12, 7
      %p153 = pnand %p151, %p152
      %p154 = pneg %p153
      // Predicated region
      $region29: #{tpu_custom_call.1} parent=5 // pred_check
        _
      $region30: #{tpu_custom_call.1} parent=5 // pred_check_branch
        %156 = sbr.rel (%p153) target = $region32
      $region31: #{tpu_custom_call.1} parent=5 // pred_region
        %s157 = ssub.s32 %s12, 1
        %p158 = scmp.lt.s32.totalorder %s22, 1
        %s159 = scalar_select %p158, %s22, 1
        %s160 = smul.addr %s159, 54
        %s161 = smul.addr %s160, 8
        %s162 = scalar_lea.vmem %s0, %s161
        %p163 = pneg %p50
        %p164 = pneg %p47
        %p165 = pneg %p71
        %p166 = pneg %p68
        %p167 = pneg %p92
        %p168 = pneg %p89
        %p169 = pneg %p118
        %p170 = pneg %p115
        %s171 = sand.u32 %s105, 1
        %s172 = scalar_lea.sflag [#allocation9], %s171
        %s173 = sand.u32 %s105, 1
        %s174 = smul.addr %s173, 8
        %s175 = scalar_lea.vmem [#allocation8], %s174
        %p176 = scmp.lt.s32.totalorder %s22, 1
        %s177 = scalar_select %p176, %s22, 1
        %s178 = smul.addr %s177, 54
        %s179 = smul.addr %s178, 8
        %s180 = scalar_lea.vmem %s0, %s179
        %p181 = scmp.eq.s32.totalorder %s21, 0
        %p182 = scmp.eq.s32.totalorder %s22, 0
        %p183 = pnand %p181, %p182
        %p184 = pneg %p183
        // Predicated region
        $region33: #{tpu_custom_call.1} parent=31 // pred_check
          _
        $region34: #{tpu_custom_call.1} parent=31 // pred_check_branch
          %186 = sbr.rel (%p183) target = $region36
        $region35: #{tpu_custom_call.1} parent=31 // pred_region
          %vm187 = vcmask 25600
          %188 = vst.msk [vmem:[#allocation6] sm:$0x3] %vm187, 0.0
        $region36: #{tpu_custom_call.1} parent=31 // pred_fallthru
          _
        // Predicated region
        $region37: #{tpu_custom_call.1} parent=31 // pred_check
          %p189 = pneg %p181
        $region38: #{tpu_custom_call.1} parent=31 // pred_check_branch
          %191 = sbr.rel (%p189) target = $region40
        $region39: #{tpu_custom_call.1} parent=31 // pred_region
          %v192 = vld [vmem:[%s180] sm:$0xff]
          %v193 = vld [vmem:[%s180 + $0x8] sm:$0xff]
          %v194 = vld [vmem:[%s180 + $0x10] sm:$0x3]
          %v195 = vld [vmem:[%s180 + $0x18] sm:$0xff]
          %v196 = vld [vmem:[%s180 + $0x20] sm:$0xff]
          %v197 = vld [vmem:[%s180 + $0x28] sm:$0x3]
          %v198 = vld [vmem:[%s180 + $0x30] sm:$0xff]
          %v199 = vld [vmem:[%s180 + $0x38] sm:$0xff]
          %v200 = vld [vmem:[%s180 + $0x40] sm:$0x3]
          %v201 = vld [vmem:[%s180 + $0x48] sm:$0xff]
          %v202 = vld [vmem:[%s180 + $0x50] sm:$0xff]
          %v203 = vld [vmem:[%s180 + $0x58] sm:$0x3]
          %v204 = vld [vmem:[%s180 + $0x60] sm:$0xff]
          %v205 = vld [vmem:[%s180 + $0x68] sm:$0xff]
          %v206 = vld [vmem:[%s180 + $0x70] sm:$0x3]
          %v207 = vld [vmem:[%s180 + $0x78] sm:$0xff]
          %v208 = vld [vmem:[%s180 + $0x80] sm:$0xff]
          %v209 = vld [vmem:[%s180 + $0x88] sm:$0x3]
          %v210 = vld [vmem:[%s180 + $0x90] sm:$0xff]
          %v211 = vld [vmem:[%s180 + $0x98] sm:$0xff]
          %v212 = vld [vmem:[%s180 + $0xa0] sm:$0x3]
          %v213 = vld [vmem:[%s180 + $0xa8] sm:$0xff]
          %v214 = vld [vmem:[%s180 + $0xb0] sm:$0xff]
          %v215 = vld [vmem:[%s180 + $0xb8] sm:$0x3]
          %v216 = vld [vmem:[%s180 + $0xc0] sm:$0xff]
          %v217 = vld [vmem:[%s180 + $0xc8] sm:$0xff]
          %v218 = vld [vmem:[%s180 + $0xd0] sm:$0x3]
          %v219 = vld [vmem:[%s180 + $0xd8] sm:$0xff]
          %v220 = vld [vmem:[%s180 + $0xe0] sm:$0xff]
          %v221 = vld [vmem:[%s180 + $0xe8] sm:$0x3]
          %v222 = vld [vmem:[%s180 + $0xf0] sm:$0xff]
          %v223 = vld [vmem:[%s180 + $0xf8] sm:$0xff]
          %v224 = vld [vmem:[%s180 + $0x100] sm:$0x3]
          %v225 = vld [vmem:[%s180 + $0x108] sm:$0xff]
          %v226 = vld [vmem:[%s180 + $0x110] sm:$0xff]
          %v227 = vld [vmem:[%s180 + $0x118] sm:$0x3]
          %v228 = vld [vmem:[%s180 + $0x120] sm:$0xff]
          %v229 = vld [vmem:[%s180 + $0x128] sm:$0xff]
          %v230 = vld [vmem:[%s180 + $0x130] sm:$0x3]
          %v231 = vld [vmem:[%s180 + $0x138] sm:$0xff]
          %v232 = vld [vmem:[%s180 + $0x140] sm:$0xff]
          %v233 = vld [vmem:[%s180 + $0x148] sm:$0x3]
          %v234 = vld [vmem:[%s180 + $0x150] sm:$0xff]
          %v235 = vld [vmem:[%s180 + $0x158] sm:$0xff]
          %v236 = vld [vmem:[%s180 + $0x160] sm:$0x3]
          %v237 = vld [vmem:[%s180 + $0x168] sm:$0xff]
          %v238 = vld [vmem:[%s180 + $0x170] sm:$0xff]
          %v239 = vld [vmem:[%s180 + $0x178] sm:$0x3]
          %v240 = vld [vmem:[%s180 + $0x180] sm:$0xff]
          %v241 = vld [vmem:[%s180 + $0x188] sm:$0xff]
          %v242 = vld [vmem:[%s180 + $0x190] sm:$0x3]
          %v243 = vld [vmem:[%s180 + $0x198] sm:$0xff]
          %v244 = vld [vmem:[%s180 + $0x1a0] sm:$0xff]
          %v245 = vld [vmem:[%s180 + $0x1a8] sm:$0x3]
          %v246 = vld [vmem:[%s1] sm:$0xff]
          %v247 = vld [vmem:[%s1 + $0x8] sm:$0xff]
          %v248 = vld [vmem:[%s1 + $0x10] sm:$0xff]
          %v249 = vld [vmem:[%s1 + $0x18] sm:$0xff]
          %v250 = vld [vmem:[%s1 + $0x20] sm:$0xf]
          %vm251 = vcmask 31744
          %252 = vst.msk [vmem:[#allocation5] sm:$0xff] %vm251, %v192
          %253 = vst.msk [vmem:[#allocation5 + $0x8] sm:$0xff] %vm251, %v193
          %254 = vst.msk [vmem:[#allocation5 + $0x10] sm:$0xff] %vm251, %v195
          %255 = vst.msk [vmem:[#allocation5 + $0x18] sm:$0xff] %vm251, %v196
          %256 = vst.msk [vmem:[#allocation5 + $0x20] sm:$0xff] %vm251, %v198
          %257 = vst.msk [vmem:[#allocation5 + $0x28] sm:$0xff] %vm251, %v199
          %258 = vst.msk [vmem:[#allocation5 + $0x30] sm:$0xff] %vm251, %v201
          %259 = vst.msk [vmem:[#allocation5 + $0x38] sm:$0xff] %vm251, %v202
          %260 = vst.msk [vmem:[#allocation5 + $0x40] sm:$0xff] %vm251, %v204
          %261 = vst.msk [vmem:[#allocation5 + $0x48] sm:$0xff] %vm251, %v205
          %262 = vst.msk [vmem:[#allocation5 + $0x50] sm:$0xff] %vm251, %v207
          %263 = vst.msk [vmem:[#allocation5 + $0x58] sm:$0xff] %vm251, %v208
          %264 = vst.msk [vmem:[#allocation5 + $0x60] sm:$0xff] %vm251, %v210
          %265 = vst.msk [vmem:[#allocation5 + $0x68] sm:$0xff] %vm251, %v211
          %266 = vst.msk [vmem:[#allocation5 + $0x70] sm:$0xff] %vm251, %v213
          %267 = vst.msk [vmem:[#allocation5 + $0x78] sm:$0xff] %vm251, %v214
          %268 = vst.msk [vmem:[#allocation5 + $0x80] sm:$0xff] %vm251, %v216
          %269 = vst.msk [vmem:[#allocation5 + $0x88] sm:$0xff] %vm251, %v217
          %270 = vst.msk [vmem:[#allocation5 + $0x90] sm:$0xff] %vm251, %v219
          %271 = vst.msk [vmem:[#allocation5 + $0x98] sm:$0xff] %vm251, %v220
          %272 = vst.msk [vmem:[#allocation5 + $0xa0] sm:$0xff] %vm251, %v222
          %273 = vst.msk [vmem:[#allocation5 + $0xa8] sm:$0xff] %vm251, %v223
          %274 = vst.msk [vmem:[#allocation5 + $0xb0] sm:$0xff] %vm251, %v225
          %275 = vst.msk [vmem:[#allocation5 + $0xb8] sm:$0xff] %vm251, %v226
          %276 = vst.msk [vmem:[#allocation5 + $0xc0] sm:$0xff] %vm251, %v228
          %277 = vst.msk [vmem:[#allocation5 + $0xc8] sm:$0xff] %vm251, %v229
          %278 = vst.msk [vmem:[#allocation5 + $0xd0] sm:$0xff] %vm251, %v231
          %279 = vst.msk [vmem:[#allocation5 + $0xd8] sm:$0xff] %vm251, %v232
          %280 = vst.msk [vmem:[#allocation5 + $0xe0] sm:$0xff] %vm251, %v234
          %281 = vst.msk [vmem:[#allocation5 + $0xe8] sm:$0xff] %vm251, %v235
          %282 = vst.msk [vmem:[#allocation5 + $0xf0] sm:$0xff] %vm251, %v237
          %283 = vst.msk [vmem:[#allocation5 + $0xf8] sm:$0xff] %vm251, %v238
          %vm332 = vcmask 1046528
          %v333 = vrot.slane %v192, 1
          %v334 = vrot.slane %v193, 1
          %v335 = vsel %vm332, %v333, %v334
          %v336 = vrot.slane %v194, 1
          %v337 = vsel %vm332, %v334, %v336
          %v338 = vrot.slane %v195, 1
          %v339 = vrot.slane %v196, 1
          %v340 = vsel %vm332, %v338, %v339
          %v341 = vrot.slane %v197, 1
          %v342 = vsel %vm332, %v339, %v341
          %v343 = vrot.slane %v198, 1
          %v344 = vrot.slane %v199, 1
          %v345 = vsel %vm332, %v343, %v344
          %v346 = vrot.slane %v200, 1
          %v347 = vsel %vm332, %v344, %v346
          %v348 = vrot.slane %v201, 1
          %v349 = vrot.slane %v202, 1
          %v350 = vsel %vm332, %v348, %v349
          %v351 = vrot.slane %v203, 1
          %v352 = vsel %vm332, %v349, %v351
          %v353 = vrot.slane %v204, 1
          %v354 = vrot.slane %v205, 1
          %v355 = vsel %vm332, %v353, %v354
          %v356 = vrot.slane %v206, 1
          %v357 = vsel %vm332, %v354, %v356
          %v358 = vrot.slane %v207, 1
          %v359 = vrot.slane %v208, 1
          %v360 = vsel %vm332, %v358, %v359
          %v361 = vrot.slane %v209, 1
          %v362 = vsel %vm332, %v359, %v361
          %v363 = vrot.slane %v210, 1
          %v364 = vrot.slane %v211, 1
          %v365 = vsel %vm332, %v363, %v364
          %v366 = vrot.slane %v212, 1
          %v367 = vsel %vm332, %v364, %v366
          %v368 = vrot.slane %v213, 1
          %v369 = vrot.slane %v214, 1
          %v370 = vsel %vm332, %v368, %v369
          %v371 = vrot.slane %v215, 1
          %v372 = vsel %vm332, %v369, %v371
          %v373 = vrot.slane %v216, 1
          %v374 = vrot.slane %v217, 1
          %v375 = vsel %vm332, %v373, %v374
          %v376 = vrot.slane %v218, 1
          %v377 = vsel %vm332, %v374, %v376
          %v378 = vrot.slane %v219, 1
          %v379 = vrot.slane %v220, 1
          %v380 = vsel %vm332, %v378, %v379
          %v381 = vrot.slane %v221, 1
          %v382 = vsel %vm332, %v379, %v381
          %v383 = vrot.slane %v222, 1
          %v384 = vrot.slane %v223, 1
          %v385 = vsel %vm332, %v383, %v384
          %v386 = vrot.slane %v224, 1
          %v387 = vsel %vm332, %v384, %v386
          %v388 = vrot.slane %v225, 1
          %v389 = vrot.slane %v226, 1
          %v390 = vsel %vm332, %v388, %v389
          %v391 = vrot.slane %v227, 1
          %v392 = vsel %vm332, %v389, %v391
          %v393 = vrot.slane %v228, 1
          %v394 = vrot.slane %v229, 1
          %v395 = vsel %vm332, %v393, %v394
          %v396 = vrot.slane %v230, 1
          %v397 = vsel %vm332, %v394, %v396
          %v398 = vrot.slane %v231, 1
          %v399 = vrot.slane %v232, 1
          %v400 = vsel %vm332, %v398, %v399
          %v401 = vrot.slane %v233, 1
          %v402 = vsel %vm332, %v399, %v401
          %v403 = vrot.slane %v234, 1
          %v404 = vrot.slane %v235, 1
          %v405 = vsel %vm332, %v403, %v404
          %v406 = vrot.slane %v236, 1
          %v407 = vsel %vm332, %v404, %v406
          %v408 = vrot.slane %v237, 1
          %v409 = vrot.slane %v238, 1
          %v410 = vsel %vm332, %v408, %v409
          %v411 = vrot.slane %v239, 1
          %v412 = vsel %vm332, %v409, %v411
          %413 = vrot.lane.b32.xlu0 %v335, 4
          %v414 = vpop.permute.xlu0 %413
          %415 = vrot.lane.b32.xlu0 %v337, 4
          %v416 = vpop.permute.xlu0 %415
          %417 = vrot.lane.b32.xlu0 %v340, 4
          %v418 = vpop.permute.xlu0 %417
          %419 = vrot.lane.b32.xlu0 %v342, 4
          %v420 = vpop.permute.xlu0 %419
          %421 = vrot.lane.b32.xlu0 %v345, 4
          %v422 = vpop.permute.xlu0 %421
          %423 = vrot.lane.b32.xlu0 %v347, 4
          %v424 = vpop.permute.xlu0 %423
          %425 = vrot.lane.b32.xlu0 %v350, 4
          %v426 = vpop.permute.xlu0 %425
          %427 = vrot.lane.b32.xlu0 %v352, 4
          %v428 = vpop.permute.xlu0 %427
          %429 = vrot.lane.b32.xlu0 %v355, 4
          %v430 = vpop.permute.xlu0 %429
          %431 = vrot.lane.b32.xlu0 %v357, 4
          %v432 = vpop.permute.xlu0 %431
          %433 = vrot.lane.b32.xlu0 %v360, 4
          %v434 = vpop.permute.xlu0 %433
          %435 = vrot.lane.b32.xlu0 %v362, 4
          %v436 = vpop.permute.xlu0 %435
          %437 = vrot.lane.b32.xlu0 %v365, 4
          %v438 = vpop.permute.xlu0 %437
          %439 = vrot.lane.b32.xlu0 %v367, 4
          %v440 = vpop.permute.xlu0 %439
          %441 = vrot.lane.b32.xlu0 %v370, 4
          %v442 = vpop.permute.xlu0 %441
          %443 = vrot.lane.b32.xlu0 %v372, 4
          %v444 = vpop.permute.xlu0 %443
          %445 = vrot.lane.b32.xlu0 %v375, 4
          %v446 = vpop.permute.xlu0 %445
          %447 = vrot.lane.b32.xlu0 %v377, 4
          %v448 = vpop.permute.xlu0 %447
          %449 = vrot.lane.b32.xlu0 %v380, 4
          %v450 = vpop.permute.xlu0 %449
          %451 = vrot.lane.b32.xlu0 %v382, 4
          %v452 = vpop.permute.xlu0 %451
          %453 = vrot.lane.b32.xlu0 %v385, 4
          %v454 = vpop.permute.xlu0 %453
          %455 = vrot.lane.b32.xlu0 %v387, 4
          %v456 = vpop.permute.xlu0 %455
          %457 = vrot.lane.b32.xlu0 %v390, 4
          %v458 = vpop.permute.xlu0 %457
          %459 = vrot.lane.b32.xlu0 %v392, 4
          %v460 = vpop.permute.xlu0 %459
          %461 = vrot.lane.b32.xlu0 %v395, 4
          %v462 = vpop.permute.xlu0 %461
          %463 = vrot.lane.b32.xlu0 %v397, 4
          %v464 = vpop.permute.xlu0 %463
          %465 = vrot.lane.b32.xlu0 %v400, 4
          %v466 = vpop.permute.xlu0 %465
          %467 = vrot.lane.b32.xlu0 %v402, 4
          %v468 = vpop.permute.xlu0 %467
          %469 = vrot.lane.b32.xlu0 %v405, 4
          %v470 = vpop.permute.xlu0 %469
          %471 = vrot.lane.b32.xlu0 %v407, 4
          %v472 = vpop.permute.xlu0 %471
          %473 = vrot.lane.b32.xlu0 %v410, 4
          %v474 = vpop.permute.xlu0 %473
          %475 = vrot.lane.b32.xlu0 %v412, 4
          %v476 = vpop.permute.xlu0 %475
          %vm509 = vcmask 64544
          %510 = vst.msk [vmem:[#allocation5] sm:$0xff] %vm509, %v414
          %511 = vst.msk [vmem:[#allocation5 + $0x8] sm:$0xff] %vm509, %v416
          %512 = vst.msk [vmem:[#allocation5 + $0x10] sm:$0xff] %vm509, %v418
          %513 = vst.msk [vmem:[#allocation5 + $0x18] sm:$0xff] %vm509, %v420
          %514 = vst.msk [vmem:[#allocation5 + $0x20] sm:$0xff] %vm509, %v422
          %515 = vst.msk [vmem:[#allocation5 + $0x28] sm:$0xff] %vm509, %v424
          %516 = vst.msk [vmem:[#allocation5 + $0x30] sm:$0xff] %vm509, %v426
          %517 = vst.msk [vmem:[#allocation5 + $0x38] sm:$0xff] %vm509, %v428
          %518 = vst.msk [vmem:[#allocation5 + $0x40] sm:$0xff] %vm509, %v430
          %519 = vst.msk [vmem:[#allocation5 + $0x48] sm:$0xff] %vm509, %v432
          %520 = vst.msk [vmem:[#allocation5 + $0x50] sm:$0xff] %vm509, %v434
          %521 = vst.msk [vmem:[#allocation5 + $0x58] sm:$0xff] %vm509, %v436
          %522 = vst.msk [vmem:[#allocation5 + $0x60] sm:$0xff] %vm509, %v438
          %523 = vst.msk [vmem:[#allocation5 + $0x68] sm:$0xff] %vm509, %v440
          %524 = vst.msk [vmem:[#allocation5 + $0x70] sm:$0xff] %vm509, %v442
          %525 = vst.msk [vmem:[#allocation5 + $0x78] sm:$0xff] %vm509, %v444
          %526 = vst.msk [vmem:[#allocation5 + $0x80] sm:$0xff] %vm509, %v446
          %527 = vst.msk [vmem:[#allocation5 + $0x88] sm:$0xff] %vm509, %v448
          %528 = vst.msk [vmem:[#allocation5 + $0x90] sm:$0xff] %vm509, %v450
          %529 = vst.msk [vmem:[#allocation5 + $0x98] sm:$0xff] %vm509, %v452
          %530 = vst.msk [vmem:[#allocation5 + $0xa0] sm:$0xff] %vm509, %v454
          %531 = vst.msk [vmem:[#allocation5 + $0xa8] sm:$0xff] %vm509, %v456
          %532 = vst.msk [vmem:[#allocation5 + $0xb0] sm:$0xff] %vm509, %v458
          %533 = vst.msk [vmem:[#allocation5 + $0xb8] sm:$0xff] %vm509, %v460
          %534 = vst.msk [vmem:[#allocation5 + $0xc0] sm:$0xff] %vm509, %v462
          %535 = vst.msk [vmem:[#allocation5 + $0xc8] sm:$0xff] %vm509, %v464
          %536 = vst.msk [vmem:[#allocation5 + $0xd0] sm:$0xff] %vm509, %v466
          %537 = vst.msk [vmem:[#allocation5 + $0xd8] sm:$0xff] %vm509, %v468
          %538 = vst.msk [vmem:[#allocation5 + $0xe0] sm:$0xff] %vm509, %v470
          %539 = vst.msk [vmem:[#allocation5 + $0xe8] sm:$0xff] %vm509, %v472
          %540 = vst.msk [vmem:[#allocation5 + $0xf0] sm:$0xff] %vm509, %v474
          %541 = vst.msk [vmem:[#allocation5 + $0xf8] sm:$0xff] %vm509, %v476
          %vm542 = vcmask 1045504
          %v543 = vrot.slane %v192, 2
          %v544 = vrot.slane %v193, 2
          %v545 = vsel %vm542, %v543, %v544
          %v546 = vrot.slane %v194, 2
          %v547 = vsel %vm542, %v544, %v546
          %v548 = vrot.slane %v195, 2
          %v549 = vrot.slane %v196, 2
          %v550 = vsel %vm542, %v548, %v549
          %v551 = vrot.slane %v197, 2
          %v552 = vsel %vm542, %v549, %v551
          %v553 = vrot.slane %v198, 2
          %v554 = vrot.slane %v199, 2
          %v555 = vsel %vm542, %v553, %v554
          %v556 = vrot.slane %v200, 2
          %v557 = vsel %vm542, %v554, %v556
          %v558 = vrot.slane %v201, 2
          %v559 = vrot.slane %v202, 2
          %v560 = vsel %vm542, %v558, %v559
          %v561 = vrot.slane %v203, 2
          %v562 = vsel %vm542, %v559, %v561
          %v563 = vrot.slane %v204, 2
          %v564 = vrot.slane %v205, 2
          %v565 = vsel %vm542, %v563, %v564
          %v566 = vrot.slane %v206, 2
          %v567 = vsel %vm542, %v564, %v566
          %v568 = vrot.slane %v207, 2
          %v569 = vrot.slane %v208, 2
          %v570 = vsel %vm542, %v568, %v569
          %v571 = vrot.slane %v209, 2
          %v572 = vsel %vm542, %v569, %v571
          %v573 = vrot.slane %v210, 2
          %v574 = vrot.slane %v211, 2
          %v575 = vsel %vm542, %v573, %v574
          %v576 = vrot.slane %v212, 2
          %v577 = vsel %vm542, %v574, %v576
          %v578 = vrot.slane %v213, 2
          %v579 = vrot.slane %v214, 2
          %v580 = vsel %vm542, %v578, %v579
          %v581 = vrot.slane %v215, 2
          %v582 = vsel %vm542, %v579, %v581
          %v583 = vrot.slane %v216, 2
          %v584 = vrot.slane %v217, 2
          %v585 = vsel %vm542, %v583, %v584
          %v586 = vrot.slane %v218, 2
          %v587 = vsel %vm542, %v584, %v586
          %v588 = vrot.slane %v219, 2
          %v589 = vrot.slane %v220, 2
          %v590 = vsel %vm542, %v588, %v589
          %v591 = vrot.slane %v221, 2
          %v592 = vsel %vm542, %v589, %v591
          %v593 = vrot.slane %v222, 2
          %v594 = vrot.slane %v223, 2
          %v595 = vsel %vm542, %v593, %v594
          %v596 = vrot.slane %v224, 2
          %v597 = vsel %vm542, %v594, %v596
          %v598 = vrot.slane %v225, 2
          %v599 = vrot.slane %v226, 2
          %v600 = vsel %vm542, %v598, %v599
          %v601 = vrot.slane %v227, 2
          %v602 = vsel %vm542, %v599, %v601
          %v603 = vrot.slane %v228, 2
          %v604 = vrot.slane %v229, 2
          %v605 = vsel %vm542, %v603, %v604
          %v606 = vrot.slane %v230, 2
          %v607 = vsel %vm542, %v604, %v606
          %v608 = vrot.slane %v231, 2
          %v609 = vrot.slane %v232, 2
          %v610 = vsel %vm542, %v608, %v609
          %v611 = vrot.slane %v233, 2
          %v612 = vsel %vm542, %v609, %v611
          %v613 = vrot.slane %v234, 2
          %v614 = vrot.slane %v235, 2
          %v615 = vsel %vm542, %v613, %v614
          %v616 = vrot.slane %v236, 2
          %v617 = vsel %vm542, %v614, %v616
          %v618 = vrot.slane %v237, 2
          %v619 = vrot.slane %v238, 2
          %v620 = vsel %vm542, %v618, %v619
          %v621 = vrot.slane %v239, 2
          %v622 = vsel %vm542, %v619, %v621
          %623 = vrot.lane.b32.xlu0 %v545, 8
          %v624 = vpop.permute.xlu0 %623
          %625 = vrot.lane.b32.xlu0 %v547, 8
          %v626 = vpop.permute.xlu0 %625
          %627 = vrot.lane.b32.xlu0 %v550, 8
          %v628 = vpop.permute.xlu0 %627
          %629 = vrot.lane.b32.xlu0 %v552, 8
          %v630 = vpop.permute.xlu0 %629
          %631 = vrot.lane.b32.xlu0 %v555, 8
          %v632 = vpop.permute.xlu0 %631
          %633 = vrot.lane.b32.xlu0 %v557, 8
          %v634 = vpop.permute.xlu0 %633
          %635 = vrot.lane.b32.xlu0 %v560, 8
          %v636 = vpop.permute.xlu0 %635
          %637 = vrot.lane.b32.xlu0 %v562, 8
          %v638 = vpop.permute.xlu0 %637
          %639 = vrot.lane.b32.xlu0 %v565, 8
          %v640 = vpop.permute.xlu0 %639
          %641 = vrot.lane.b32.xlu0 %v567, 8
          %v642 = vpop.permute.xlu0 %641
          %643 = vrot.lane.b32.xlu0 %v570, 8
          %v644 = vpop.permute.xlu0 %643
          %645 = vrot.lane.b32.xlu0 %v572, 8
          %v646 = vpop.permute.xlu0 %645
          %647 = vrot.lane.b32.xlu0 %v575, 8
          %v648 = vpop.permute.xlu0 %647
          %649 = vrot.lane.b32.xlu0 %v577, 8
          %v650 = vpop.permute.xlu0 %649
          %651 = vrot.lane.b32.xlu0 %v580, 8
          %v652 = vpop.permute.xlu0 %651
          %653 = vrot.lane.b32.xlu0 %v582, 8
          %v654 = vpop.permute.xlu0 %653
          %655 = vrot.lane.b32.xlu0 %v585, 8
          %v656 = vpop.permute.xlu0 %655
          %657 = vrot.lane.b32.xlu0 %v587, 8
          %v658 = vpop.permute.xlu0 %657
          %659 = vrot.lane.b32.xlu0 %v590, 8
          %v660 = vpop.permute.xlu0 %659
          %661 = vrot.lane.b32.xlu0 %v592, 8
          %v662 = vpop.permute.xlu0 %661
          %663 = vrot.lane.b32.xlu0 %v595, 8
          %v664 = vpop.permute.xlu0 %663
          %665 = vrot.lane.b32.xlu0 %v597, 8
          %v666 = vpop.permute.xlu0 %665
          %667 = vrot.lane.b32.xlu0 %v600, 8
          %v668 = vpop.permute.xlu0 %667
          %669 = vrot.lane.b32.xlu0 %v602, 8
          %v670 = vpop.permute.xlu0 %669
          %671 = vrot.lane.b32.xlu0 %v605, 8
          %v672 = vpop.permute.xlu0 %671
          %673 = vrot.lane.b32.xlu0 %v607, 8
          %v674 = vpop.permute.xlu0 %673
          %675 = vrot.lane.b32.xlu0 %v610, 8
          %v676 = vpop.permute.xlu0 %675
          %677 = vrot.lane.b32.xlu0 %v612, 8
          %v678 = vpop.permute.xlu0 %677
          %679 = vrot.lane.b32.xlu0 %v615, 8
          %v680 = vpop.permute.xlu0 %679
          %681 = vrot.lane.b32.xlu0 %v617, 8
          %v682 = vpop.permute.xlu0 %681
          %683 = vrot.lane.b32.xlu0 %v620, 8
          %v684 = vpop.permute.xlu0 %683
          %685 = vrot.lane.b32.xlu0 %v622, 8
          %v686 = vpop.permute.xlu0 %685
          %vm719 = vcmask 97344
          %720 = vst.msk [vmem:[#allocation5] sm:$0xff] %vm719, %v624
          %721 = vst.msk [vmem:[#allocation5 + $0x8] sm:$0xff] %vm719, %v626
          %722 = vst.msk [vmem:[#allocation5 + $0x10] sm:$0xff] %vm719, %v628
          %723 = vst.msk [vmem:[#allocation5 + $0x18] sm:$0xff] %vm719, %v630
          %724 = vst.msk [vmem:[#allocation5 + $0x20] sm:$0xff] %vm719, %v632
          %725 = vst.msk [vmem:[#allocation5 + $0x28] sm:$0xff] %vm719, %v634
          %726 = vst.msk [vmem:[#allocation5 + $0x30] sm:$0xff] %vm719, %v636
          %727 = vst.msk [vmem:[#allocation5 + $0x38] sm:$0xff] %vm719, %v638
          %728 = vst.msk [vmem:[#allocation5 + $0x40] sm:$0xff] %vm719, %v640
          %729 = vst.msk [vmem:[#allocation5 + $0x48] sm:$0xff] %vm719, %v642
          %730 = vst.msk [vmem:[#allocation5 + $0x50] sm:$0xff] %vm719, %v644
          %731 = vst.msk [vmem:[#allocation5 + $0x58] sm:$0xff] %vm719, %v646
          %732 = vst.msk [vmem:[#allocation5 + $0x60] sm:$0xff] %vm719, %v648
          %733 = vst.msk [vmem:[#allocation5 + $0x68] sm:$0xff] %vm719, %v650
          %734 = vst.msk [vmem:[#allocation5 + $0x70] sm:$0xff] %vm719, %v652
          %735 = vst.msk [vmem:[#allocation5 + $0x78] sm:$0xff] %vm719, %v654
          %736 = vst.msk [vmem:[#allocation5 + $0x80] sm:$0xff] %vm719, %v656
          %737 = vst.msk [vmem:[#allocation5 + $0x88] sm:$0xff] %vm719, %v658
          %738 = vst.msk [vmem:[#allocation5 + $0x90] sm:$0xff] %vm719, %v660
          %739 = vst.msk [vmem:[#allocation5 + $0x98] sm:$0xff] %vm719, %v662
          %740 = vst.msk [vmem:[#allocation5 + $0xa0] sm:$0xff] %vm719, %v664
          %741 = vst.msk [vmem:[#allocation5 + $0xa8] sm:$0xff] %vm719, %v666
          %742 = vst.msk [vmem:[#allocation5 + $0xb0] sm:$0xff] %vm719, %v668
          %743 = vst.msk [vmem:[#allocation5 + $0xb8] sm:$0xff] %vm719, %v670
          %744 = vst.msk [vmem:[#allocation5 + $0xc0] sm:$0xff] %vm719, %v672
          %745 = vst.msk [vmem:[#allocation5 + $0xc8] sm:$0xff] %vm719, %v674
          %746 = vst.msk [vmem:[#allocation5 + $0xd0] sm:$0xff] %vm719, %v676
          %747 = vst.msk [vmem:[#allocation5 + $0xd8] sm:$0xff] %vm719, %v678
          %748 = vst.msk [vmem:[#allocation5 + $0xe0] sm:$0xff] %vm719, %v680
          %749 = vst.msk [vmem:[#allocation5 + $0xe8] sm:$0xff] %vm719, %v682
          %750 = vst.msk [vmem:[#allocation5 + $0xf0] sm:$0xff] %vm719, %v684
          %751 = vst.msk [vmem:[#allocation5 + $0xf8] sm:$0xff] %vm719, %v686
          %754 = vrot.lane.b32.xlu0 %v195, 12
          %v755 = vpop.permute.xlu0 %754
          %756 = vrot.lane.b32.xlu0 %v196, 12
          %v757 = vpop.permute.xlu0 %756
          %758 = vrot.lane.b32.xlu0 %v198, 12
          %v759 = vpop.permute.xlu0 %758
          %760 = vrot.lane.b32.xlu0 %v199, 12
          %v761 = vpop.permute.xlu0 %760
          %762 = vrot.lane.b32.xlu0 %v201, 12
          %v763 = vpop.permute.xlu0 %762
          %764 = vrot.lane.b32.xlu0 %v202, 12
          %v765 = vpop.permute.xlu0 %764
          %766 = vrot.lane.b32.xlu0 %v204, 12
          %v767 = vpop.permute.xlu0 %766
          %768 = vrot.lane.b32.xlu0 %v205, 12
          %v769 = vpop.permute.xlu0 %768
          %770 = vrot.lane.b32.xlu0 %v207, 12
          %v771 = vpop.permute.xlu0 %770
          %772 = vrot.lane.b32.xlu0 %v208, 12
          %v773 = vpop.permute.xlu0 %772
          %774 = vrot.lane.b32.xlu0 %v210, 12
          %v775 = vpop.permute.xlu0 %774
          %776 = vrot.lane.b32.xlu0 %v211, 12
          %v777 = vpop.permute.xlu0 %776
          %778 = vrot.lane.b32.xlu0 %v213, 12
          %v779 = vpop.permute.xlu0 %778
          %780 = vrot.lane.b32.xlu0 %v214, 12
          %v781 = vpop.permute.xlu0 %780
          %782 = vrot.lane.b32.xlu0 %v216, 12
          %v783 = vpop.permute.xlu0 %782
          %784 = vrot.lane.b32.xlu0 %v217, 12
          %v785 = vpop.permute.xlu0 %784
          %786 = vrot.lane.b32.xlu0 %v219, 12
          %v787 = vpop.permute.xlu0 %786
          %788 = vrot.lane.b32.xlu0 %v220, 12
          %v789 = vpop.permute.xlu0 %788
          %790 = vrot.lane.b32.xlu0 %v222, 12
          %v791 = vpop.permute.xlu0 %790
          %792 = vrot.lane.b32.xlu0 %v223, 12
          %v793 = vpop.permute.xlu0 %792
          %794 = vrot.lane.b32.xlu0 %v225, 12
          %v795 = vpop.permute.xlu0 %794
          %796 = vrot.lane.b32.xlu0 %v226, 12
          %v797 = vpop.permute.xlu0 %796
          %798 = vrot.lane.b32.xlu0 %v228, 12
          %v799 = vpop.permute.xlu0 %798
          %800 = vrot.lane.b32.xlu0 %v229, 12
          %v801 = vpop.permute.xlu0 %800
          %802 = vrot.lane.b32.xlu0 %v231, 12
          %v803 = vpop.permute.xlu0 %802
          %804 = vrot.lane.b32.xlu0 %v232, 12
          %v805 = vpop.permute.xlu0 %804
          %806 = vrot.lane.b32.xlu0 %v234, 12
          %v807 = vpop.permute.xlu0 %806
          %808 = vrot.lane.b32.xlu0 %v235, 12
          %v809 = vpop.permute.xlu0 %808
          %810 = vrot.lane.b32.xlu0 %v237, 12
          %v811 = vpop.permute.xlu0 %810
          %812 = vrot.lane.b32.xlu0 %v238, 12
          %v813 = vpop.permute.xlu0 %812
          %814 = vrot.lane.b32.xlu0 %v240, 12
          %v815 = vpop.permute.xlu0 %814
          %816 = vrot.lane.b32.xlu0 %v241, 12
          %v817 = vpop.permute.xlu0 %816
          %vm850 = vcmask 130144
          %851 = vst.msk [vmem:[#allocation5] sm:$0xff] %vm850, %v755
          %852 = vst.msk [vmem:[#allocation5 + $0x8] sm:$0xff] %vm850, %v757
          %853 = vst.msk [vmem:[#allocation5 + $0x10] sm:$0xff] %vm850, %v759
          %854 = vst.msk [vmem:[#allocation5 + $0x18] sm:$0xff] %vm850, %v761
          %855 = vst.msk [vmem:[#allocation5 + $0x20] sm:$0xff] %vm850, %v763
          %856 = vst.msk [vmem:[#allocation5 + $0x28] sm:$0xff] %vm850, %v765
          %857 = vst.msk [vmem:[#allocation5 + $0x30] sm:$0xff] %vm850, %v767
          %858 = vst.msk [vmem:[#allocation5 + $0x38] sm:$0xff] %vm850, %v769
          %859 = vst.msk [vmem:[#allocation5 + $0x40] sm:$0xff] %vm850, %v771
          %860 = vst.msk [vmem:[#allocation5 + $0x48] sm:$0xff] %vm850, %v773
          %861 = vst.msk [vmem:[#allocation5 + $0x50] sm:$0xff] %vm850, %v775
          %862 = vst.msk [vmem:[#allocation5 + $0x58] sm:$0xff] %vm850, %v777
          %863 = vst.msk [vmem:[#allocation5 + $0x60] sm:$0xff] %vm850, %v779
          %864 = vst.msk [vmem:[#allocation5 + $0x68] sm:$0xff] %vm850, %v781
          %865 = vst.msk [vmem:[#allocation5 + $0x70] sm:$0xff] %vm850, %v783
          %866 = vst.msk [vmem:[#allocation5 + $0x78] sm:$0xff] %vm850, %v785
          %867 = vst.msk [vmem:[#allocation5 + $0x80] sm:$0xff] %vm850, %v787
          %868 = vst.msk [vmem:[#allocation5 + $0x88] sm:$0xff] %vm850, %v789
          %869 = vst.msk [vmem:[#allocation5 + $0x90] sm:$0xff] %vm850, %v791
          %870 = vst.msk [vmem:[#allocation5 + $0x98] sm:$0xff] %vm850, %v793
          %871 = vst.msk [vmem:[#allocation5 + $0xa0] sm:$0xff] %vm850, %v795
          %872 = vst.msk [vmem:[#allocation5 + $0xa8] sm:$0xff] %vm850, %v797
          %873 = vst.msk [vmem:[#allocation5 + $0xb0] sm:$0xff] %vm850, %v799
          %874 = vst.msk [vmem:[#allocation5 + $0xb8] sm:$0xff] %vm850, %v801
          %875 = vst.msk [vmem:[#allocation5 + $0xc0] sm:$0xff] %vm850, %v803
          %876 = vst.msk [vmem:[#allocation5 + $0xc8] sm:$0xff] %vm850, %v805
          %877 = vst.msk [vmem:[#allocation5 + $0xd0] sm:$0xff] %vm850, %v807
          %878 = vst.msk [vmem:[#allocation5 + $0xd8] sm:$0xff] %vm850, %v809
          %879 = vst.msk [vmem:[#allocation5 + $0xe0] sm:$0xff] %vm850, %v811
          %880 = vst.msk [vmem:[#allocation5 + $0xe8] sm:$0xff] %vm850, %v813
          %881 = vst.msk [vmem:[#allocation5 + $0xf0] sm:$0xff] %vm850, %v815
          %882 = vst.msk [vmem:[#allocation5 + $0xf8] sm:$0xff] %vm850, %v817
          %v884 = vrot.slane %v240, 1
          %v885 = vrot.slane %v241, 1
          %v886 = vsel %vm332, %v884, %v885
          %v887 = vrot.slane %v242, 1
          %v888 = vsel %vm332, %v885, %v887
          %889 = vrot.lane.b32.xlu0 %v340, 16
          %v890 = vpop.permute.xlu0 %889
          %891 = vrot.lane.b32.xlu0 %v342, 16
          %v892 = vpop.permute.xlu0 %891
          %893 = vrot.lane.b32.xlu0 %v345, 16
          %v894 = vpop.permute.xlu0 %893
          %895 = vrot.lane.b32.xlu0 %v347, 16
          %v896 = vpop.permute.xlu0 %895
          %897 = vrot.lane.b32.xlu0 %v350, 16
          %v898 = vpop.permute.xlu0 %897
          %899 = vrot.lane.b32.xlu0 %v352, 16
          %v900 = vpop.permute.xlu0 %899
          %901 = vrot.lane.b32.xlu0 %v355, 16
          %v902 = vpop.permute.xlu0 %901
          %903 = vrot.lane.b32.xlu0 %v357, 16
          %v904 = vpop.permute.xlu0 %903
          %905 = vrot.lane.b32.xlu0 %v360, 16
          %v906 = vpop.permute.xlu0 %905
          %907 = vrot.lane.b32.xlu0 %v362, 16
          %v908 = vpop.permute.xlu0 %907
          %909 = vrot.lane.b32.xlu0 %v365, 16
          %v910 = vpop.permute.xlu0 %909
          %911 = vrot.lane.b32.xlu0 %v367, 16
          %v912 = vpop.permute.xlu0 %911
          %913 = vrot.lane.b32.xlu0 %v370, 16
          %v914 = vpop.permute.xlu0 %913
          %915 = vrot.lane.b32.xlu0 %v372, 16
          %v916 = vpop.permute.xlu0 %915
          %917 = vrot.lane.b32.xlu0 %v375, 16
          %v918 = vpop.permute.xlu0 %917
          %919 = vrot.lane.b32.xlu0 %v377, 16
          %v920 = vpop.permute.xlu0 %919
          %921 = vrot.lane.b32.xlu0 %v380, 16
          %v922 = vpop.permute.xlu0 %921
          %923 = vrot.lane.b32.xlu0 %v382, 16
          %v924 = vpop.permute.xlu0 %923
          %925 = vrot.lane.b32.xlu0 %v385, 16
          %v926 = vpop.permute.xlu0 %925
          %927 = vrot.lane.b32.xlu0 %v387, 16
          %v928 = vpop.permute.xlu0 %927
          %929 = vrot.lane.b32.xlu0 %v390, 16
          %v930 = vpop.permute.xlu0 %929
          %931 = vrot.lane.b32.xlu0 %v392, 16
          %v932 = vpop.permute.xlu0 %931
          %933 = vrot.lane.b32.xlu0 %v395, 16
          %v934 = vpop.permute.xlu0 %933
          %935 = vrot.lane.b32.xlu0 %v397, 16
          %v936 = vpop.permute.xlu0 %935
          %937 = vrot.lane.b32.xlu0 %v400, 16
          %v938 = vpop.permute.xlu0 %937
          %939 = vrot.lane.b32.xlu0 %v402, 16
          %v940 = vpop.permute.xlu0 %939
          %941 = vrot.lane.b32.xlu0 %v405, 16
          %v942 = vpop.permute.xlu0 %941
          %943 = vrot.lane.b32.xlu0 %v407, 16
          %v944 = vpop.permute.xlu0 %943
          %945 = vrot.lane.b32.xlu0 %v410, 16
          %v946 = vpop.permute.xlu0 %945
          %947 = vrot.lane.b32.xlu0 %v412, 16
          %v948 = vpop.permute.xlu0 %947
          %949 = vrot.lane.b32.xlu0 %v886, 16
          %v950 = vpop.permute.xlu0 %949
          %951 = vrot.lane.b32.xlu0 %v888, 16
          %v952 = vpop.permute.xlu0 %951
          %vm985 = vcmask 162944
          %986 = vst.msk [vmem:[#allocation5] sm:$0xff] %vm985, %v890
          %987 = vst.msk [vmem:[#allocation5 + $0x8] sm:$0xff] %vm985, %v892
          %988 = vst.msk [vmem:[#allocation5 + $0x10] sm:$0xff] %vm985, %v894
          %989 = vst.msk [vmem:[#allocation5 + $0x18] sm:$0xff] %vm985, %v896
          %990 = vst.msk [vmem:[#allocation5 + $0x20] sm:$0xff] %vm985, %v898
          %991 = vst.msk [vmem:[#allocation5 + $0x28] sm:$0xff] %vm985, %v900
          %992 = vst.msk [vmem:[#allocation5 + $0x30] sm:$0xff] %vm985, %v902
          %993 = vst.msk [vmem:[#allocation5 + $0x38] sm:$0xff] %vm985, %v904
          %994 = vst.msk [vmem:[#allocation5 + $0x40] sm:$0xff] %vm985, %v906
          %995 = vst.msk [vmem:[#allocation5 + $0x48] sm:$0xff] %vm985, %v908
          %996 = vst.msk [vmem:[#allocation5 + $0x50] sm:$0xff] %vm985, %v910
          %997 = vst.msk [vmem:[#allocation5 + $0x58] sm:$0xff] %vm985, %v912
          %998 = vst.msk [vmem:[#allocation5 + $0x60] sm:$0xff] %vm985, %v914
          %999 = vst.msk [vmem:[#allocation5 + $0x68] sm:$0xff] %vm985, %v916
          %1000 = vst.msk [vmem:[#allocation5 + $0x70] sm:$0xff] %vm985, %v918
          %1001 = vst.msk [vmem:[#allocation5 + $0x78] sm:$0xff] %vm985, %v920
          %1002 = vst.msk [vmem:[#allocation5 + $0x80] sm:$0xff] %vm985, %v922
          %1003 = vst.msk [vmem:[#allocation5 + $0x88] sm:$0xff] %vm985, %v924
          %1004 = vst.msk [vmem:[#allocation5 + $0x90] sm:$0xff] %vm985, %v926
          %1005 = vst.msk [vmem:[#allocation5 + $0x98] sm:$0xff] %vm985, %v928
          %1006 = vst.msk [vmem:[#allocation5 + $0xa0] sm:$0xff] %vm985, %v930
          %1007 = vst.msk [vmem:[#allocation5 + $0xa8] sm:$0xff] %vm985, %v932
          %1008 = vst.msk [vmem:[#allocation5 + $0xb0] sm:$0xff] %vm985, %v934
          %1009 = vst.msk [vmem:[#allocation5 + $0xb8] sm:$0xff] %vm985, %v936
          %1010 = vst.msk [vmem:[#allocation5 + $0xc0] sm:$0xff] %vm985, %v938
          %1011 = vst.msk [vmem:[#allocation5 + $0xc8] sm:$0xff] %vm985, %v940
          %1012 = vst.msk [vmem:[#allocation5 + $0xd0] sm:$0xff] %vm985, %v942
          %1013 = vst.msk [vmem:[#allocation5 + $0xd8] sm:$0xff] %vm985, %v944
          %1014 = vst.msk [vmem:[#allocation5 + $0xe0] sm:$0xff] %vm985, %v946
          %1015 = vst.msk [vmem:[#allocation5 + $0xe8] sm:$0xff] %vm985, %v948
          %1016 = vst.msk [vmem:[#allocation5 + $0xf0] sm:$0xff] %vm985, %v950
          %1017 = vst.msk [vmem:[#allocation5 + $0xf8] sm:$0xff] %vm985, %v952
          %v1018 = vrot.slane %v240, 2
          %v1019 = vrot.slane %v241, 2
          %v1020 = vsel %vm542, %v1018, %v1019
          %v1021 = vrot.slane %v242, 2
          %v1022 = vsel %vm542, %v1019, %v1021
          %1023 = vrot.lane.b32.xlu0 %v550, 20
          %v1024 = vpop.permute.xlu0 %1023
          %1025 = vrot.lane.b32.xlu0 %v552, 20
          %v1026 = vpop.permute.xlu0 %1025
          %1027 = vrot.lane.b32.xlu0 %v555, 20
          %v1028 = vpop.permute.xlu0 %1027
          %1029 = vrot.lane.b32.xlu0 %v557, 20
          %v1030 = vpop.permute.xlu0 %1029
          %1031 = vrot.lane.b32.xlu0 %v560, 20
          %v1032 = vpop.permute.xlu0 %1031
          %1033 = vrot.lane.b32.xlu0 %v562, 20
          %v1034 = vpop.permute.xlu0 %1033
          %1035 = vrot.lane.b32.xlu0 %v565, 20
          %v1036 = vpop.permute.xlu0 %1035
          %1037 = vrot.lane.b32.xlu0 %v567, 20
          %v1038 = vpop.permute.xlu0 %1037
          %1039 = vrot.lane.b32.xlu0 %v570, 20
          %v1040 = vpop.permute.xlu0 %1039
          %1041 = vrot.lane.b32.xlu0 %v572, 20
          %v1042 = vpop.permute.xlu0 %1041
          %1043 = vrot.lane.b32.xlu0 %v575, 20
          %v1044 = vpop.permute.xlu0 %1043
          %1045 = vrot.lane.b32.xlu0 %v577, 20
          %v1046 = vpop.permute.xlu0 %1045
          %1047 = vrot.lane.b32.xlu0 %v580, 20
          %v1048 = vpop.permute.xlu0 %1047
          %1049 = vrot.lane.b32.xlu0 %v582, 20
          %v1050 = vpop.permute.xlu0 %1049
          %1051 = vrot.lane.b32.xlu0 %v585, 20
          %v1052 = vpop.permute.xlu0 %1051
          %1053 = vrot.lane.b32.xlu0 %v587, 20
          %v1054 = vpop.permute.xlu0 %1053
          %1055 = vrot.lane.b32.xlu0 %v590, 20
          %v1056 = vpop.permute.xlu0 %1055
          %1057 = vrot.lane.b32.xlu0 %v592, 20
          %v1058 = vpop.permute.xlu0 %1057
          %1059 = vrot.lane.b32.xlu0 %v595, 20
          %v1060 = vpop.permute.xlu0 %1059
          %1061 = vrot.lane.b32.xlu0 %v597, 20
          %v1062 = vpop.permute.xlu0 %1061
          %1063 = vrot.lane.b32.xlu0 %v600, 20
          %v1064 = vpop.permute.xlu0 %1063
          %1065 = vrot.lane.b32.xlu0 %v602, 20
          %v1066 = vpop.permute.xlu0 %1065
          %1067 = vrot.lane.b32.xlu0 %v605, 20
          %v1068 = vpop.permute.xlu0 %1067
          %1069 = vrot.lane.b32.xlu0 %v607, 20
          %v1070 = vpop.permute.xlu0 %1069
          %1071 = vrot.lane.b32.xlu0 %v610, 20
          %v1072 = vpop.permute.xlu0 %1071
          %1073 = vrot.lane.b32.xlu0 %v612, 20
          %v1074 = vpop.permute.xlu0 %1073
          %1075 = vrot.lane.b32.xlu0 %v615, 20
          %v1076 = vpop.permute.xlu0 %1075
          %1077 = vrot.lane.b32.xlu0 %v617, 20
          %v1078 = vpop.permute.xlu0 %1077
          %1079 = vrot.lane.b32.xlu0 %v620, 20
          %v1080 = vpop.permute.xlu0 %1079
          %1081 = vrot.lane.b32.xlu0 %v622, 20
          %v1082 = vpop.permute.xlu0 %1081
          %1083 = vrot.lane.b32.xlu0 %v1020, 20
          %v1084 = vpop.permute.xlu0 %1083
          %1085 = vrot.lane.b32.xlu0 %v1022, 20
          %v1086 = vpop.permute.xlu0 %1085
          %vm1119 = vcmask 195744
          %1120 = vst.msk [vmem:[#allocation5] sm:$0xff] %vm1119, %v1024
          %1121 = vst.msk [vmem:[#allocation5 + $0x8] sm:$0xff] %vm1119, %v1026
          %1122 = vst.msk [vmem:[#allocation5 + $0x10] sm:$0xff] %vm1119, %v1028
          %1123 = vst.msk [vmem:[#allocation5 + $0x18] sm:$0xff] %vm1119, %v1030
          %1124 = vst.msk [vmem:[#allocation5 + $0x20] sm:$0xff] %vm1119, %v1032
          %1125 = vst.msk [vmem:[#allocation5 + $0x28] sm:$0xff] %vm1119, %v1034
          %1126 = vst.msk [vmem:[#allocation5 + $0x30] sm:$0xff] %vm1119, %v1036
          %1127 = vst.msk [vmem:[#allocation5 + $0x38] sm:$0xff] %vm1119, %v1038
          %1128 = vst.msk [vmem:[#allocation5 + $0x40] sm:$0xff] %vm1119, %v1040
          %1129 = vst.msk [vmem:[#allocation5 + $0x48] sm:$0xff] %vm1119, %v1042
          %1130 = vst.msk [vmem:[#allocation5 + $0x50] sm:$0xff] %vm1119, %v1044
          %1131 = vst.msk [vmem:[#allocation5 + $0x58] sm:$0xff] %vm1119, %v1046
          %1132 = vst.msk [vmem:[#allocation5 + $0x60] sm:$0xff] %vm1119, %v1048
          %1133 = vst.msk [vmem:[#allocation5 + $0x68] sm:$0xff] %vm1119, %v1050
          %1134 = vst.msk [vmem:[#allocation5 + $0x70] sm:$0xff] %vm1119, %v1052
          %1135 = vst.msk [vmem:[#allocation5 + $0x78] sm:$0xff] %vm1119, %v1054
          %1136 = vst.msk [vmem:[#allocation5 + $0x80] sm:$0xff] %vm1119, %v1056
          %1137 = vst.msk [vmem:[#allocation5 + $0x88] sm:$0xff] %vm1119, %v1058
          %1138 = vst.msk [vmem:[#allocation5 + $0x90] sm:$0xff] %vm1119, %v1060
          %1139 = vst.msk [vmem:[#allocation5 + $0x98] sm:$0xff] %vm1119, %v1062
          %1140 = vst.msk [vmem:[#allocation5 + $0xa0] sm:$0xff] %vm1119, %v1064
          %1141 = vst.msk [vmem:[#allocation5 + $0xa8] sm:$0xff] %vm1119, %v1066
          %1142 = vst.msk [vmem:[#allocation5 + $0xb0] sm:$0xff] %vm1119, %v1068
          %1143 = vst.msk [vmem:[#allocation5 + $0xb8] sm:$0xff] %vm1119, %v1070
          %1144 = vst.msk [vmem:[#allocation5 + $0xc0] sm:$0xff] %vm1119, %v1072
          %1145 = vst.msk [vmem:[#allocation5 + $0xc8] sm:$0xff] %vm1119, %v1074
          %1146 = vst.msk [vmem:[#allocation5 + $0xd0] sm:$0xff] %vm1119, %v1076
          %1147 = vst.msk [vmem:[#allocation5 + $0xd8] sm:$0xff] %vm1119, %v1078
          %1148 = vst.msk [vmem:[#allocation5 + $0xe0] sm:$0xff] %vm1119, %v1080
          %1149 = vst.msk [vmem:[#allocation5 + $0xe8] sm:$0xff] %vm1119, %v1082
          %1150 = vst.msk [vmem:[#allocation5 + $0xf0] sm:$0xff] %vm1119, %v1084
          %1151 = vst.msk [vmem:[#allocation5 + $0xf8] sm:$0xff] %vm1119, %v1086
          %1154 = vrot.lane.b32.xlu0 %v198, 24
          %v1155 = vpop.permute.xlu0 %1154
          %1156 = vrot.lane.b32.xlu0 %v199, 24
          %v1157 = vpop.permute.xlu0 %1156
          %1158 = vrot.lane.b32.xlu0 %v201, 24
          %v1159 = vpop.permute.xlu0 %1158
          %1160 = vrot.lane.b32.xlu0 %v202, 24
          %v1161 = vpop.permute.xlu0 %1160
          %1162 = vrot.lane.b32.xlu0 %v204, 24
          %v1163 = vpop.permute.xlu0 %1162
          %1164 = vrot.lane.b32.xlu0 %v205, 24
          %v1165 = vpop.permute.xlu0 %1164
          %1166 = vrot.lane.b32.xlu0 %v207, 24
          %v1167 = vpop.permute.xlu0 %1166
          %1168 = vrot.lane.b32.xlu0 %v208, 24
          %v1169 = vpop.permute.xlu0 %1168
          %1170 = vrot.lane.b32.xlu0 %v210, 24
          %v1171 = vpop.permute.xlu0 %1170
          %1172 = vrot.lane.b32.xlu0 %v211, 24
          %v1173 = vpop.permute.xlu0 %1172
          %1174 = vrot.lane.b32.xlu0 %v213, 24
          %v1175 = vpop.permute.xlu0 %1174
          %1176 = vrot.lane.b32.xlu0 %v214, 24
          %v1177 = vpop.permute.xlu0 %1176
          %1178 = vrot.lane.b32.xlu0 %v216, 24
          %v1179 = vpop.permute.xlu0 %1178
          %1180 = vrot.lane.b32.xlu0 %v217, 24
          %v1181 = vpop.permute.xlu0 %1180
          %1182 = vrot.lane.b32.xlu0 %v219, 24
          %v1183 = vpop.permute.xlu0 %1182
          %1184 = vrot.lane.b32.xlu0 %v220, 24
          %v1185 = vpop.permute.xlu0 %1184
          %1186 = vrot.lane.b32.xlu0 %v222, 24
          %v1187 = vpop.permute.xlu0 %1186
          %1188 = vrot.lane.b32.xlu0 %v223, 24
          %v1189 = vpop.permute.xlu0 %1188
          %1190 = vrot.lane.b32.xlu0 %v225, 24
          %v1191 = vpop.permute.xlu0 %1190
          %1192 = vrot.lane.b32.xlu0 %v226, 24
          %v1193 = vpop.permute.xlu0 %1192
          %1194 = vrot.lane.b32.xlu0 %v228, 24
          %v1195 = vpop.permute.xlu0 %1194
          %1196 = vrot.lane.b32.xlu0 %v229, 24
          %v1197 = vpop.permute.xlu0 %1196
          %1198 = vrot.lane.b32.xlu0 %v231, 24
          %v1199 = vpop.permute.xlu0 %1198
          %1200 = vrot.lane.b32.xlu0 %v232, 24
          %v1201 = vpop.permute.xlu0 %1200
          %1202 = vrot.lane.b32.xlu0 %v234, 24
          %v1203 = vpop.permute.xlu0 %1202
          %1204 = vrot.lane.b32.xlu0 %v235, 24
          %v1205 = vpop.permute.xlu0 %1204
          %1206 = vrot.lane.b32.xlu0 %v237, 24
          %v1207 = vpop.permute.xlu0 %1206
          %1208 = vrot.lane.b32.xlu0 %v238, 24
          %v1209 = vpop.permute.xlu0 %1208
          %1210 = vrot.lane.b32.xlu0 %v240, 24
          %v1211 = vpop.permute.xlu0 %1210
          %1212 = vrot.lane.b32.xlu0 %v241, 24
          %v1213 = vpop.permute.xlu0 %1212
          %1214 = vrot.lane.b32.xlu0 %v243, 24
          %v1215 = vpop.permute.xlu0 %1214
          %1216 = vrot.lane.b32.xlu0 %v244, 24
          %v1217 = vpop.permute.xlu0 %1216
          %vm1250 = vcmask 228544
          %1251 = vst.msk [vmem:[#allocation5] sm:$0xff] %vm1250, %v1155
          %1252 = vst.msk [vmem:[#allocation5 + $0x8] sm:$0xff] %vm1250, %v1157
          %1253 = vst.msk [vmem:[#allocation5 + $0x10] sm:$0xff] %vm1250, %v1159
          %1254 = vst.msk [vmem:[#allocation5 + $0x18] sm:$0xff] %vm1250, %v1161
          %1255 = vst.msk [vmem:[#allocation5 + $0x20] sm:$0xff] %vm1250, %v1163
          %1256 = vst.msk [vmem:[#allocation5 + $0x28] sm:$0xff] %vm1250, %v1165
          %1257 = vst.msk [vmem:[#allocation5 + $0x30] sm:$0xff] %vm1250, %v1167
          %1258 = vst.msk [vmem:[#allocation5 + $0x38] sm:$0xff] %vm1250, %v1169
          %1259 = vst.msk [vmem:[#allocation5 + $0x40] sm:$0xff] %vm1250, %v1171
          %1260 = vst.msk [vmem:[#allocation5 + $0x48] sm:$0xff] %vm1250, %v1173
          %1261 = vst.msk [vmem:[#allocation5 + $0x50] sm:$0xff] %vm1250, %v1175
          %1262 = vst.msk [vmem:[#allocation5 + $0x58] sm:$0xff] %vm1250, %v1177
          %1263 = vst.msk [vmem:[#allocation5 + $0x60] sm:$0xff] %vm1250, %v1179
          %1264 = vst.msk [vmem:[#allocation5 + $0x68] sm:$0xff] %vm1250, %v1181
          %1265 = vst.msk [vmem:[#allocation5 + $0x70] sm:$0xff] %vm1250, %v1183
          %1266 = vst.msk [vmem:[#allocation5 + $0x78] sm:$0xff] %vm1250, %v1185
          %1267 = vst.msk [vmem:[#allocation5 + $0x80] sm:$0xff] %vm1250, %v1187
          %1268 = vst.msk [vmem:[#allocation5 + $0x88] sm:$0xff] %vm1250, %v1189
          %1269 = vst.msk [vmem:[#allocation5 + $0x90] sm:$0xff] %vm1250, %v1191
          %1270 = vst.msk [vmem:[#allocation5 + $0x98] sm:$0xff] %vm1250, %v1193
          %1271 = vst.msk [vmem:[#allocation5 + $0xa0] sm:$0xff] %vm1250, %v1195
          %1272 = vst.msk [vmem:[#allocation5 + $0xa8] sm:$0xff] %vm1250, %v1197
          %1273 = vst.msk [vmem:[#allocation5 + $0xb0] sm:$0xff] %vm1250, %v1199
          %1274 = vst.msk [vmem:[#allocation5 + $0xb8] sm:$0xff] %vm1250, %v1201
          %1275 = vst.msk [vmem:[#allocation5 + $0xc0] sm:$0xff] %vm1250, %v1203
          %1276 = vst.msk [vmem:[#allocation5 + $0xc8] sm:$0xff] %vm1250, %v1205
          %1277 = vst.msk [vmem:[#allocation5 + $0xd0] sm:$0xff] %vm1250, %v1207
          %1278 = vst.msk [vmem:[#allocation5 + $0xd8] sm:$0xff] %vm1250, %v1209
          %1279 = vst.msk [vmem:[#allocation5 + $0xe0] sm:$0xff] %vm1250, %v1211
          %1280 = vst.msk [vmem:[#allocation5 + $0xe8] sm:$0xff] %vm1250, %v1213
          %1281 = vst.msk [vmem:[#allocation5 + $0xf0] sm:$0xff] %vm1250, %v1215
          %1282 = vst.msk [vmem:[#allocation5 + $0xf8] sm:$0xff] %vm1250, %v1217
          %v1284 = vrot.slane %v243, 1
          %v1285 = vrot.slane %v244, 1
          %v1286 = vsel %vm332, %v1284, %v1285
          %v1287 = vrot.slane %v245, 1
          %v1288 = vsel %vm332, %v1285, %v1287
          %1289 = vrot.lane.b32.xlu0 %v345, 28
          %v1290 = vpop.permute.xlu0 %1289
          %1291 = vrot.lane.b32.xlu0 %v347, 28
          %v1292 = vpop.permute.xlu0 %1291
          %1293 = vrot.lane.b32.xlu0 %v350, 28
          %v1294 = vpop.permute.xlu0 %1293
          %1295 = vrot.lane.b32.xlu0 %v352, 28
          %v1296 = vpop.permute.xlu0 %1295
          %1297 = vrot.lane.b32.xlu0 %v355, 28
          %v1298 = vpop.permute.xlu0 %1297
          %1299 = vrot.lane.b32.xlu0 %v357, 28
          %v1300 = vpop.permute.xlu0 %1299
          %1301 = vrot.lane.b32.xlu0 %v360, 28
          %v1302 = vpop.permute.xlu0 %1301
          %1303 = vrot.lane.b32.xlu0 %v362, 28
          %v1304 = vpop.permute.xlu0 %1303
          %1305 = vrot.lane.b32.xlu0 %v365, 28
          %v1306 = vpop.permute.xlu0 %1305
          %1307 = vrot.lane.b32.xlu0 %v367, 28
          %v1308 = vpop.permute.xlu0 %1307
          %1309 = vrot.lane.b32.xlu0 %v370, 28
          %v1310 = vpop.permute.xlu0 %1309
          %1311 = vrot.lane.b32.xlu0 %v372, 28
          %v1312 = vpop.permute.xlu0 %1311
          %1313 = vrot.lane.b32.xlu0 %v375, 28
          %v1314 = vpop.permute.xlu0 %1313
          %1315 = vrot.lane.b32.xlu0 %v377, 28
          %v1316 = vpop.permute.xlu0 %1315
          %1317 = vrot.lane.b32.xlu0 %v380, 28
          %v1318 = vpop.permute.xlu0 %1317
          %1319 = vrot.lane.b32.xlu0 %v382, 28
          %v1320 = vpop.permute.xlu0 %1319
          %1321 = vrot.lane.b32.xlu0 %v385, 28
          %v1322 = vpop.permute.xlu0 %1321
          %1323 = vrot.lane.b32.xlu0 %v387, 28
          %v1324 = vpop.permute.xlu0 %1323
          %1325 = vrot.lane.b32.xlu0 %v390, 28
          %v1326 = vpop.permute.xlu0 %1325
          %1327 = vrot.lane.b32.xlu0 %v392, 28
          %v1328 = vpop.permute.xlu0 %1327
          %1329 = vrot.lane.b32.xlu0 %v395, 28
          %v1330 = vpop.permute.xlu0 %1329
          %1331 = vrot.lane.b32.xlu0 %v397, 28
          %v1332 = vpop.permute.xlu0 %1331
          %1333 = vrot.lane.b32.xlu0 %v400, 28
          %v1334 = vpop.permute.xlu0 %1333
          %1335 = vrot.lane.b32.xlu0 %v402, 28
          %v1336 = vpop.permute.xlu0 %1335
          %1337 = vrot.lane.b32.xlu0 %v405, 28
          %v1338 = vpop.permute.xlu0 %1337
          %1339 = vrot.lane.b32.xlu0 %v407, 28
          %v1340 = vpop.permute.xlu0 %1339
          %1341 = vrot.lane.b32.xlu0 %v410, 28
          %v1342 = vpop.permute.xlu0 %1341
          %1343 = vrot.lane.b32.xlu0 %v412, 28
          %v1344 = vpop.permute.xlu0 %1343
          %1345 = vrot.lane.b32.xlu0 %v886, 28
          %v1346 = vpop.permute.xlu0 %1345
          %1347 = vrot.lane.b32.xlu0 %v888, 28
          %v1348 = vpop.permute.xlu0 %1347
          %1349 = vrot.lane.b32.xlu0 %v1286, 28
          %v1350 = vpop.permute.xlu0 %1349
          %1351 = vrot.lane.b32.xlu0 %v1288, 28
          %v1352 = vpop.permute.xlu0 %1351
          %vm1385 = vcmask 261344
          %1386 = vst.msk [vmem:[#allocation5] sm:$0xff] %vm1385, %v1290
          %1387 = vst.msk [vmem:[#allocation5 + $0x8] sm:$0xff] %vm1385, %v1292
          %1388 = vst.msk [vmem:[#allocation5 + $0x10] sm:$0xff] %vm1385, %v1294
          %1389 = vst.msk [vmem:[#allocation5 + $0x18] sm:$0xff] %vm1385, %v1296
          %1390 = vst.msk [vmem:[#allocation5 + $0x20] sm:$0xff] %vm1385, %v1298
          %1391 = vst.msk [vmem:[#allocation5 + $0x28] sm:$0xff] %vm1385, %v1300
          %1392 = vst.msk [vmem:[#allocation5 + $0x30] sm:$0xff] %vm1385, %v1302
          %1393 = vst.msk [vmem:[#allocation5 + $0x38] sm:$0xff] %vm1385, %v1304
          %1394 = vst.msk [vmem:[#allocation5 + $0x40] sm:$0xff] %vm1385, %v1306
          %1395 = vst.msk [vmem:[#allocation5 + $0x48] sm:$0xff] %vm1385, %v1308
          %1396 = vst.msk [vmem:[#allocation5 + $0x50] sm:$0xff] %vm1385, %v1310
          %1397 = vst.msk [vmem:[#allocation5 + $0x58] sm:$0xff] %vm1385, %v1312
          %1398 = vst.msk [vmem:[#allocation5 + $0x60] sm:$0xff] %vm1385, %v1314
          %1399 = vst.msk [vmem:[#allocation5 + $0x68] sm:$0xff] %vm1385, %v1316
          %1400 = vst.msk [vmem:[#allocation5 + $0x70] sm:$0xff] %vm1385, %v1318
          %1401 = vst.msk [vmem:[#allocation5 + $0x78] sm:$0xff] %vm1385, %v1320
          %1402 = vst.msk [vmem:[#allocation5 + $0x80] sm:$0xff] %vm1385, %v1322
          %1403 = vst.msk [vmem:[#allocation5 + $0x88] sm:$0xff] %vm1385, %v1324
          %1404 = vst.msk [vmem:[#allocation5 + $0x90] sm:$0xff] %vm1385, %v1326
          %1405 = vst.msk [vmem:[#allocation5 + $0x98] sm:$0xff] %vm1385, %v1328
          %1406 = vst.msk [vmem:[#allocation5 + $0xa0] sm:$0xff] %vm1385, %v1330
          %1407 = vst.msk [vmem:[#allocation5 + $0xa8] sm:$0xff] %vm1385, %v1332
          %1408 = vst.msk [vmem:[#allocation5 + $0xb0] sm:$0xff] %vm1385, %v1334
          %1409 = vst.msk [vmem:[#allocation5 + $0xb8] sm:$0xff] %vm1385, %v1336
          %1410 = vst.msk [vmem:[#allocation5 + $0xc0] sm:$0xff] %vm1385, %v1338
          %1411 = vst.msk [vmem:[#allocation5 + $0xc8] sm:$0xff] %vm1385, %v1340
          %1412 = vst.msk [vmem:[#allocation5 + $0xd0] sm:$0xff] %vm1385, %v1342
          %1413 = vst.msk [vmem:[#allocation5 + $0xd8] sm:$0xff] %vm1385, %v1344
          %1414 = vst.msk [vmem:[#allocation5 + $0xe0] sm:$0xff] %vm1385, %v1346
          %1415 = vst.msk [vmem:[#allocation5 + $0xe8] sm:$0xff] %vm1385, %v1348
          %1416 = vst.msk [vmem:[#allocation5 + $0xf0] sm:$0xff] %vm1385, %v1350
          %1417 = vst.msk [vmem:[#allocation5 + $0xf8] sm:$0xff] %vm1385, %v1352
          %v1418 = vrot.slane %v243, 2
          %v1419 = vrot.slane %v244, 2
          %v1420 = vsel %vm542, %v1418, %v1419
          %v1421 = vrot.slane %v245, 2
          %v1422 = vsel %vm542, %v1419, %v1421
          %1423 = vrot.lane.b32.xlu0 %v555, 32
          %v1424 = vpop.permute.xlu0 %1423
          %1425 = vrot.lane.b32.xlu0 %v557, 32
          %v1426 = vpop.permute.xlu0 %1425
          %1427 = vrot.lane.b32.xlu0 %v560, 32
          %v1428 = vpop.permute.xlu0 %1427
          %1429 = vrot.lane.b32.xlu0 %v562, 32
          %v1430 = vpop.permute.xlu0 %1429
          %1431 = vrot.lane.b32.xlu0 %v565, 32
          %v1432 = vpop.permute.xlu0 %1431
          %1433 = vrot.lane.b32.xlu0 %v567, 32
          %v1434 = vpop.permute.xlu0 %1433
          %1435 = vrot.lane.b32.xlu0 %v570, 32
          %v1436 = vpop.permute.xlu0 %1435
          %1437 = vrot.lane.b32.xlu0 %v572, 32
          %v1438 = vpop.permute.xlu0 %1437
          %1439 = vrot.lane.b32.xlu0 %v575, 32
          %v1440 = vpop.permute.xlu0 %1439
          %1441 = vrot.lane.b32.xlu0 %v577, 32
          %v1442 = vpop.permute.xlu0 %1441
          %1443 = vrot.lane.b32.xlu0 %v580, 32
          %v1444 = vpop.permute.xlu0 %1443
          %1445 = vrot.lane.b32.xlu0 %v582, 32
          %v1446 = vpop.permute.xlu0 %1445
          %1447 = vrot.lane.b32.xlu0 %v585, 32
          %v1448 = vpop.permute.xlu0 %1447
          %1449 = vrot.lane.b32.xlu0 %v587, 32
          %v1450 = vpop.permute.xlu0 %1449
          %1451 = vrot.lane.b32.xlu0 %v590, 32
          %v1452 = vpop.permute.xlu0 %1451
          %1453 = vrot.lane.b32.xlu0 %v592, 32
          %v1454 = vpop.permute.xlu0 %1453
          %1455 = vrot.lane.b32.xlu0 %v595, 32
          %v1456 = vpop.permute.xlu0 %1455
          %1457 = vrot.lane.b32.xlu0 %v597, 32
          %v1458 = vpop.permute.xlu0 %1457
          %1459 = vrot.lane.b32.xlu0 %v600, 32
          %v1460 = vpop.permute.xlu0 %1459
          %1461 = vrot.lane.b32.xlu0 %v602, 32
          %v1462 = vpop.permute.xlu0 %1461
          %1463 = vrot.lane.b32.xlu0 %v605, 32
          %v1464 = vpop.permute.xlu0 %1463
          %1465 = vrot.lane.b32.xlu0 %v607, 32
          %v1466 = vpop.permute.xlu0 %1465
          %1467 = vrot.lane.b32.xlu0 %v610, 32
          %v1468 = vpop.permute.xlu0 %1467
          %1469 = vrot.lane.b32.xlu0 %v612, 32
          %v1470 = vpop.permute.xlu0 %1469
          %1471 = vrot.lane.b32.xlu0 %v615, 32
          %v1472 = vpop.permute.xlu0 %1471
          %1473 = vrot.lane.b32.xlu0 %v617, 32
          %v1474 = vpop.permute.xlu0 %1473
          %1475 = vrot.lane.b32.xlu0 %v620, 32
          %v1476 = vpop.permute.xlu0 %1475
          %1477 = vrot.lane.b32.xlu0 %v622, 32
          %v1478 = vpop.permute.xlu0 %1477
          %1479 = vrot.lane.b32.xlu0 %v1020, 32
          %v1480 = vpop.permute.xlu0 %1479
          %1481 = vrot.lane.b32.xlu0 %v1022, 32
          %v1482 = vpop.permute.xlu0 %1481
          %1483 = vrot.lane.b32.xlu0 %v1420, 32
          %v1484 = vpop.permute.xlu0 %1483
          %1485 = vrot.lane.b32.xlu0 %v1422, 32
          %v1486 = vpop.permute.xlu0 %1485
          %vm1519 = vcmask 294144
          %1520 = vst.msk [vmem:[#allocation5] sm:$0xff] %vm1519, %v1424
          %1521 = vst.msk [vmem:[#allocation5 + $0x8] sm:$0xff] %vm1519, %v1426
          %1522 = vst.msk [vmem:[#allocation5 + $0x10] sm:$0xff] %vm1519, %v1428
          %1523 = vst.msk [vmem:[#allocation5 + $0x18] sm:$0xff] %vm1519, %v1430
          %1524 = vst.msk [vmem:[#allocation5 + $0x20] sm:$0xff] %vm1519, %v1432
          %1525 = vst.msk [vmem:[#allocation5 + $0x28] sm:$0xff] %vm1519, %v1434
          %1526 = vst.msk [vmem:[#allocation5 + $0x30] sm:$0xff] %vm1519, %v1436
          %1527 = vst.msk [vmem:[#allocation5 + $0x38] sm:$0xff] %vm1519, %v1438
          %1528 = vst.msk [vmem:[#allocation5 + $0x40] sm:$0xff] %vm1519, %v1440
          %1529 = vst.msk [vmem:[#allocation5 + $0x48] sm:$0xff] %vm1519, %v1442
          %1530 = vst.msk [vmem:[#allocation5 + $0x50] sm:$0xff] %vm1519, %v1444
          %1531 = vst.msk [vmem:[#allocation5 + $0x58] sm:$0xff] %vm1519, %v1446
          %1532 = vst.msk [vmem:[#allocation5 + $0x60] sm:$0xff] %vm1519, %v1448
          %1533 = vst.msk [vmem:[#allocation5 + $0x68] sm:$0xff] %vm1519, %v1450
          %1534 = vst.msk [vmem:[#allocation5 + $0x70] sm:$0xff] %vm1519, %v1452
          %1535 = vst.msk [vmem:[#allocation5 + $0x78] sm:$0xff] %vm1519, %v1454
          %1536 = vst.msk [vmem:[#allocation5 + $0x80] sm:$0xff] %vm1519, %v1456
          %1537 = vst.msk [vmem:[#allocation5 + $0x88] sm:$0xff] %vm1519, %v1458
          %1538 = vst.msk [vmem:[#allocation5 + $0x90] sm:$0xff] %vm1519, %v1460
          %1539 = vst.msk [vmem:[#allocation5 + $0x98] sm:$0xff] %vm1519, %v1462
          %1540 = vst.msk [vmem:[#allocation5 + $0xa0] sm:$0xff] %vm1519, %v1464
          %1541 = vst.msk [vmem:[#allocation5 + $0xa8] sm:$0xff] %vm1519, %v1466
          %1542 = vst.msk [vmem:[#allocation5 + $0xb0] sm:$0xff] %vm1519, %v1468
          %1543 = vst.msk [vmem:[#allocation5 + $0xb8] sm:$0xff] %vm1519, %v1470
          %1544 = vst.msk [vmem:[#allocation5 + $0xc0] sm:$0xff] %vm1519, %v1472
          %1545 = vst.msk [vmem:[#allocation5 + $0xc8] sm:$0xff] %vm1519, %v1474
          %1546 = vst.msk [vmem:[#allocation5 + $0xd0] sm:$0xff] %vm1519, %v1476
          %1547 = vst.msk [vmem:[#allocation5 + $0xd8] sm:$0xff] %vm1519, %v1478
          %1548 = vst.msk [vmem:[#allocation5 + $0xe0] sm:$0xff] %vm1519, %v1480
          %1549 = vst.msk [vmem:[#allocation5 + $0xe8] sm:$0xff] %vm1519, %v1482
          %1550 = vst.msk [vmem:[#allocation5 + $0xf0] sm:$0xff] %vm1519, %v1484
          %1551 = vst.msk [vmem:[#allocation5 + $0xf8] sm:$0xff] %vm1519, %v1486
          %v1552 = vld [vmem:[#allocation5] sm:$0xff]
          %v1553 = vld [vmem:[#allocation5 + $0x8] sm:$0xff]
          %v1554 = vld [vmem:[#allocation5 + $0x10] sm:$0xff]
          %v1555 = vld [vmem:[#allocation5 + $0x18] sm:$0xff]
          %v1556 = vld [vmem:[#allocation5 + $0x20] sm:$0xff]
          %v1557 = vld [vmem:[#allocation5 + $0x28] sm:$0xff]
          %v1558 = vld [vmem:[#allocation5 + $0x30] sm:$0xff]
          %v1559 = vld [vmem:[#allocation5 + $0x38] sm:$0xff]
          %v1560 = vld [vmem:[#allocation5 + $0x40] sm:$0xff]
          %v1561 = vld [vmem:[#allocation5 + $0x48] sm:$0xff]
          %v1562 = vld [vmem:[#allocation5 + $0x50] sm:$0xff]
          %v1563 = vld [vmem:[#allocation5 + $0x58] sm:$0xff]
          %v1564 = vld [vmem:[#allocation5 + $0x60] sm:$0xff]
          %v1565 = vld [vmem:[#allocation5 + $0x68] sm:$0xff]
          %v1566 = vld [vmem:[#allocation5 + $0x70] sm:$0xff]
          %v1567 = vld [vmem:[#allocation5 + $0x78] sm:$0xff]
          %v1568 = vld [vmem:[#allocation5 + $0x80] sm:$0xff]
          %v1569 = vld [vmem:[#allocation5 + $0x88] sm:$0xff]
          %v1570 = vld [vmem:[#allocation5 + $0x90] sm:$0xff]
          %v1571 = vld [vmem:[#allocation5 + $0x98] sm:$0xff]
          %v1572 = vld [vmem:[#allocation5 + $0xa0] sm:$0xff]
          %v1573 = vld [vmem:[#allocation5 + $0xa8] sm:$0xff]
          %v1574 = vld [vmem:[#allocation5 + $0xb0] sm:$0xff]
          %v1575 = vld [vmem:[#allocation5 + $0xb8] sm:$0xff]
          %v1576 = vld [vmem:[#allocation5 + $0xc0] sm:$0xff]
          %v1577 = vld [vmem:[#allocation5 + $0xc8] sm:$0xff]
          %v1578 = vld [vmem:[#allocation5 + $0xd0] sm:$0xff]
          %v1579 = vld [vmem:[#allocation5 + $0xd8] sm:$0xff]
          %v1580 = vld [vmem:[#allocation5 + $0xe0] sm:$0xff]
          %v1581 = vld [vmem:[#allocation5 + $0xe8] sm:$0xff]
          %v1582 = vld [vmem:[#allocation5 + $0xf0] sm:$0xff]
          %v1583 = vld [vmem:[#allocation5 + $0xf8] sm:$0xff]
          %vm1584 = vcmask 293888
          %v1586 = vsel %vm1584, %v1552, 0
          %v1589 = vsel %vm1584, %v1553, 0
          %v1592 = vsel %vm1584, %v1554, 0
          %v1595 = vsel %vm1584, %v1555, 0
          %v1598 = vsel %vm1584, %v1556, 0
          %v1601 = vsel %vm1584, %v1557, 0
          %v1604 = vsel %vm1584, %v1558, 0
          %v1607 = vsel %vm1584, %v1559, 0
          %v1610 = vsel %vm1584, %v1560, 0
          %v1613 = vsel %vm1584, %v1561, 0
          %v1616 = vsel %vm1584, %v1562, 0
          %v1619 = vsel %vm1584, %v1563, 0
          %v1622 = vsel %vm1584, %v1564, 0
          %v1625 = vsel %vm1584, %v1565, 0
          %v1628 = vsel %vm1584, %v1566, 0
          %v1631 = vsel %vm1584, %v1567, 0
          %v1634 = vsel %vm1584, %v1568, 0
          %v1637 = vsel %vm1584, %v1569, 0
          %v1640 = vsel %vm1584, %v1570, 0
          %v1643 = vsel %vm1584, %v1571, 0
          %v1646 = vsel %vm1584, %v1572, 0
          %v1649 = vsel %vm1584, %v1573, 0
          %v1652 = vsel %vm1584, %v1574, 0
          %v1655 = vsel %vm1584, %v1575, 0
          %v1658 = vsel %vm1584, %v1576, 0
          %v1661 = vsel %vm1584, %v1577, 0
          %v1664 = vsel %vm1584, %v1578, 0
          %v1667 = vsel %vm1584, %v1579, 0
          %v1670 = vsel %vm1584, %v1580, 0
          %v1673 = vsel %vm1584, %v1581, 0
          %v1676 = vsel %vm1584, %v1582, 0
          %v1679 = vsel %vm1584, %v1583, 0
          %vm1681 = vcmask 1043456
          %v1683 = vsel %vm1681, %v250, 0
          %1685 = vmatprep.subr.mxu0 0.0
          %1686 = vmatpush1.msra.mxu0 %v246
          %1687 = vmatprep.subr.mxu0 0.0
          %1688 = vmatpush1.msra.mxu0 %v247
          %1689 = vmatprep.subr.mxu0 0.0
          %1690 = vmatpush1.msra.mxu0 %v248
          %1691 = vmatprep.subr.mxu0 0.0
          %1692 = vmatpush1.msra.mxu0 %v249
          %1693 = vmatprep.subr.mxu0 0.0
          %1694 = vmatpush1.msra.mxu0 %v1683
          %1695 = vmatprep.subr.mxu0 0.0
          %1696 = vmatpush1.msra.mxu0 0.0
          %1697 = vmatprep.subr.mxu0 0.0
          %1698 = vmatpush1.msra.mxu0 0.0
          %1699 = vmatprep.subr.mxu0 0.0
          %1700 = vmatpush1.msra.mxu0 0.0
          %1701 = vmatprep.subr.mxu0 0.0
          %1702 = vmatpush1.msra.mxu0 0.0
          %1703 = vmatprep.subr.mxu0 0.0
          %1704 = vmatpush1.msra.mxu0 0.0
          %1705 = vmatprep.subr.mxu0 0.0
          %1706 = vmatpush1.msra.mxu0 0.0
          %1707 = vmatprep.subr.mxu0 0.0
          %1708 = vmatpush1.msra.mxu0 0.0
          %1709 = vmatprep.subr.mxu0 0.0
          %1710 = vmatpush1.msra.mxu0 0.0
          %1711 = vmatprep.subr.mxu0 0.0
          %1712 = vmatpush1.msra.mxu0 0.0
          %1713 = vmatprep.subr.mxu0 0.0
          %1714 = vmatpush1.msra.mxu0 0.0
          %1715 = vmatprep.subr.mxu0 0.0
          %1716 = vmatpush1.msra.mxu0 0.0
          %1717 = vmatprep.subr.mxu0 0.0
          %1718 = vmatpush1.msra.mxu0 0.0
          %1719 = vmatprep.subr.mxu0 0.0
          %1720 = vmatpush1.msra.mxu0 0.0
          %1721 = vmatprep.subr.mxu0 0.0
          %1722 = vmatpush1.msra.mxu0 0.0
          %1723 = vmatprep.subr.mxu0 0.0
          %1724 = vmatpush1.msra.mxu0 0.0
          %1725 = vmatprep.subr.mxu0 0.0
          %1726 = vmatpush1.msra.mxu0 0.0
          %1727 = vmatprep.subr.mxu0 0.0
          %1728 = vmatpush1.msra.mxu0 0.0
          %1729 = vmatprep.subr.mxu0 0.0
          %1730 = vmatpush1.msra.mxu0 0.0
          %1731 = vmatprep.subr.mxu0 0.0
          %1732 = vmatpush1.msra.mxu0 0.0
          %1733 = vmatprep.subr.mxu0 0.0
          %1734 = vmatpush1.msra.mxu0 0.0
          %1735 = vmatprep.subr.mxu0 0.0
          %1736 = vmatpush1.msra.mxu0 0.0
          %1737 = vmatprep.subr.mxu0 0.0
          %1738 = vmatpush1.msra.mxu0 0.0
          %1739 = vmatprep.subr.mxu0 0.0
          %1740 = vmatpush1.msra.mxu0 0.0
          %1741 = vmatprep.subr.mxu0 0.0
          %1742 = vmatpush1.msra.mxu0 0.0
          %1743 = vmatprep.subr.mxu0 0.0
          %1744 = vmatpush1.msra.mxu0 0.0
          %1745 = vmatprep.subr.mxu0 0.0
          %1746 = vmatpush1.msra.mxu0 0.0
          %1747 = vmatprep.subr.mxu0 0.0
          %1748 = vmatpush1.msra.mxu0 0.0
          %1749 = vmatprep.mubr.f32.mxu0 0.0
          %1750 = vmatmul.mubr.f32.gmra.mrb[0].mxu0 %v1586
          %v1751 = vpop.f32.mrb[0].mxu0
          %v1752 = vadd.f32 0.0, %v1751
          %v1753 = vpop.f32.mrb[0].mxu0
          %1754 = vmatprep.mubr.f32.mxu0 0.0
          %1755 = vmatmul.mubr.f32.gmra.mrb[0].mxu0 %v1589
          %v1756 = vpop.f32.mrb[0].mxu0
          %v1757 = vadd.f32 0.0, %v1756
          %v1758 = vpop.f32.mrb[0].mxu0
          %1759 = vmatprep.mubr.f32.mxu0 0.0
          %1760 = vmatmul.mubr.f32.gmra.mrb[0].mxu0 %v1592
          %v1761 = vpop.f32.mrb[0].mxu0
          %v1762 = vadd.f32 0.0, %v1761
          %v1763 = vpop.f32.mrb[0].mxu0
          %1764 = vmatprep.mubr.f32.mxu0 0.0
          %1765 = vmatmul.mubr.f32.gmra.mrb[0].mxu0 %v1595
          %v1766 = vpop.f32.mrb[0].mxu0
          %v1767 = vadd.f32 0.0, %v1766
          %v1768 = vpop.f32.mrb[0].mxu0
          %1769 = vmatprep.mubr.f32.mxu0 0.0
          %1770 = vmatmul.mubr.f32.gmra.mrb[0].mxu0 %v1598
          %v1771 = vpop.f32.mrb[0].mxu0
          %v1772 = vadd.f32 0.0, %v1771
          %v1773 = vpop.f32.mrb[0].mxu0
          %1774 = vmatprep.mubr.f32.mxu0 0.0
          %1775 = vmatmul.mubr.f32.gmra.mrb[0].mxu0 %v1601
          %v1776 = vpop.f32.mrb[0].mxu0
          %v1777 = vadd.f32 0.0, %v1776
          %v1778 = vpop.f32.mrb[0].mxu0
          %1779 = vmatprep.mubr.f32.mxu0 0.0
          %1780 = vmatmul.mubr.f32.gmra.mrb[0].mxu0 %v1604
          %v1781 = vpop.f32.mrb[0].mxu0
          %v1782 = vadd.f32 0.0, %v1781
          %v1783 = vpop.f32.mrb[0].mxu0
          %1784 = vmatprep.mubr.f32.mxu0 0.0
          %1785 = vmatmul.mubr.f32.gmra.mrb[0].mxu0 %v1607
          %v1786 = vpop.f32.mrb[0].mxu0
          %v1787 = vadd.f32 0.0, %v1786
          %v1788 = vpop.f32.mrb[0].mxu0
          %1789 = vmatprep.mubr.f32.mxu0 0.0
          %1790 = vmatmul.mubr.f32.gmra.mrb[0].mxu0 %v1610
          %v1791 = vpop.f32.mrb[0].mxu0
          %v1792 = vadd.f32 0.0, %v1791
          %v1793 = vpop.f32.mrb[0].mxu0
          %1794 = vmatprep.mubr.f32.mxu0 0.0
          %1795 = vmatmul.mubr.f32.gmra.mrb[0].mxu0 %v1613
          %v1796 = vpop.f32.mrb[0].mxu0
          %v1797 = vadd.f32 0.0, %v1796
          %v1798 = vpop.f32.mrb[0].mxu0
          %1799 = vmatprep.mubr.f32.mxu0 0.0
          %1800 = vmatmul.mubr.f32.gmra.mrb[0].mxu0 %v1616
          %v1801 = vpop.f32.mrb[0].mxu0
          %v1802 = vadd.f32 0.0, %v1801
          %v1803 = vpop.f32.mrb[0].mxu0
          %1804 = vmatprep.mubr.f32.mxu0 0.0
          %1805 = vmatmul.mubr.f32.gmra.mrb[0].mxu0 %v1619
          %v1806 = vpop.f32.mrb[0].mxu0
          %v1807 = vadd.f32 0.0, %v1806
          %v1808 = vpop.f32.mrb[0].mxu0
          %1809 = vmatprep.mubr.f32.mxu0 0.0
          %1810 = vmatmul.mubr.f32.gmra.mrb[0].mxu0 %v1622
          %v1811 = vpop.f32.mrb[0].mxu0
          %v1812 = vadd.f32 0.0, %v1811
          %v1813 = vpop.f32.mrb[0].mxu0
          %1814 = vmatprep.mubr.f32.mxu0 0.0
          %1815 = vmatmul.mubr.f32.gmra.mrb[0].mxu0 %v1625
          %v1816 = vpop.f32.mrb[0].mxu0
          %v1817 = vadd.f32 0.0, %v1816
          %v1818 = vpop.f32.mrb[0].mxu0
          %1819 = vmatprep.mubr.f32.mxu0 0.0
          %1820 = vmatmul.mubr.f32.gmra.mrb[0].mxu0 %v1628
          %v1821 = vpop.f32.mrb[0].mxu0
          %v1822 = vadd.f32 0.0, %v1821
          %v1823 = vpop.f32.mrb[0].mxu0
          %1824 = vmatprep.mubr.f32.mxu0 0.0
          %1825 = vmatmul.mubr.f32.gmra.mrb[0].mxu0 %v1631
          %v1826 = vpop.f32.mrb[0].mxu0
          %v1827 = vadd.f32 0.0, %v1826
          %v1828 = vpop.f32.mrb[0].mxu0
          %1829 = vmatprep.mubr.f32.mxu0 0.0
          %1830 = vmatmul.mubr.f32.gmra.mrb[0].mxu0 %v1634
          %v1831 = vpop.f32.mrb[0].mxu0
          %v1832 = vadd.f32 0.0, %v1831
          %v1833 = vpop.f32.mrb[0].mxu0
          %1834 = vmatprep.mubr.f32.mxu0 0.0
          %1835 = vmatmul.mubr.f32.gmra.mrb[0].mxu0 %v1637
          %v1836 = vpop.f32.mrb[0].mxu0
          %v1837 = vadd.f32 0.0, %v1836
          %v1838 = vpop.f32.mrb[0].mxu0
          %1839 = vmatprep.mubr.f32.mxu0 0.0
          %1840 = vmatmul.mubr.f32.gmra.mrb[0].mxu0 %v1640
          %v1841 = vpop.f32.mrb[0].mxu0
          %v1842 = vadd.f32 0.0, %v1841
          %v1843 = vpop.f32.mrb[0].mxu0
          %1844 = vmatprep.mubr.f32.mxu0 0.0
          %1845 = vmatmul.mubr.f32.gmra.mrb[0].mxu0 %v1643
          %v1846 = vpop.f32.mrb[0].mxu0
          %v1847 = vadd.f32 0.0, %v1846
          %v1848 = vpop.f32.mrb[0].mxu0
          %1849 = vmatprep.mubr.f32.mxu0 0.0
          %1850 = vmatmul.mubr.f32.gmra.mrb[0].mxu0 %v1646
          %v1851 = vpop.f32.mrb[0].mxu0
          %v1852 = vadd.f32 0.0, %v1851
          %v1853 = vpop.f32.mrb[0].mxu0
          %1854 = vmatprep.mubr.f32.mxu0 0.0
          %1855 = vmatmul.mubr.f32.gmra.mrb[0].mxu0 %v1649
          %v1856 = vpop.f32.mrb[0].mxu0
          %v1857 = vadd.f32 0.0, %v1856
          %v1858 = vpop.f32.mrb[0].mxu0
          %1859 = vmatprep.mubr.f32.mxu0 0.0
          %1860 = vmatmul.mubr.f32.gmra.mrb[0].mxu0 %v1652
          %v1861 = vpop.f32.mrb[0].mxu0
          %v1862 = vadd.f32 0.0, %v1861
          %v1863 = vpop.f32.mrb[0].mxu0
          %1864 = vmatprep.mubr.f32.mxu0 0.0
          %1865 = vmatmul.mubr.f32.gmra.mrb[0].mxu0 %v1655
          %v1866 = vpop.f32.mrb[0].mxu0
          %v1867 = vadd.f32 0.0, %v1866
          %v1868 = vpop.f32.mrb[0].mxu0
          %1869 = vmatprep.mubr.f32.mxu0 0.0
          %1870 = vmatmul.mubr.f32.gmra.mrb[0].mxu0 %v1658
          %v1871 = vpop.f32.mrb[0].mxu0
          %v1872 = vadd.f32 0.0, %v1871
          %v1873 = vpop.f32.mrb[0].mxu0
          %1874 = vmatprep.mubr.f32.mxu0 0.0
          %1875 = vmatmul.mubr.f32.gmra.mrb[0].mxu0 %v1661
          %v1876 = vpop.f32.mrb[0].mxu0
          %v1877 = vadd.f32 0.0, %v1876
          %v1878 = vpop.f32.mrb[0].mxu0
          %1879 = vmatprep.mubr.f32.mxu0 0.0
          %1880 = vmatmul.mubr.f32.gmra.mrb[0].mxu0 %v1664
          %v1881 = vpop.f32.mrb[0].mxu0
          %v1882 = vadd.f32 0.0, %v1881
          %v1883 = vpop.f32.mrb[0].mxu0
          %1884 = vmatprep.mubr.f32.mxu0 0.0
          %1885 = vmatmul.mubr.f32.gmra.mrb[0].mxu0 %v1667
          %v1886 = vpop.f32.mrb[0].mxu0
          %v1887 = vadd.f32 0.0, %v1886
          %v1888 = vpop.f32.mrb[0].mxu0
          %1889 = vmatprep.mubr.f32.mxu0 0.0
          %1890 = vmatmul.mubr.f32.gmra.mrb[0].mxu0 %v1670
          %v1891 = vpop.f32.mrb[0].mxu0
          %v1892 = vadd.f32 0.0, %v1891
          %v1893 = vpop.f32.mrb[0].mxu0
          %1894 = vmatprep.mubr.f32.mxu0 0.0
          %1895 = vmatmul.mubr.f32.gmra.mrb[0].mxu0 %v1673
          %v1896 = vpop.f32.mrb[0].mxu0
          %v1897 = vadd.f32 0.0, %v1896
          %v1898 = vpop.f32.mrb[0].mxu0
          %1899 = vmatprep.mubr.f32.mxu0 0.0
          %1900 = vmatmul.mubr.f32.gmra.mrb[0].mxu0 %v1676
          %v1901 = vpop.f32.mrb[0].mxu0
          %v1902 = vadd.f32 0.0, %v1901
          %v1903 = vpop.f32.mrb[0].mxu0
          %1904 = vmatprep.mubr.f32.mxu0 0.0
          %1905 = vmatmul.mubr.f32.gmra.mrb[0].mxu0 %v1679
          %v1906 = vpop.f32.mrb[0].mxu0
          %v1907 = vadd.f32 0.0, %v1906
          %v1908 = vpop.f32.mrb[0].mxu0
          %1909 = vdwg.mxu0
          %s1910 = smul.u32 %s22, 256
          %s1911 = scalar_lea.vmem [#allocation2], %s1910
          %1912 = vst.msk [vmem:[%s1911] sm:$0xff] %vm251, %v1752
          %1913 = vst.msk [vmem:[%s1911 + $0x8] sm:$0xff] %vm251, %v1757
          %1914 = vst.msk [vmem:[%s1911 + $0x10] sm:$0xff] %vm251, %v1762
          %1915 = vst.msk [vmem:[%s1911 + $0x18] sm:$0xff] %vm251, %v1767
          %1916 = vst.msk [vmem:[%s1911 + $0x20] sm:$0xff] %vm251, %v1772
          %1917 = vst.msk [vmem:[%s1911 + $0x28] sm:$0xff] %vm251, %v1777
          %1918 = vst.msk [vmem:[%s1911 + $0x30] sm:$0xff] %vm251, %v1782
          %1919 = vst.msk [vmem:[%s1911 + $0x38] sm:$0xff] %vm251, %v1787
          %1920 = vst.msk [vmem:[%s1911 + $0x40] sm:$0xff] %vm251, %v1792
          %1921 = vst.msk [vmem:[%s1911 + $0x48] sm:$0xff] %vm251, %v1797
          %1922 = vst.msk [vmem:[%s1911 + $0x50] sm:$0xff] %vm251, %v1802
          %1923 = vst.msk [vmem:[%s1911 + $0x58] sm:$0xff] %vm251, %v1807
          %1924 = vst.msk [vmem:[%s1911 + $0x60] sm:$0xff] %vm251, %v1812
          %1925 = vst.msk [vmem:[%s1911 + $0x68] sm:$0xff] %vm251, %v1817
          %1926 = vst.msk [vmem:[%s1911 + $0x70] sm:$0xff] %vm251, %v1822
          %1927 = vst.msk [vmem:[%s1911 + $0x78] sm:$0xff] %vm251, %v1827
          %1928 = vst.msk [vmem:[%s1911 + $0x80] sm:$0xff] %vm251, %v1832
          %1929 = vst.msk [vmem:[%s1911 + $0x88] sm:$0xff] %vm251, %v1837
          %1930 = vst.msk [vmem:[%s1911 + $0x90] sm:$0xff] %vm251, %v1842
          %1931 = vst.msk [vmem:[%s1911 + $0x98] sm:$0xff] %vm251, %v1847
          %1932 = vst.msk [vmem:[%s1911 + $0xa0] sm:$0xff] %vm251, %v1852
          %1933 = vst.msk [vmem:[%s1911 + $0xa8] sm:$0xff] %vm251, %v1857
          %1934 = vst.msk [vmem:[%s1911 + $0xb0] sm:$0xff] %vm251, %v1862
          %1935 = vst.msk [vmem:[%s1911 + $0xb8] sm:$0xff] %vm251, %v1867
          %1936 = vst.msk [vmem:[%s1911 + $0xc0] sm:$0xff] %vm251, %v1872
          %1937 = vst.msk [vmem:[%s1911 + $0xc8] sm:$0xff] %vm251, %v1877
          %1938 = vst.msk [vmem:[%s1911 + $0xd0] sm:$0xff] %vm251, %v1882
          %1939 = vst.msk [vmem:[%s1911 + $0xd8] sm:$0xff] %vm251, %v1887
          %1940 = vst.msk [vmem:[%s1911 + $0xe0] sm:$0xff] %vm251, %v1892
          %1941 = vst.msk [vmem:[%s1911 + $0xe8] sm:$0xff] %vm251, %v1897
          %1942 = vst.msk [vmem:[%s1911 + $0xf0] sm:$0xff] %vm251, %v1902
          %1943 = vst.msk [vmem:[%s1911 + $0xf8] sm:$0xff] %vm251, %v1907
          %v1944 = vld [vmem:[#allocation6] sm:$0x1]
          %v1945 = vsel %vm251, %v1752, 0.0
          %v1946 = vsel %vm251, %v1757, 0.0
          %v1947 = vadd.f32 %v1945, %v1946
          %v1948 = vsel %vm251, %v1762, 0.0
          %v1949 = vadd.f32 %v1947, %v1948
          %v1950 = vsel %vm251, %v1767, 0.0
          %v1951 = vadd.f32 %v1949, %v1950
          %v1952 = vsel %vm251, %v1772, 0.0
          %v1953 = vadd.f32 %v1951, %v1952
          %v1954 = vsel %vm251, %v1777, 0.0
          %v1955 = vadd.f32 %v1953, %v1954
          %v1956 = vsel %vm251, %v1782, 0.0
          %v1957 = vadd.f32 %v1955, %v1956
          %v1958 = vsel %vm251, %v1787, 0.0
          %v1959 = vadd.f32 %v1957, %v1958
          %v1960 = vsel %vm251, %v1792, 0.0
          %v1961 = vadd.f32 %v1959, %v1960
          %v1962 = vsel %vm251, %v1797, 0.0
          %v1963 = vadd.f32 %v1961, %v1962
          %v1964 = vsel %vm251, %v1802, 0.0
          %v1965 = vadd.f32 %v1963, %v1964
          %v1966 = vsel %vm251, %v1807, 0.0
          %v1967 = vadd.f32 %v1965, %v1966
          %v1968 = vsel %vm251, %v1812, 0.0
          %v1969 = vadd.f32 %v1967, %v1968
          %v1970 = vsel %vm251, %v1817, 0.0
          %v1971 = vadd.f32 %v1969, %v1970
          %v1972 = vsel %vm251, %v1822, 0.0
          %v1973 = vadd.f32 %v1971, %v1972
          %v1974 = vsel %vm251, %v1827, 0.0
          %v1975 = vadd.f32 %v1973, %v1974
          %v1976 = vsel %vm251, %v1832, 0.0
          %v1977 = vadd.f32 %v1975, %v1976
          %v1978 = vsel %vm251, %v1837, 0.0
          %v1979 = vadd.f32 %v1977, %v1978
          %v1980 = vsel %vm251, %v1842, 0.0
          %v1981 = vadd.f32 %v1979, %v1980
          %v1982 = vsel %vm251, %v1847, 0.0
          %v1983 = vadd.f32 %v1981, %v1982
          %v1984 = vsel %vm251, %v1852, 0.0
          %v1985 = vadd.f32 %v1983, %v1984
          %v1986 = vsel %vm251, %v1857, 0.0
          %v1987 = vadd.f32 %v1985, %v1986
          %v1988 = vsel %vm251, %v1862, 0.0
          %v1989 = vadd.f32 %v1987, %v1988
          %v1990 = vsel %vm251, %v1867, 0.0
          %v1991 = vadd.f32 %v1989, %v1990
          %v1992 = vsel %vm251, %v1872, 0.0
          %v1993 = vadd.f32 %v1991, %v1992
          %v1994 = vsel %vm251, %v1877, 0.0
          %v1995 = vadd.f32 %v1993, %v1994
          %v1996 = vsel %vm251, %v1882, 0.0
          %v1997 = vadd.f32 %v1995, %v1996
          %v1998 = vsel %vm251, %v1887, 0.0
          %v1999 = vadd.f32 %v1997, %v1998
          %v2000 = vsel %vm251, %v1892, 0.0
          %v2001 = vadd.f32 %v1999, %v2000
          %v2002 = vsel %vm251, %v1897, 0.0
          %v2003 = vadd.f32 %v2001, %v2002
          %v2004 = vsel %vm251, %v1902, 0.0
          %v2005 = vadd.f32 %v2003, %v2004
          %v2006 = vsel %vm251, %v1907, 0.0
          %v2007 = vadd.f32 %v2005, %v2006
          %v2008 = vrot.slane %v2007, 4
          %v2009 = vadd.f32 %v2007, %v2008
          %v2010 = vrot.slane %v2009, 2
          %v2011 = vadd.f32 %v2009, %v2010
          %v2012 = vrot.slane %v2011, 1
          %v2013 = vadd.f32 %v2011, %v2012
          %v2014 = vadd.f32 %v1944, %v2013
          %vm2015 = vcmask 24576
          %2016 = vst.msk [vmem:[#allocation6] sm:$0x1] %vm2015, %v2014
          %v2017 = vld [vmem:[#allocation6 + $0x1] sm:$0x1]
          %v2018 = vmul.f32 %v1752, %v1752
          %v2019 = vmul.f32 %v1757, %v1757
          %v2020 = vmul.f32 %v1762, %v1762
          %v2021 = vmul.f32 %v1767, %v1767
          %v2022 = vmul.f32 %v1772, %v1772
          %v2023 = vmul.f32 %v1777, %v1777
          %v2024 = vmul.f32 %v1782, %v1782
          %v2025 = vmul.f32 %v1787, %v1787
          %v2026 = vmul.f32 %v1792, %v1792
          %v2027 = vmul.f32 %v1797, %v1797
          %v2028 = vmul.f32 %v1802, %v1802
          %v2029 = vmul.f32 %v1807, %v1807
          %v2030 = vmul.f32 %v1812, %v1812
          %v2031 = vmul.f32 %v1817, %v1817
          %v2032 = vmul.f32 %v1822, %v1822
          %v2033 = vmul.f32 %v1827, %v1827
          %v2034 = vmul.f32 %v1832, %v1832
          %v2035 = vmul.f32 %v1837, %v1837
          %v2036 = vmul.f32 %v1842, %v1842
          %v2037 = vmul.f32 %v1847, %v1847
          %v2038 = vmul.f32 %v1852, %v1852
          %v2039 = vmul.f32 %v1857, %v1857
          %v2040 = vmul.f32 %v1862, %v1862
          %v2041 = vmul.f32 %v1867, %v1867
          %v2042 = vmul.f32 %v1872, %v1872
          %v2043 = vmul.f32 %v1877, %v1877
          %v2044 = vmul.f32 %v1882, %v1882
          %v2045 = vmul.f32 %v1887, %v1887
          %v2046 = vmul.f32 %v1892, %v1892
          %v2047 = vmul.f32 %v1897, %v1897
          %v2048 = vmul.f32 %v1902, %v1902
          %v2049 = vmul.f32 %v1907, %v1907
          %v2050 = vsel %vm251, %v2018, 0.0
          %v2051 = vsel %vm251, %v2019, 0.0
          %v2052 = vadd.f32 %v2050, %v2051
          %v2053 = vsel %vm251, %v2020, 0.0
          %v2054 = vadd.f32 %v2052, %v2053
          %v2055 = vsel %vm251, %v2021, 0.0
          %v2056 = vadd.f32 %v2054, %v2055
          %v2057 = vsel %vm251, %v2022, 0.0
          %v2058 = vadd.f32 %v2056, %v2057
          %v2059 = vsel %vm251, %v2023, 0.0
          %v2060 = vadd.f32 %v2058, %v2059
          %v2061 = vsel %vm251, %v2024, 0.0
          %v2062 = vadd.f32 %v2060, %v2061
          %v2063 = vsel %vm251, %v2025, 0.0
          %v2064 = vadd.f32 %v2062, %v2063
          %v2065 = vsel %vm251, %v2026, 0.0
          %v2066 = vadd.f32 %v2064, %v2065
          %v2067 = vsel %vm251, %v2027, 0.0
          %v2068 = vadd.f32 %v2066, %v2067
          %v2069 = vsel %vm251, %v2028, 0.0
          %v2070 = vadd.f32 %v2068, %v2069
          %v2071 = vsel %vm251, %v2029, 0.0
          %v2072 = vadd.f32 %v2070, %v2071
          %v2073 = vsel %vm251, %v2030, 0.0
          %v2074 = vadd.f32 %v2072, %v2073
          %v2075 = vsel %vm251, %v2031, 0.0
          %v2076 = vadd.f32 %v2074, %v2075
          %v2077 = vsel %vm251, %v2032, 0.0
          %v2078 = vadd.f32 %v2076, %v2077
          %v2079 = vsel %vm251, %v2033, 0.0
          %v2080 = vadd.f32 %v2078, %v2079
          %v2081 = vsel %vm251, %v2034, 0.0
          %v2082 = vadd.f32 %v2080, %v2081
          %v2083 = vsel %vm251, %v2035, 0.0
          %v2084 = vadd.f32 %v2082, %v2083
          %v2085 = vsel %vm251, %v2036, 0.0
          %v2086 = vadd.f32 %v2084, %v2085
          %v2087 = vsel %vm251, %v2037, 0.0
          %v2088 = vadd.f32 %v2086, %v2087
          %v2089 = vsel %vm251, %v2038, 0.0
          %v2090 = vadd.f32 %v2088, %v2089
          %v2091 = vsel %vm251, %v2039, 0.0
          %v2092 = vadd.f32 %v2090, %v2091
          %v2093 = vsel %vm251, %v2040, 0.0
          %v2094 = vadd.f32 %v2092, %v2093
          %v2095 = vsel %vm251, %v2041, 0.0
          %v2096 = vadd.f32 %v2094, %v2095
          %v2097 = vsel %vm251, %v2042, 0.0
          %v2098 = vadd.f32 %v2096, %v2097
          %v2099 = vsel %vm251, %v2043, 0.0
          %v2100 = vadd.f32 %v2098, %v2099
          %v2101 = vsel %vm251, %v2044, 0.0
          %v2102 = vadd.f32 %v2100, %v2101
          %v2103 = vsel %vm251, %v2045, 0.0
          %v2104 = vadd.f32 %v2102, %v2103
          %v2105 = vsel %vm251, %v2046, 0.0
          %v2106 = vadd.f32 %v2104, %v2105
          %v2107 = vsel %vm251, %v2047, 0.0
          %v2108 = vadd.f32 %v2106, %v2107
          %v2109 = vsel %vm251, %v2048, 0.0
          %v2110 = vadd.f32 %v2108, %v2109
          %v2111 = vsel %vm251, %v2049, 0.0
          %v2112 = vadd.f32 %v2110, %v2111
          %v2113 = vrot.slane %v2112, 4
          %v2114 = vadd.f32 %v2112, %v2113
          %v2115 = vrot.slane %v2114, 2
          %v2116 = vadd.f32 %v2114, %v2115
          %v2117 = vrot.slane %v2116, 1
          %v2118 = vadd.f32 %v2116, %v2117
          %v2119 = vadd.f32 %v2017, %v2118
          %2120 = vst.msk [vmem:[#allocation6 + $0x1] sm:$0x1] %vm2015, %v2119
        $region40: #{tpu_custom_call.1} parent=31 // pred_fallthru
          _
        %p2121 = scmp.eq.s32.totalorder %s21, 1
        %p2122 = pnand %p2121, %p182
        %p2123 = pneg %p2122
        // Predicated region
        $region41: #{tpu_custom_call.1} parent=31 // pred_check
          _
        $region42: #{tpu_custom_call.1} parent=31 // pred_check_branch
          %2125 = sbr.rel (%p2122) target = $region44
        $region43: #{tpu_custom_call.1} parent=31 // pred_region
          %vm2126 = vcmask 11264
          %2127 = vst.msk [vmem:[#allocation7] sm:$0xf] %vm2126, 0.0
        $region44: #{tpu_custom_call.1} parent=31 // pred_fallthru
          _
        // Predicated region
        $region45: #{tpu_custom_call.1} parent=31 // pred_check
          %p2128 = pneg %p2121
        $region46: #{tpu_custom_call.1} parent=31 // pred_check_branch
          %2130 = sbr.rel (%p2128) target = $region48
        $region47: #{tpu_custom_call.1} parent=31 // pred_region
          %v2131 = vld [vmem:[#allocation6] sm:$0x3]
          %v2132 = vmul.f32 %v2131, 0.001953125
          %v2133 = vmul.f32 %v2132, %v2132
          %v2135 = vrot.slane %v2133, 7
          %v2137 = vsub.f32 %v2132, %v2135
          %v2138 = vadd.f32 %v2137, 1e-05
          %v2139 = vrsqrt.pop %v2138
          %s2140 = smul.u32 %s22, 256
          %s2141 = scalar_lea.vmem [#allocation2], %s2140
          %v2142 = vld [vmem:[%s2141] sm:$0xff]
          %v2143 = vld [vmem:[%s2141 + $0x8] sm:$0xff]
          %v2144 = vld [vmem:[%s2141 + $0x10] sm:$0xff]
          %v2145 = vld [vmem:[%s2141 + $0x18] sm:$0xff]
          %v2146 = vld [vmem:[%s2141 + $0x20] sm:$0xff]
          %v2147 = vld [vmem:[%s2141 + $0x28] sm:$0xff]
          %v2148 = vld [vmem:[%s2141 + $0x30] sm:$0xff]
          %v2149 = vld [vmem:[%s2141 + $0x38] sm:$0xff]
          %v2150 = vld [vmem:[%s2141 + $0x40] sm:$0xff]
          %v2151 = vld [vmem:[%s2141 + $0x48] sm:$0xff]
          %v2152 = vld [vmem:[%s2141 + $0x50] sm:$0xff]
          %v2153 = vld [vmem:[%s2141 + $0x58] sm:$0xff]
          %v2154 = vld [vmem:[%s2141 + $0x60] sm:$0xff]
          %v2155 = vld [vmem:[%s2141 + $0x68] sm:$0xff]
          %v2156 = vld [vmem:[%s2141 + $0x70] sm:$0xff]
          %v2157 = vld [vmem:[%s2141 + $0x78] sm:$0xff]
          %v2158 = vld [vmem:[%s2141 + $0x80] sm:$0xff]
          %v2159 = vld [vmem:[%s2141 + $0x88] sm:$0xff]
          %v2160 = vld [vmem:[%s2141 + $0x90] sm:$0xff]
          %v2161 = vld [vmem:[%s2141 + $0x98] sm:$0xff]
          %v2162 = vld [vmem:[%s2141 + $0xa0] sm:$0xff]
          %v2163 = vld [vmem:[%s2141 + $0xa8] sm:$0xff]
          %v2164 = vld [vmem:[%s2141 + $0xb0] sm:$0xff]
          %v2165 = vld [vmem:[%s2141 + $0xb8] sm:$0xff]
          %v2166 = vld [vmem:[%s2141 + $0xc0] sm:$0xff]
          %v2167 = vld [vmem:[%s2141 + $0xc8] sm:$0xff]
          %v2168 = vld [vmem:[%s2141 + $0xd0] sm:$0xff]
          %v2169 = vld [vmem:[%s2141 + $0xd8] sm:$0xff]
          %v2170 = vld [vmem:[%s2141 + $0xe0] sm:$0xff]
          %v2171 = vld [vmem:[%s2141 + $0xe8] sm:$0xff]
          %v2172 = vld [vmem:[%s2141 + $0xf0] sm:$0xff]
          %v2173 = vld [vmem:[%s2141 + $0xf8] sm:$0xff]
          %v2174 = vlaneseq
          %v2175 = vshrl.u32 %v2174, 7
          %v2176 = vsub.s32 0, %v2175
          %v2177 = vrot.slane %v2132, %v2176
          %v2178 = vsub.f32 %v2142, %v2177
          %v2179 = vsub.f32 %v2143, %v2177
          %v2180 = vsub.f32 %v2144, %v2177
          %v2181 = vsub.f32 %v2145, %v2177
          %v2182 = vsub.f32 %v2146, %v2177
          %v2183 = vsub.f32 %v2147, %v2177
          %v2184 = vsub.f32 %v2148, %v2177
          %v2185 = vsub.f32 %v2149, %v2177
          %v2186 = vsub.f32 %v2150, %v2177
          %v2187 = vsub.f32 %v2151, %v2177
          %v2188 = vsub.f32 %v2152, %v2177
          %v2189 = vsub.f32 %v2153, %v2177
          %v2190 = vsub.f32 %v2154, %v2177
          %v2191 = vsub.f32 %v2155, %v2177
          %v2192 = vsub.f32 %v2156, %v2177
          %v2193 = vsub.f32 %v2157, %v2177
          %v2194 = vsub.f32 %v2158, %v2177
          %v2195 = vsub.f32 %v2159, %v2177
          %v2196 = vsub.f32 %v2160, %v2177
          %v2197 = vsub.f32 %v2161, %v2177
          %v2198 = vsub.f32 %v2162, %v2177
          %v2199 = vsub.f32 %v2163, %v2177
          %v2200 = vsub.f32 %v2164, %v2177
          %v2201 = vsub.f32 %v2165, %v2177
          %v2202 = vsub.f32 %v2166, %v2177
          %v2203 = vsub.f32 %v2167, %v2177
          %v2204 = vsub.f32 %v2168, %v2177
          %v2205 = vsub.f32 %v2169, %v2177
          %v2206 = vsub.f32 %v2170, %v2177
          %v2207 = vsub.f32 %v2171, %v2177
          %v2208 = vsub.f32 %v2172, %v2177
          %v2209 = vsub.f32 %v2173, %v2177
          %v2210 = vlaneseq
          %v2211 = vshrl.u32 %v2210, 7
          %v2212 = vsub.s32 1, %v2211
          %v2213 = vrot.slane %v2139, %v2212
          %v2214 = vmul.f32 %v2178, %v2213
          %v2215 = vmul.f32 %v2179, %v2213
          %v2216 = vmul.f32 %v2180, %v2213
          %v2217 = vmul.f32 %v2181, %v2213
          %v2218 = vmul.f32 %v2182, %v2213
          %v2219 = vmul.f32 %v2183, %v2213
          %v2220 = vmul.f32 %v2184, %v2213
          %v2221 = vmul.f32 %v2185, %v2213
          %v2222 = vmul.f32 %v2186, %v2213
          %v2223 = vmul.f32 %v2187, %v2213
          %v2224 = vmul.f32 %v2188, %v2213
          %v2225 = vmul.f32 %v2189, %v2213
          %v2226 = vmul.f32 %v2190, %v2213
          %v2227 = vmul.f32 %v2191, %v2213
          %v2228 = vmul.f32 %v2192, %v2213
          %v2229 = vmul.f32 %v2193, %v2213
          %v2230 = vmul.f32 %v2194, %v2213
          %v2231 = vmul.f32 %v2195, %v2213
          %v2232 = vmul.f32 %v2196, %v2213
          %v2233 = vmul.f32 %v2197, %v2213
          %v2234 = vmul.f32 %v2198, %v2213
          %v2235 = vmul.f32 %v2199, %v2213
          %v2236 = vmul.f32 %v2200, %v2213
          %v2237 = vmul.f32 %v2201, %v2213
          %v2238 = vmul.f32 %v2202, %v2213
          %v2239 = vmul.f32 %v2203, %v2213
          %v2240 = vmul.f32 %v2204, %v2213
          %v2241 = vmul.f32 %v2205, %v2213
          %v2242 = vmul.f32 %v2206, %v2213
          %v2243 = vmul.f32 %v2207, %v2213
          %v2244 = vmul.f32 %v2208, %v2213
          %v2245 = vmul.f32 %v2209, %v2213
          %v2246 = vmax.f32 %v2214, 0.0
          %v2247 = vmax.f32 %v2215, 0.0
          %v2248 = vmax.f32 %v2216, 0.0
          %v2249 = vmax.f32 %v2217, 0.0
          %v2250 = vmax.f32 %v2218, 0.0
          %v2251 = vmax.f32 %v2219, 0.0
          %v2252 = vmax.f32 %v2220, 0.0
          %v2253 = vmax.f32 %v2221, 0.0
          %v2254 = vmax.f32 %v2222, 0.0
          %v2255 = vmax.f32 %v2223, 0.0
          %v2256 = vmax.f32 %v2224, 0.0
          %v2257 = vmax.f32 %v2225, 0.0
          %v2258 = vmax.f32 %v2226, 0.0
          %v2259 = vmax.f32 %v2227, 0.0
          %v2260 = vmax.f32 %v2228, 0.0
          %v2261 = vmax.f32 %v2229, 0.0
          %v2262 = vmax.f32 %v2230, 0.0
          %v2263 = vmax.f32 %v2231, 0.0
          %v2264 = vmax.f32 %v2232, 0.0
          %v2265 = vmax.f32 %v2233, 0.0
          %v2266 = vmax.f32 %v2234, 0.0
          %v2267 = vmax.f32 %v2235, 0.0
          %v2268 = vmax.f32 %v2236, 0.0
          %v2269 = vmax.f32 %v2237, 0.0
          %v2270 = vmax.f32 %v2238, 0.0
          %v2271 = vmax.f32 %v2239, 0.0
          %v2272 = vmax.f32 %v2240, 0.0
          %v2273 = vmax.f32 %v2241, 0.0
          %v2274 = vmax.f32 %v2242, 0.0
          %v2275 = vmax.f32 %v2243, 0.0
          %v2276 = vmax.f32 %v2244, 0.0
          %v2277 = vmax.f32 %v2245, 0.0
          %vm2278 = vcmask 31744
          %2279 = vst.msk [vmem:[#allocation4] sm:$0xff] %vm2278, 0.0
          %2280 = vst.msk [vmem:[#allocation4 + $0x8] sm:$0xff] %vm2278, 0.0
          %vm2281 = vcmask 25600
          %2282 = vst.msk [vmem:[#allocation4 + $0x10] sm:$0x3] %vm2281, 0.0
          %2283 = vst.msk [vmem:[#allocation4 + $0x18] sm:$0xff] %vm2278, 0.0
          %2284 = vst.msk [vmem:[#allocation4 + $0x20] sm:$0xff] %vm2278, 0.0
          %2285 = vst.msk [vmem:[#allocation4 + $0x28] sm:$0x3] %vm2281, 0.0
          %2286 = vst.msk [vmem:[#allocation4 + $0x30] sm:$0xff] %vm2278, 0.0
          %2287 = vst.msk [vmem:[#allocation4 + $0x38] sm:$0xff] %vm2278, 0.0
          %2288 = vst.msk [vmem:[#allocation4 + $0x40] sm:$0x3] %vm2281, 0.0
          %2289 = vst.msk [vmem:[#allocation4 + $0x48] sm:$0xff] %vm2278, 0.0
          %2290 = vst.msk [vmem:[#allocation4 + $0x50] sm:$0xff] %vm2278, 0.0
          %2291 = vst.msk [vmem:[#allocation4 + $0x58] sm:$0x3] %vm2281, 0.0
          %2292 = vst.msk [vmem:[#allocation4 + $0x60] sm:$0xff] %vm2278, 0.0
          %2293 = vst.msk [vmem:[#allocation4 + $0x68] sm:$0xff] %vm2278, 0.0
          %2294 = vst.msk [vmem:[#allocation4 + $0x70] sm:$0x3] %vm2281, 0.0
          %2295 = vst.msk [vmem:[#allocation4 + $0x78] sm:$0xff] %vm2278, 0.0
          %2296 = vst.msk [vmem:[#allocation4 + $0x80] sm:$0xff] %vm2278, 0.0
          %2297 = vst.msk [vmem:[#allocation4 + $0x88] sm:$0x3] %vm2281, 0.0
          %2298 = vst.msk [vmem:[#allocation4 + $0x90] sm:$0xff] %vm2278, 0.0
          %2299 = vst.msk [vmem:[#allocation4 + $0x98] sm:$0xff] %vm2278, 0.0
          %2300 = vst.msk [vmem:[#allocation4 + $0xa0] sm:$0x3] %vm2281, 0.0
          %2301 = vst.msk [vmem:[#allocation4 + $0xa8] sm:$0xff] %vm2278, 0.0
          %2302 = vst.msk [vmem:[#allocation4 + $0xb0] sm:$0xff] %vm2278, 0.0
          %2303 = vst.msk [vmem:[#allocation4 + $0xb8] sm:$0x3] %vm2281, 0.0
          %2304 = vst.msk [vmem:[#allocation4 + $0xc0] sm:$0xff] %vm2278, 0.0
          %2305 = vst.msk [vmem:[#allocation4 + $0xc8] sm:$0xff] %vm2278, 0.0
          %2306 = vst.msk [vmem:[#allocation4 + $0xd0] sm:$0x3] %vm2281, 0.0
          %2307 = vst.msk [vmem:[#allocation4 + $0xd8] sm:$0xff] %vm2278, 0.0
          %2308 = vst.msk [vmem:[#allocation4 + $0xe0] sm:$0xff] %vm2278, 0.0
          %2309 = vst.msk [vmem:[#allocation4 + $0xe8] sm:$0x3] %vm2281, 0.0
          %2310 = vst.msk [vmem:[#allocation4 + $0xf0] sm:$0xff] %vm2278, 0.0
          %2311 = vst.msk [vmem:[#allocation4 + $0xf8] sm:$0xff] %vm2278, 0.0
          %2312 = vst.msk [vmem:[#allocation4 + $0x100] sm:$0x3] %vm2281, 0.0
          %2313 = vst.msk [vmem:[#allocation4 + $0x108] sm:$0xff] %vm2278, 0.0
          %2314 = vst.msk [vmem:[#allocation4 + $0x110] sm:$0xff] %vm2278, 0.0
          %2315 = vst.msk [vmem:[#allocation4 + $0x118] sm:$0x3] %vm2281, 0.0
          %2316 = vst.msk [vmem:[#allocation4 + $0x120] sm:$0xff] %vm2278, 0.0
          %2317 = vst.msk [vmem:[#allocation4 + $0x128] sm:$0xff] %vm2278, 0.0
          %2318 = vst.msk [vmem:[#allocation4 + $0x130] sm:$0x3] %vm2281, 0.0
          %2319 = vst.msk [vmem:[#allocation4 + $0x138] sm:$0xff] %vm2278, 0.0
          %2320 = vst.msk [vmem:[#allocation4 + $0x140] sm:$0xff] %vm2278, 0.0
          %2321 = vst.msk [vmem:[#allocation4 + $0x148] sm:$0x3] %vm2281, 0.0
          %2322 = vst.msk [vmem:[#allocation4 + $0x150] sm:$0xff] %vm2278, 0.0
          %2323 = vst.msk [vmem:[#allocation4 + $0x158] sm:$0xff] %vm2278, 0.0
          %2324 = vst.msk [vmem:[#allocation4 + $0x160] sm:$0x3] %vm2281, 0.0
          %2325 = vst.msk [vmem:[#allocation4 + $0x168] sm:$0xff] %vm2278, 0.0
          %2326 = vst.msk [vmem:[#allocation4 + $0x170] sm:$0xff] %vm2278, 0.0
          %2327 = vst.msk [vmem:[#allocation4 + $0x178] sm:$0x3] %vm2281, 0.0
          %2328 = vst.msk [vmem:[#allocation4 + $0x180] sm:$0xff] %vm2278, 0.0
          %2329 = vst.msk [vmem:[#allocation4 + $0x188] sm:$0xff] %vm2278, 0.0
          %2330 = vst.msk [vmem:[#allocation4 + $0x190] sm:$0x3] %vm2281, 0.0
          %2331 = vst.msk [vmem:[#allocation4 + $0x198] sm:$0xff] %vm2278, 0.0
          %2332 = vst.msk [vmem:[#allocation4 + $0x1a0] sm:$0xff] %vm2278, 0.0
          %2333 = vst.msk [vmem:[#allocation4 + $0x1a8] sm:$0x3] %vm2281, 0.0
          %s2334 = scalar_lea.vmem [#allocation4], 24
          %2335 = vst.msk [vmem:[%s2334 + $0x1] sm:$0xff] %vm2278, %v2246
          %2336 = vst.msk [vmem:[%s2334 + $0x9] sm:$0xff] %vm2278, %v2247
          %2337 = vst.msk [vmem:[%s2334 + $0x19] sm:$0xff] %vm2278, %v2248
          %2338 = vst.msk [vmem:[%s2334 + $0x21] sm:$0xff] %vm2278, %v2249
          %2339 = vst.msk [vmem:[%s2334 + $0x31] sm:$0xff] %vm2278, %v2250
          %2340 = vst.msk [vmem:[%s2334 + $0x39] sm:$0xff] %vm2278, %v2251
          %2341 = vst.msk [vmem:[%s2334 + $0x49] sm:$0xff] %vm2278, %v2252
          %2342 = vst.msk [vmem:[%s2334 + $0x51] sm:$0xff] %vm2278, %v2253
          %2343 = vst.msk [vmem:[%s2334 + $0x61] sm:$0xff] %vm2278, %v2254
          %2344 = vst.msk [vmem:[%s2334 + $0x69] sm:$0xff] %vm2278, %v2255
          %2345 = vst.msk [vmem:[%s2334 + $0x79] sm:$0xff] %vm2278, %v2256
          %2346 = vst.msk [vmem:[%s2334 + $0x81] sm:$0xff] %vm2278, %v2257
          %2347 = vst.msk [vmem:[%s2334 + $0x91] sm:$0xff] %vm2278, %v2258
          %2348 = vst.msk [vmem:[%s2334 + $0x99] sm:$0xff] %vm2278, %v2259
          %2349 = vst.msk [vmem:[%s2334 + $0xa9] sm:$0xff] %vm2278, %v2260
          %2350 = vst.msk [vmem:[%s2334 + $0xb1] sm:$0xff] %vm2278, %v2261
          %2351 = vst.msk [vmem:[%s2334 + $0xc1] sm:$0xff] %vm2278, %v2262
          %2352 = vst.msk [vmem:[%s2334 + $0xc9] sm:$0xff] %vm2278, %v2263
          %2353 = vst.msk [vmem:[%s2334 + $0xd9] sm:$0xff] %vm2278, %v2264
          %2354 = vst.msk [vmem:[%s2334 + $0xe1] sm:$0xff] %vm2278, %v2265
          %2355 = vst.msk [vmem:[%s2334 + $0xf1] sm:$0xff] %vm2278, %v2266
          %2356 = vst.msk [vmem:[%s2334 + $0xf9] sm:$0xff] %vm2278, %v2267
          %2357 = vst.msk [vmem:[%s2334 + $0x109] sm:$0xff] %vm2278, %v2268
          %2358 = vst.msk [vmem:[%s2334 + $0x111] sm:$0xff] %vm2278, %v2269
          %2359 = vst.msk [vmem:[%s2334 + $0x121] sm:$0xff] %vm2278, %v2270
          %2360 = vst.msk [vmem:[%s2334 + $0x129] sm:$0xff] %vm2278, %v2271
          %2361 = vst.msk [vmem:[%s2334 + $0x139] sm:$0xff] %vm2278, %v2272
          %2362 = vst.msk [vmem:[%s2334 + $0x141] sm:$0xff] %vm2278, %v2273
          %2363 = vst.msk [vmem:[%s2334 + $0x151] sm:$0xff] %vm2278, %v2274
          %2364 = vst.msk [vmem:[%s2334 + $0x159] sm:$0xff] %vm2278, %v2275
          %2365 = vst.msk [vmem:[%s2334 + $0x169] sm:$0xff] %vm2278, %v2276
          %2366 = vst.msk [vmem:[%s2334 + $0x171] sm:$0xff] %vm2278, %v2277
          %v2367 = vld [vmem:[#allocation4] sm:$0xff]
          %v2368 = vld [vmem:[#allocation4 + $0x8] sm:$0xff]
          %v2369 = vld [vmem:[#allocation4 + $0x10] sm:$0x3]
          %v2370 = vld [vmem:[#allocation4 + $0x18] sm:$0xff]
          %v2371 = vld [vmem:[#allocation4 + $0x20] sm:$0xff]
          %v2372 = vld [vmem:[#allocation4 + $0x28] sm:$0x3]
          %v2373 = vld [vmem:[#allocation4 + $0x30] sm:$0xff]
          %v2374 = vld [vmem:[#allocation4 + $0x38] sm:$0xff]
          %v2375 = vld [vmem:[#allocation4 + $0x40] sm:$0x3]
          %v2376 = vld [vmem:[#allocation4 + $0x48] sm:$0xff]
          %v2377 = vld [vmem:[#allocation4 + $0x50] sm:$0xff]
          %v2378 = vld [vmem:[#allocation4 + $0x58] sm:$0x3]
          %v2379 = vld [vmem:[#allocation4 + $0x60] sm:$0xff]
          %v2380 = vld [vmem:[#allocation4 + $0x68] sm:$0xff]
          %v2381 = vld [vmem:[#allocation4 + $0x70] sm:$0x3]
          %v2382 = vld [vmem:[#allocation4 + $0x78] sm:$0xff]
          %v2383 = vld [vmem:[#allocation4 + $0x80] sm:$0xff]
          %v2384 = vld [vmem:[#allocation4 + $0x88] sm:$0x3]
          %v2385 = vld [vmem:[#allocation4 + $0x90] sm:$0xff]
          %v2386 = vld [vmem:[#allocation4 + $0x98] sm:$0xff]
          %v2387 = vld [vmem:[#allocation4 + $0xa0] sm:$0x3]
          %v2388 = vld [vmem:[#allocation4 + $0xa8] sm:$0xff]
          %v2389 = vld [vmem:[#allocation4 + $0xb0] sm:$0xff]
          %v2390 = vld [vmem:[#allocation4 + $0xb8] sm:$0x3]
          %v2391 = vld [vmem:[#allocation4 + $0xc0] sm:$0xff]
          %v2392 = vld [vmem:[#allocation4 + $0xc8] sm:$0xff]
          %v2393 = vld [vmem:[#allocation4 + $0xd0] sm:$0x3]
          %v2394 = vld [vmem:[#allocation4 + $0xd8] sm:$0xff]
          %v2395 = vld [vmem:[#allocation4 + $0xe0] sm:$0xff]
          %v2396 = vld [vmem:[#allocation4 + $0xe8] sm:$0x3]
          %v2397 = vld [vmem:[#allocation4 + $0xf0] sm:$0xff]
          %v2398 = vld [vmem:[#allocation4 + $0xf8] sm:$0xff]
          %v2399 = vld [vmem:[#allocation4 + $0x100] sm:$0x3]
          %v2400 = vld [vmem:[#allocation4 + $0x108] sm:$0xff]
          %v2401 = vld [vmem:[#allocation4 + $0x110] sm:$0xff]
          %v2402 = vld [vmem:[#allocation4 + $0x118] sm:$0x3]
          %v2403 = vld [vmem:[#allocation4 + $0x120] sm:$0xff]
          %v2404 = vld [vmem:[#allocation4 + $0x128] sm:$0xff]
          %v2405 = vld [vmem:[#allocation4 + $0x130] sm:$0x3]
          %v2406 = vld [vmem:[#allocation4 + $0x138] sm:$0xff]
          %v2407 = vld [vmem:[#allocation4 + $0x140] sm:$0xff]
          %v2408 = vld [vmem:[#allocation4 + $0x148] sm:$0x3]
          %v2409 = vld [vmem:[#allocation4 + $0x150] sm:$0xff]
          %v2410 = vld [vmem:[#allocation4 + $0x158] sm:$0xff]
          %v2411 = vld [vmem:[#allocation4 + $0x160] sm:$0x3]
          %v2412 = vld [vmem:[#allocation4 + $0x168] sm:$0xff]
          %v2413 = vld [vmem:[#allocation4 + $0x170] sm:$0xff]
          %v2414 = vld [vmem:[#allocation4 + $0x178] sm:$0x3]
          %v2415 = vld [vmem:[#allocation4 + $0x180] sm:$0xff]
          %v2416 = vld [vmem:[#allocation4 + $0x188] sm:$0xff]
          %v2417 = vld [vmem:[#allocation4 + $0x190] sm:$0x3]
          %v2418 = vld [vmem:[#allocation4 + $0x198] sm:$0xff]
          %v2419 = vld [vmem:[#allocation4 + $0x1a0] sm:$0xff]
          %v2420 = vld [vmem:[#allocation4 + $0x1a8] sm:$0x3]
          %v2421 = vld [vmem:[%s2] sm:$0xff]
          %v2422 = vld [vmem:[%s2 + $0x8] sm:$0xff]
          %v2423 = vld [vmem:[%s2 + $0x10] sm:$0xff]
          %v2424 = vld [vmem:[%s2 + $0x18] sm:$0xff]
          %v2425 = vld [vmem:[%s2 + $0x20] sm:$0xf]
          %2426 = vst.msk [vmem:[#allocation5] sm:$0xff] %vm2278, %v2367
          %2427 = vst.msk [vmem:[#allocation5 + $0x8] sm:$0xff] %vm2278, %v2368
          %2428 = vst.msk [vmem:[#allocation5 + $0x10] sm:$0xff] %vm2278, %v2370
          %2429 = vst.msk [vmem:[#allocation5 + $0x18] sm:$0xff] %vm2278, %v2371
          %2430 = vst.msk [vmem:[#allocation5 + $0x20] sm:$0xff] %vm2278, %v2373
          %2431 = vst.msk [vmem:[#allocation5 + $0x28] sm:$0xff] %vm2278, %v2374
          %2432 = vst.msk [vmem:[#allocation5 + $0x30] sm:$0xff] %vm2278, %v2376
          %2433 = vst.msk [vmem:[#allocation5 + $0x38] sm:$0xff] %vm2278, %v2377
          %2434 = vst.msk [vmem:[#allocation5 + $0x40] sm:$0xff] %vm2278, %v2379
          %2435 = vst.msk [vmem:[#allocation5 + $0x48] sm:$0xff] %vm2278, %v2380
          %2436 = vst.msk [vmem:[#allocation5 + $0x50] sm:$0xff] %vm2278, %v2382
          %2437 = vst.msk [vmem:[#allocation5 + $0x58] sm:$0xff] %vm2278, %v2383
          %2438 = vst.msk [vmem:[#allocation5 + $0x60] sm:$0xff] %vm2278, %v2385
          %2439 = vst.msk [vmem:[#allocation5 + $0x68] sm:$0xff] %vm2278, %v2386
          %2440 = vst.msk [vmem:[#allocation5 + $0x70] sm:$0xff] %vm2278, %v2388
          %2441 = vst.msk [vmem:[#allocation5 + $0x78] sm:$0xff] %vm2278, %v2389
          %2442 = vst.msk [vmem:[#allocation5 + $0x80] sm:$0xff] %vm2278, %v2391
          %2443 = vst.msk [vmem:[#allocation5 + $0x88] sm:$0xff] %vm2278, %v2392
          %2444 = vst.msk [vmem:[#allocation5 + $0x90] sm:$0xff] %vm2278, %v2394
          %2445 = vst.msk [vmem:[#allocation5 + $0x98] sm:$0xff] %vm2278, %v2395
          %2446 = vst.msk [vmem:[#allocation5 + $0xa0] sm:$0xff] %vm2278, %v2397
          %2447 = vst.msk [vmem:[#allocation5 + $0xa8] sm:$0xff] %vm2278, %v2398
          %2448 = vst.msk [vmem:[#allocation5 + $0xb0] sm:$0xff] %vm2278, %v2400
          %2449 = vst.msk [vmem:[#allocation5 + $0xb8] sm:$0xff] %vm2278, %v2401
          %2450 = vst.msk [vmem:[#allocation5 + $0xc0] sm:$0xff] %vm2278, %v2403
          %2451 = vst.msk [vmem:[#allocation5 + $0xc8] sm:$0xff] %vm2278, %v2404
          %2452 = vst.msk [vmem:[#allocation5 + $0xd0] sm:$0xff] %vm2278, %v2406
          %2453 = vst.msk [vmem:[#allocation5 + $0xd8] sm:$0xff] %vm2278, %v2407
          %2454 = vst.msk [vmem:[#allocation5 + $0xe0] sm:$0xff] %vm2278, %v2409
          %2455 = vst.msk [vmem:[#allocation5 + $0xe8] sm:$0xff] %vm2278, %v2410
          %2456 = vst.msk [vmem:[#allocation5 + $0xf0] sm:$0xff] %vm2278, %v2412
          %2457 = vst.msk [vmem:[#allocation5 + $0xf8] sm:$0xff] %vm2278, %v2413
          %vm2506 = vcmask 1046528
          %v2507 = vrot.slane %v2367, 1
          %v2508 = vrot.slane %v2368, 1
          %v2509 = vsel %vm2506, %v2507, %v2508
          %v2510 = vrot.slane %v2369, 1
          %v2511 = vsel %vm2506, %v2508, %v2510
          %v2512 = vrot.slane %v2370, 1
          %v2513 = vrot.slane %v2371, 1
          %v2514 = vsel %vm2506, %v2512, %v2513
          %v2515 = vrot.slane %v2372, 1
          %v2516 = vsel %vm2506, %v2513, %v2515
          %v2517 = vrot.slane %v2373, 1
          %v2518 = vrot.slane %v2374, 1
          %v2519 = vsel %vm2506, %v2517, %v2518
          %v2520 = vrot.slane %v2375, 1
          %v2521 = vsel %vm2506, %v2518, %v2520
          %v2522 = vrot.slane %v2376, 1
          %v2523 = vrot.slane %v2377, 1
          %v2524 = vsel %vm2506, %v2522, %v2523
          %v2525 = vrot.slane %v2378, 1
          %v2526 = vsel %vm2506, %v2523, %v2525
          %v2527 = vrot.slane %v2379, 1
          %v2528 = vrot.slane %v2380, 1
          %v2529 = vsel %vm2506, %v2527, %v2528
          %v2530 = vrot.slane %v2381, 1
          %v2531 = vsel %vm2506, %v2528, %v2530
          %v2532 = vrot.slane %v2382, 1
          %v2533 = vrot.slane %v2383, 1
          %v2534 = vsel %vm2506, %v2532, %v2533
          %v2535 = vrot.slane %v2384, 1
          %v2536 = vsel %vm2506, %v2533, %v2535
          %v2537 = vrot.slane %v2385, 1
          %v2538 = vrot.slane %v2386, 1
          %v2539 = vsel %vm2506, %v2537, %v2538
          %v2540 = vrot.slane %v2387, 1
          %v2541 = vsel %vm2506, %v2538, %v2540
          %v2542 = vrot.slane %v2388, 1
          %v2543 = vrot.slane %v2389, 1
          %v2544 = vsel %vm2506, %v2542, %v2543
          %v2545 = vrot.slane %v2390, 1
          %v2546 = vsel %vm2506, %v2543, %v2545
          %v2547 = vrot.slane %v2391, 1
          %v2548 = vrot.slane %v2392, 1
          %v2549 = vsel %vm2506, %v2547, %v2548
          %v2550 = vrot.slane %v2393, 1
          %v2551 = vsel %vm2506, %v2548, %v2550
          %v2552 = vrot.slane %v2394, 1
          %v2553 = vrot.slane %v2395, 1
          %v2554 = vsel %vm2506, %v2552, %v2553
          %v2555 = vrot.slane %v2396, 1
          %v2556 = vsel %vm2506, %v2553, %v2555
          %v2557 = vrot.slane %v2397, 1
          %v2558 = vrot.slane %v2398, 1
          %v2559 = vsel %vm2506, %v2557, %v2558
          %v2560 = vrot.slane %v2399, 1
          %v2561 = vsel %vm2506, %v2558, %v2560
          %v2562 = vrot.slane %v2400, 1
          %v2563 = vrot.slane %v2401, 1
          %v2564 = vsel %vm2506, %v2562, %v2563
          %v2565 = vrot.slane %v2402, 1
          %v2566 = vsel %vm2506, %v2563, %v2565
          %v2567 = vrot.slane %v2403, 1
          %v2568 = vrot.slane %v2404, 1
          %v2569 = vsel %vm2506, %v2567, %v2568
          %v2570 = vrot.slane %v2405, 1
          %v2571 = vsel %vm2506, %v2568, %v2570
          %v2572 = vrot.slane %v2406, 1
          %v2573 = vrot.slane %v2407, 1
          %v2574 = vsel %vm2506, %v2572, %v2573
          %v2575 = vrot.slane %v2408, 1
          %v2576 = vsel %vm2506, %v2573, %v2575
          %v2577 = vrot.slane %v2409, 1
          %v2578 = vrot.slane %v2410, 1
          %v2579 = vsel %vm2506, %v2577, %v2578
          %v2580 = vrot.slane %v2411, 1
          %v2581 = vsel %vm2506, %v2578, %v2580
          %v2582 = vrot.slane %v2412, 1
          %v2583 = vrot.slane %v2413, 1
          %v2584 = vsel %vm2506, %v2582, %v2583
          %v2585 = vrot.slane %v2414, 1
          %v2586 = vsel %vm2506, %v2583, %v2585
          %2587 = vrot.lane.b32.xlu0 %v2509, 4
          %v2588 = vpop.permute.xlu0 %2587
          %2589 = vrot.lane.b32.xlu0 %v2511, 4
          %v2590 = vpop.permute.xlu0 %2589
          %2591 = vrot.lane.b32.xlu0 %v2514, 4
          %v2592 = vpop.permute.xlu0 %2591
          %2593 = vrot.lane.b32.xlu0 %v2516, 4
          %v2594 = vpop.permute.xlu0 %2593
          %2595 = vrot.lane.b32.xlu0 %v2519, 4
          %v2596 = vpop.permute.xlu0 %2595
          %2597 = vrot.lane.b32.xlu0 %v2521, 4
          %v2598 = vpop.permute.xlu0 %2597
          %2599 = vrot.lane.b32.xlu0 %v2524, 4
          %v2600 = vpop.permute.xlu0 %2599
          %2601 = vrot.lane.b32.xlu0 %v2526, 4
          %v2602 = vpop.permute.xlu0 %2601
          %2603 = vrot.lane.b32.xlu0 %v2529, 4
          %v2604 = vpop.permute.xlu0 %2603
          %2605 = vrot.lane.b32.xlu0 %v2531, 4
          %v2606 = vpop.permute.xlu0 %2605
          %2607 = vrot.lane.b32.xlu0 %v2534, 4
          %v2608 = vpop.permute.xlu0 %2607
          %2609 = vrot.lane.b32.xlu0 %v2536, 4
          %v2610 = vpop.permute.xlu0 %2609
          %2611 = vrot.lane.b32.xlu0 %v2539, 4
          %v2612 = vpop.permute.xlu0 %2611
          %2613 = vrot.lane.b32.xlu0 %v2541, 4
          %v2614 = vpop.permute.xlu0 %2613
          %2615 = vrot.lane.b32.xlu0 %v2544, 4
          %v2616 = vpop.permute.xlu0 %2615
          %2617 = vrot.lane.b32.xlu0 %v2546, 4
          %v2618 = vpop.permute.xlu0 %2617
          %2619 = vrot.lane.b32.xlu0 %v2549, 4
          %v2620 = vpop.permute.xlu0 %2619
          %2621 = vrot.lane.b32.xlu0 %v2551, 4
          %v2622 = vpop.permute.xlu0 %2621
          %2623 = vrot.lane.b32.xlu0 %v2554, 4
          %v2624 = vpop.permute.xlu0 %2623
          %2625 = vrot.lane.b32.xlu0 %v2556, 4
          %v2626 = vpop.permute.xlu0 %2625
          %2627 = vrot.lane.b32.xlu0 %v2559, 4
          %v2628 = vpop.permute.xlu0 %2627
          %2629 = vrot.lane.b32.xlu0 %v2561, 4
          %v2630 = vpop.permute.xlu0 %2629
          %2631 = vrot.lane.b32.xlu0 %v2564, 4
          %v2632 = vpop.permute.xlu0 %2631
          %2633 = vrot.lane.b32.xlu0 %v2566, 4
          %v2634 = vpop.permute.xlu0 %2633
          %2635 = vrot.lane.b32.xlu0 %v2569, 4
          %v2636 = vpop.permute.xlu0 %2635
          %2637 = vrot.lane.b32.xlu0 %v2571, 4
          %v2638 = vpop.permute.xlu0 %2637
          %2639 = vrot.lane.b32.xlu0 %v2574, 4
          %v2640 = vpop.permute.xlu0 %2639
          %2641 = vrot.lane.b32.xlu0 %v2576, 4
          %v2642 = vpop.permute.xlu0 %2641
          %2643 = vrot.lane.b32.xlu0 %v2579, 4
          %v2644 = vpop.permute.xlu0 %2643
          %2645 = vrot.lane.b32.xlu0 %v2581, 4
          %v2646 = vpop.permute.xlu0 %2645
          %2647 = vrot.lane.b32.xlu0 %v2584, 4
          %v2648 = vpop.permute.xlu0 %2647
          %2649 = vrot.lane.b32.xlu0 %v2586, 4
          %v2650 = vpop.permute.xlu0 %2649
          %vm2683 = vcmask 64544
          %2684 = vst.msk [vmem:[#allocation5] sm:$0xff] %vm2683, %v2588
          %2685 = vst.msk [vmem:[#allocation5 + $0x8] sm:$0xff] %vm2683, %v2590
          %2686 = vst.msk [vmem:[#allocation5 + $0x10] sm:$0xff] %vm2683, %v2592
          %2687 = vst.msk [vmem:[#allocation5 + $0x18] sm:$0xff] %vm2683, %v2594
          %2688 = vst.msk [vmem:[#allocation5 + $0x20] sm:$0xff] %vm2683, %v2596
          %2689 = vst.msk [vmem:[#allocation5 + $0x28] sm:$0xff] %vm2683, %v2598
          %2690 = vst.msk [vmem:[#allocation5 + $0x30] sm:$0xff] %vm2683, %v2600
          %2691 = vst.msk [vmem:[#allocation5 + $0x38] sm:$0xff] %vm2683, %v2602
          %2692 = vst.msk [vmem:[#allocation5 + $0x40] sm:$0xff] %vm2683, %v2604
          %2693 = vst.msk [vmem:[#allocation5 + $0x48] sm:$0xff] %vm2683, %v2606
          %2694 = vst.msk [vmem:[#allocation5 + $0x50] sm:$0xff] %vm2683, %v2608
          %2695 = vst.msk [vmem:[#allocation5 + $0x58] sm:$0xff] %vm2683, %v2610
          %2696 = vst.msk [vmem:[#allocation5 + $0x60] sm:$0xff] %vm2683, %v2612
          %2697 = vst.msk [vmem:[#allocation5 + $0x68] sm:$0xff] %vm2683, %v2614
          %2698 = vst.msk [vmem:[#allocation5 + $0x70] sm:$0xff] %vm2683, %v2616
          %2699 = vst.msk [vmem:[#allocation5 + $0x78] sm:$0xff] %vm2683, %v2618
          %2700 = vst.msk [vmem:[#allocation5 + $0x80] sm:$0xff] %vm2683, %v2620
          %2701 = vst.msk [vmem:[#allocation5 + $0x88] sm:$0xff] %vm2683, %v2622
          %2702 = vst.msk [vmem:[#allocation5 + $0x90] sm:$0xff] %vm2683, %v2624
          %2703 = vst.msk [vmem:[#allocation5 + $0x98] sm:$0xff] %vm2683, %v2626
          %2704 = vst.msk [vmem:[#allocation5 + $0xa0] sm:$0xff] %vm2683, %v2628
          %2705 = vst.msk [vmem:[#allocation5 + $0xa8] sm:$0xff] %vm2683, %v2630
          %2706 = vst.msk [vmem:[#allocation5 + $0xb0] sm:$0xff] %vm2683, %v2632
          %2707 = vst.msk [vmem:[#allocation5 + $0xb8] sm:$0xff] %vm2683, %v2634
          %2708 = vst.msk [vmem:[#allocation5 + $0xc0] sm:$0xff] %vm2683, %v2636
          %2709 = vst.msk [vmem:[#allocation5 + $0xc8] sm:$0xff] %vm2683, %v2638
          %2710 = vst.msk [vmem:[#allocation5 + $0xd0] sm:$0xff] %vm2683, %v2640
          %2711 = vst.msk [vmem:[#allocation5 + $0xd8] sm:$0xff] %vm2683, %v2642
          %2712 = vst.msk [vmem:[#allocation5 + $0xe0] sm:$0xff] %vm2683, %v2644
          %2713 = vst.msk [vmem:[#allocation5 + $0xe8] sm:$0xff] %vm2683, %v2646
          %2714 = vst.msk [vmem:[#allocation5 + $0xf0] sm:$0xff] %vm2683, %v2648
          %2715 = vst.msk [vmem:[#allocation5 + $0xf8] sm:$0xff] %vm2683, %v2650
          %vm2716 = vcmask 1045504
          %v2717 = vrot.slane %v2367, 2
          %v2718 = vrot.slane %v2368, 2
          %v2719 = vsel %vm2716, %v2717, %v2718
          %v2720 = vrot.slane %v2369, 2
          %v2721 = vsel %vm2716, %v2718, %v2720
          %v2722 = vrot.slane %v2370, 2
          %v2723 = vrot.slane %v2371, 2
          %v2724 = vsel %vm2716, %v2722, %v2723
          %v2725 = vrot.slane %v2372, 2
          %v2726 = vsel %vm2716, %v2723, %v2725
          %v2727 = vrot.slane %v2373, 2
          %v2728 = vrot.slane %v2374, 2
          %v2729 = vsel %vm2716, %v2727, %v2728
          %v2730 = vrot.slane %v2375, 2
          %v2731 = vsel %vm2716, %v2728, %v2730
          %v2732 = vrot.slane %v2376, 2
          %v2733 = vrot.slane %v2377, 2
          %v2734 = vsel %vm2716, %v2732, %v2733
          %v2735 = vrot.slane %v2378, 2
          %v2736 = vsel %vm2716, %v2733, %v2735
          %v2737 = vrot.slane %v2379, 2
          %v2738 = vrot.slane %v2380, 2
          %v2739 = vsel %vm2716, %v2737, %v2738
          %v2740 = vrot.slane %v2381, 2
          %v2741 = vsel %vm2716, %v2738, %v2740
          %v2742 = vrot.slane %v2382, 2
          %v2743 = vrot.slane %v2383, 2
          %v2744 = vsel %vm2716, %v2742, %v2743
          %v2745 = vrot.slane %v2384, 2
          %v2746 = vsel %vm2716, %v2743, %v2745
          %v2747 = vrot.slane %v2385, 2
          %v2748 = vrot.slane %v2386, 2
          %v2749 = vsel %vm2716, %v2747, %v2748
          %v2750 = vrot.slane %v2387, 2
          %v2751 = vsel %vm2716, %v2748, %v2750
          %v2752 = vrot.slane %v2388, 2
          %v2753 = vrot.slane %v2389, 2
          %v2754 = vsel %vm2716, %v2752, %v2753
          %v2755 = vrot.slane %v2390, 2
          %v2756 = vsel %vm2716, %v2753, %v2755
          %v2757 = vrot.slane %v2391, 2
          %v2758 = vrot.slane %v2392, 2
          %v2759 = vsel %vm2716, %v2757, %v2758
          %v2760 = vrot.slane %v2393, 2
          %v2761 = vsel %vm2716, %v2758, %v2760
          %v2762 = vrot.slane %v2394, 2
          %v2763 = vrot.slane %v2395, 2
          %v2764 = vsel %vm2716, %v2762, %v2763
          %v2765 = vrot.slane %v2396, 2
          %v2766 = vsel %vm2716, %v2763, %v2765
          %v2767 = vrot.slane %v2397, 2
          %v2768 = vrot.slane %v2398, 2
          %v2769 = vsel %vm2716, %v2767, %v2768
          %v2770 = vrot.slane %v2399, 2
          %v2771 = vsel %vm2716, %v2768, %v2770
          %v2772 = vrot.slane %v2400, 2
          %v2773 = vrot.slane %v2401, 2
          %v2774 = vsel %vm2716, %v2772, %v2773
          %v2775 = vrot.slane %v2402, 2
          %v2776 = vsel %vm2716, %v2773, %v2775
          %v2777 = vrot.slane %v2403, 2
          %v2778 = vrot.slane %v2404, 2
          %v2779 = vsel %vm2716, %v2777, %v2778
          %v2780 = vrot.slane %v2405, 2
          %v2781 = vsel %vm2716, %v2778, %v2780
          %v2782 = vrot.slane %v2406, 2
          %v2783 = vrot.slane %v2407, 2
          %v2784 = vsel %vm2716, %v2782, %v2783
          %v2785 = vrot.slane %v2408, 2
          %v2786 = vsel %vm2716, %v2783, %v2785
          %v2787 = vrot.slane %v2409, 2
          %v2788 = vrot.slane %v2410, 2
          %v2789 = vsel %vm2716, %v2787, %v2788
          %v2790 = vrot.slane %v2411, 2
          %v2791 = vsel %vm2716, %v2788, %v2790
          %v2792 = vrot.slane %v2412, 2
          %v2793 = vrot.slane %v2413, 2
          %v2794 = vsel %vm2716, %v2792, %v2793
          %v2795 = vrot.slane %v2414, 2
          %v2796 = vsel %vm2716, %v2793, %v2795
          %2797 = vrot.lane.b32.xlu0 %v2719, 8
          %v2798 = vpop.permute.xlu0 %2797
          %2799 = vrot.lane.b32.xlu0 %v2721, 8
          %v2800 = vpop.permute.xlu0 %2799
          %2801 = vrot.lane.b32.xlu0 %v2724, 8
          %v2802 = vpop.permute.xlu0 %2801
          %2803 = vrot.lane.b32.xlu0 %v2726, 8
          %v2804 = vpop.permute.xlu0 %2803
          %2805 = vrot.lane.b32.xlu0 %v2729, 8
          %v2806 = vpop.permute.xlu0 %2805
          %2807 = vrot.lane.b32.xlu0 %v2731, 8
          %v2808 = vpop.permute.xlu0 %2807
          %2809 = vrot.lane.b32.xlu0 %v2734, 8
          %v2810 = vpop.permute.xlu0 %2809
          %2811 = vrot.lane.b32.xlu0 %v2736, 8
          %v2812 = vpop.permute.xlu0 %2811
          %2813 = vrot.lane.b32.xlu0 %v2739, 8
          %v2814 = vpop.permute.xlu0 %2813
          %2815 = vrot.lane.b32.xlu0 %v2741, 8
          %v2816 = vpop.permute.xlu0 %2815
          %2817 = vrot.lane.b32.xlu0 %v2744, 8
          %v2818 = vpop.permute.xlu0 %2817
          %2819 = vrot.lane.b32.xlu0 %v2746, 8
          %v2820 = vpop.permute.xlu0 %2819
          %2821 = vrot.lane.b32.xlu0 %v2749, 8
          %v2822 = vpop.permute.xlu0 %2821
          %2823 = vrot.lane.b32.xlu0 %v2751, 8
          %v2824 = vpop.permute.xlu0 %2823
          %2825 = vrot.lane.b32.xlu0 %v2754, 8
          %v2826 = vpop.permute.xlu0 %2825
          %2827 = vrot.lane.b32.xlu0 %v2756, 8
          %v2828 = vpop.permute.xlu0 %2827
          %2829 = vrot.lane.b32.xlu0 %v2759, 8
          %v2830 = vpop.permute.xlu0 %2829
          %2831 = vrot.lane.b32.xlu0 %v2761, 8
          %v2832 = vpop.permute.xlu0 %2831
          %2833 = vrot.lane.b32.xlu0 %v2764, 8
          %v2834 = vpop.permute.xlu0 %2833
          %2835 = vrot.lane.b32.xlu0 %v2766, 8
          %v2836 = vpop.permute.xlu0 %2835
          %2837 = vrot.lane.b32.xlu0 %v2769, 8
          %v2838 = vpop.permute.xlu0 %2837
          %2839 = vrot.lane.b32.xlu0 %v2771, 8
          %v2840 = vpop.permute.xlu0 %2839
          %2841 = vrot.lane.b32.xlu0 %v2774, 8
          %v2842 = vpop.permute.xlu0 %2841
          %2843 = vrot.lane.b32.xlu0 %v2776, 8
          %v2844 = vpop.permute.xlu0 %2843
          %2845 = vrot.lane.b32.xlu0 %v2779, 8
          %v2846 = vpop.permute.xlu0 %2845
          %2847 = vrot.lane.b32.xlu0 %v2781, 8
          %v2848 = vpop.permute.xlu0 %2847
          %2849 = vrot.lane.b32.xlu0 %v2784, 8
          %v2850 = vpop.permute.xlu0 %2849
          %2851 = vrot.lane.b32.xlu0 %v2786, 8
          %v2852 = vpop.permute.xlu0 %2851
          %2853 = vrot.lane.b32.xlu0 %v2789, 8
          %v2854 = vpop.permute.xlu0 %2853
          %2855 = vrot.lane.b32.xlu0 %v2791, 8
          %v2856 = vpop.permute.xlu0 %2855
          %2857 = vrot.lane.b32.xlu0 %v2794, 8
          %v2858 = vpop.permute.xlu0 %2857
          %2859 = vrot.lane.b32.xlu0 %v2796, 8
          %v2860 = vpop.permute.xlu0 %2859
          %vm2893 = vcmask 97344
          %2894 = vst.msk [vmem:[#allocation5] sm:$0xff] %vm2893, %v2798
          %2895 = vst.msk [vmem:[#allocation5 + $0x8] sm:$0xff] %vm2893, %v2800
          %2896 = vst.msk [vmem:[#allocation5 + $0x10] sm:$0xff] %vm2893, %v2802
          %2897 = vst.msk [vmem:[#allocation5 + $0x18] sm:$0xff] %vm2893, %v2804
          %2898 = vst.msk [vmem:[#allocation5 + $0x20] sm:$0xff] %vm2893, %v2806
          %2899 = vst.msk [vmem:[#allocation5 + $0x28] sm:$0xff] %vm2893, %v2808
          %2900 = vst.msk [vmem:[#allocation5 + $0x30] sm:$0xff] %vm2893, %v2810
          %2901 = vst.msk [vmem:[#allocation5 + $0x38] sm:$0xff] %vm2893, %v2812
          %2902 = vst.msk [vmem:[#allocation5 + $0x40] sm:$0xff] %vm2893, %v2814
          %2903 = vst.msk [vmem:[#allocation5 + $0x48] sm:$0xff] %vm2893, %v2816
          %2904 = vst.msk [vmem:[#allocation5 + $0x50] sm:$0xff] %vm2893, %v2818
          %2905 = vst.msk [vmem:[#allocation5 + $0x58] sm:$0xff] %vm2893, %v2820
          %2906 = vst.msk [vmem:[#allocation5 + $0x60] sm:$0xff] %vm2893, %v2822
          %2907 = vst.msk [vmem:[#allocation5 + $0x68] sm:$0xff] %vm2893, %v2824
          %2908 = vst.msk [vmem:[#allocation5 + $0x70] sm:$0xff] %vm2893, %v2826
          %2909 = vst.msk [vmem:[#allocation5 + $0x78] sm:$0xff] %vm2893, %v2828
          %2910 = vst.msk [vmem:[#allocation5 + $0x80] sm:$0xff] %vm2893, %v2830
          %2911 = vst.msk [vmem:[#allocation5 + $0x88] sm:$0xff] %vm2893, %v2832
          %2912 = vst.msk [vmem:[#allocation5 + $0x90] sm:$0xff] %vm2893, %v2834
          %2913 = vst.msk [vmem:[#allocation5 + $0x98] sm:$0xff] %vm2893, %v2836
          %2914 = vst.msk [vmem:[#allocation5 + $0xa0] sm:$0xff] %vm2893, %v2838
          %2915 = vst.msk [vmem:[#allocation5 + $0xa8] sm:$0xff] %vm2893, %v2840
          %2916 = vst.msk [vmem:[#allocation5 + $0xb0] sm:$0xff] %vm2893, %v2842
          %2917 = vst.msk [vmem:[#allocation5 + $0xb8] sm:$0xff] %vm2893, %v2844
          %2918 = vst.msk [vmem:[#allocation5 + $0xc0] sm:$0xff] %vm2893, %v2846
          %2919 = vst.msk [vmem:[#allocation5 + $0xc8] sm:$0xff] %vm2893, %v2848
          %2920 = vst.msk [vmem:[#allocation5 + $0xd0] sm:$0xff] %vm2893, %v2850
          %2921 = vst.msk [vmem:[#allocation5 + $0xd8] sm:$0xff] %vm2893, %v2852
          %2922 = vst.msk [vmem:[#allocation5 + $0xe0] sm:$0xff] %vm2893, %v2854
          %2923 = vst.msk [vmem:[#allocation5 + $0xe8] sm:$0xff] %vm2893, %v2856
          %2924 = vst.msk [vmem:[#allocation5 + $0xf0] sm:$0xff] %vm2893, %v2858
          %2925 = vst.msk [vmem:[#allocation5 + $0xf8] sm:$0xff] %vm2893, %v2860
          %2928 = vrot.lane.b32.xlu0 %v2370, 12
          %v2929 = vpop.permute.xlu0 %2928
          %2930 = vrot.lane.b32.xlu0 %v2371, 12
          %v2931 = vpop.permute.xlu0 %2930
          %2932 = vrot.lane.b32.xlu0 %v2373, 12
          %v2933 = vpop.permute.xlu0 %2932
          %2934 = vrot.lane.b32.xlu0 %v2374, 12
          %v2935 = vpop.permute.xlu0 %2934
          %2936 = vrot.lane.b32.xlu0 %v2376, 12
          %v2937 = vpop.permute.xlu0 %2936
          %2938 = vrot.lane.b32.xlu0 %v2377, 12
          %v2939 = vpop.permute.xlu0 %2938
          %2940 = vrot.lane.b32.xlu0 %v2379, 12
          %v2941 = vpop.permute.xlu0 %2940
          %2942 = vrot.lane.b32.xlu0 %v2380, 12
          %v2943 = vpop.permute.xlu0 %2942
          %2944 = vrot.lane.b32.xlu0 %v2382, 12
          %v2945 = vpop.permute.xlu0 %2944
          %2946 = vrot.lane.b32.xlu0 %v2383, 12
          %v2947 = vpop.permute.xlu0 %2946
          %2948 = vrot.lane.b32.xlu0 %v2385, 12
          %v2949 = vpop.permute.xlu0 %2948
          %2950 = vrot.lane.b32.xlu0 %v2386, 12
          %v2951 = vpop.permute.xlu0 %2950
          %2952 = vrot.lane.b32.xlu0 %v2388, 12
          %v2953 = vpop.permute.xlu0 %2952
          %2954 = vrot.lane.b32.xlu0 %v2389, 12
          %v2955 = vpop.permute.xlu0 %2954
          %2956 = vrot.lane.b32.xlu0 %v2391, 12
          %v2957 = vpop.permute.xlu0 %2956
          %2958 = vrot.lane.b32.xlu0 %v2392, 12
          %v2959 = vpop.permute.xlu0 %2958
          %2960 = vrot.lane.b32.xlu0 %v2394, 12
          %v2961 = vpop.permute.xlu0 %2960
          %2962 = vrot.lane.b32.xlu0 %v2395, 12
          %v2963 = vpop.permute.xlu0 %2962
          %2964 = vrot.lane.b32.xlu0 %v2397, 12
          %v2965 = vpop.permute.xlu0 %2964
          %2966 = vrot.lane.b32.xlu0 %v2398, 12
          %v2967 = vpop.permute.xlu0 %2966
          %2968 = vrot.lane.b32.xlu0 %v2400, 12
          %v2969 = vpop.permute.xlu0 %2968
          %2970 = vrot.lane.b32.xlu0 %v2401, 12
          %v2971 = vpop.permute.xlu0 %2970
          %2972 = vrot.lane.b32.xlu0 %v2403, 12
          %v2973 = vpop.permute.xlu0 %2972
          %2974 = vrot.lane.b32.xlu0 %v2404, 12
          %v2975 = vpop.permute.xlu0 %2974
          %2976 = vrot.lane.b32.xlu0 %v2406, 12
          %v2977 = vpop.permute.xlu0 %2976
          %2978 = vrot.lane.b32.xlu0 %v2407, 12
          %v2979 = vpop.permute.xlu0 %2978
          %2980 = vrot.lane.b32.xlu0 %v2409, 12
          %v2981 = vpop.permute.xlu0 %2980
          %2982 = vrot.lane.b32.xlu0 %v2410, 12
          %v2983 = vpop.permute.xlu0 %2982
          %2984 = vrot.lane.b32.xlu0 %v2412, 12
          %v2985 = vpop.permute.xlu0 %2984
          %2986 = vrot.lane.b32.xlu0 %v2413, 12
          %v2987 = vpop.permute.xlu0 %2986
          %2988 = vrot.lane.b32.xlu0 %v2415, 12
          %v2989 = vpop.permute.xlu0 %2988
          %2990 = vrot.lane.b32.xlu0 %v2416, 12
          %v2991 = vpop.permute.xlu0 %2990
          %vm3024 = vcmask 130144
          %3025 = vst.msk [vmem:[#allocation5] sm:$0xff] %vm3024, %v2929
          %3026 = vst.msk [vmem:[#allocation5 + $0x8] sm:$0xff] %vm3024, %v2931
          %3027 = vst.msk [vmem:[#allocation5 + $0x10] sm:$0xff] %vm3024, %v2933
          %3028 = vst.msk [vmem:[#allocation5 + $0x18] sm:$0xff] %vm3024, %v2935
          %3029 = vst.msk [vmem:[#allocation5 + $0x20] sm:$0xff] %vm3024, %v2937
          %3030 = vst.msk [vmem:[#allocation5 + $0x28] sm:$0xff] %vm3024, %v2939
          %3031 = vst.msk [vmem:[#allocation5 + $0x30] sm:$0xff] %vm3024, %v2941
          %3032 = vst.msk [vmem:[#allocation5 + $0x38] sm:$0xff] %vm3024, %v2943
          %3033 = vst.msk [vmem:[#allocation5 + $0x40] sm:$0xff] %vm3024, %v2945
          %3034 = vst.msk [vmem:[#allocation5 + $0x48] sm:$0xff] %vm3024, %v2947
          %3035 = vst.msk [vmem:[#allocation5 + $0x50] sm:$0xff] %vm3024, %v2949
          %3036 = vst.msk [vmem:[#allocation5 + $0x58] sm:$0xff] %vm3024, %v2951
          %3037 = vst.msk [vmem:[#allocation5 + $0x60] sm:$0xff] %vm3024, %v2953
          %3038 = vst.msk [vmem:[#allocation5 + $0x68] sm:$0xff] %vm3024, %v2955
          %3039 = vst.msk [vmem:[#allocation5 + $0x70] sm:$0xff] %vm3024, %v2957
          %3040 = vst.msk [vmem:[#allocation5 + $0x78] sm:$0xff] %vm3024, %v2959
          %3041 = vst.msk [vmem:[#allocation5 + $0x80] sm:$0xff] %vm3024, %v2961
          %3042 = vst.msk [vmem:[#allocation5 + $0x88] sm:$0xff] %vm3024, %v2963
          %3043 = vst.msk [vmem:[#allocation5 + $0x90] sm:$0xff] %vm3024, %v2965
          %3044 = vst.msk [vmem:[#allocation5 + $0x98] sm:$0xff] %vm3024, %v2967
          %3045 = vst.msk [vmem:[#allocation5 + $0xa0] sm:$0xff] %vm3024, %v2969
          %3046 = vst.msk [vmem:[#allocation5 + $0xa8] sm:$0xff] %vm3024, %v2971
          %3047 = vst.msk [vmem:[#allocation5 + $0xb0] sm:$0xff] %vm3024, %v2973
          %3048 = vst.msk [vmem:[#allocation5 + $0xb8] sm:$0xff] %vm3024, %v2975
          %3049 = vst.msk [vmem:[#allocation5 + $0xc0] sm:$0xff] %vm3024, %v2977
          %3050 = vst.msk [vmem:[#allocation5 + $0xc8] sm:$0xff] %vm3024, %v2979
          %3051 = vst.msk [vmem:[#allocation5 + $0xd0] sm:$0xff] %vm3024, %v2981
          %3052 = vst.msk [vmem:[#allocation5 + $0xd8] sm:$0xff] %vm3024, %v2983
          %3053 = vst.msk [vmem:[#allocation5 + $0xe0] sm:$0xff] %vm3024, %v2985
          %3054 = vst.msk [vmem:[#allocation5 + $0xe8] sm:$0xff] %vm3024, %v2987
          %3055 = vst.msk [vmem:[#allocation5 + $0xf0] sm:$0xff] %vm3024, %v2989
          %3056 = vst.msk [vmem:[#allocation5 + $0xf8] sm:$0xff] %vm3024, %v2991
          %v3058 = vrot.slane %v2415, 1
          %v3059 = vrot.slane %v2416, 1
          %v3060 = vsel %vm2506, %v3058, %v3059
          %v3061 = vrot.slane %v2417, 1
          %v3062 = vsel %vm2506, %v3059, %v3061
          %3063 = vrot.lane.b32.xlu0 %v2514, 16
          %v3064 = vpop.permute.xlu0 %3063
          %3065 = vrot.lane.b32.xlu0 %v2516, 16
          %v3066 = vpop.permute.xlu0 %3065
          %3067 = vrot.lane.b32.xlu0 %v2519, 16
          %v3068 = vpop.permute.xlu0 %3067
          %3069 = vrot.lane.b32.xlu0 %v2521, 16
          %v3070 = vpop.permute.xlu0 %3069
          %3071 = vrot.lane.b32.xlu0 %v2524, 16
          %v3072 = vpop.permute.xlu0 %3071
          %3073 = vrot.lane.b32.xlu0 %v2526, 16
          %v3074 = vpop.permute.xlu0 %3073
          %3075 = vrot.lane.b32.xlu0 %v2529, 16
          %v3076 = vpop.permute.xlu0 %3075
          %3077 = vrot.lane.b32.xlu0 %v2531, 16
          %v3078 = vpop.permute.xlu0 %3077
          %3079 = vrot.lane.b32.xlu0 %v2534, 16
          %v3080 = vpop.permute.xlu0 %3079
          %3081 = vrot.lane.b32.xlu0 %v2536, 16
          %v3082 = vpop.permute.xlu0 %3081
          %3083 = vrot.lane.b32.xlu0 %v2539, 16
          %v3084 = vpop.permute.xlu0 %3083
          %3085 = vrot.lane.b32.xlu0 %v2541, 16
          %v3086 = vpop.permute.xlu0 %3085
          %3087 = vrot.lane.b32.xlu0 %v2544, 16
          %v3088 = vpop.permute.xlu0 %3087
          %3089 = vrot.lane.b32.xlu0 %v2546, 16
          %v3090 = vpop.permute.xlu0 %3089
          %3091 = vrot.lane.b32.xlu0 %v2549, 16
          %v3092 = vpop.permute.xlu0 %3091
          %3093 = vrot.lane.b32.xlu0 %v2551, 16
          %v3094 = vpop.permute.xlu0 %3093
          %3095 = vrot.lane.b32.xlu0 %v2554, 16
          %v3096 = vpop.permute.xlu0 %3095
          %3097 = vrot.lane.b32.xlu0 %v2556, 16
          %v3098 = vpop.permute.xlu0 %3097
          %3099 = vrot.lane.b32.xlu0 %v2559, 16
          %v3100 = vpop.permute.xlu0 %3099
          %3101 = vrot.lane.b32.xlu0 %v2561, 16
          %v3102 = vpop.permute.xlu0 %3101
          %3103 = vrot.lane.b32.xlu0 %v2564, 16
          %v3104 = vpop.permute.xlu0 %3103
          %3105 = vrot.lane.b32.xlu0 %v2566, 16
          %v3106 = vpop.permute.xlu0 %3105
          %3107 = vrot.lane.b32.xlu0 %v2569, 16
          %v3108 = vpop.permute.xlu0 %3107
          %3109 = vrot.lane.b32.xlu0 %v2571, 16
          %v3110 = vpop.permute.xlu0 %3109
          %3111 = vrot.lane.b32.xlu0 %v2574, 16
          %v3112 = vpop.permute.xlu0 %3111
          %3113 = vrot.lane.b32.xlu0 %v2576, 16
          %v3114 = vpop.permute.xlu0 %3113
          %3115 = vrot.lane.b32.xlu0 %v2579, 16
          %v3116 = vpop.permute.xlu0 %3115
          %3117 = vrot.lane.b32.xlu0 %v2581, 16
          %v3118 = vpop.permute.xlu0 %3117
          %3119 = vrot.lane.b32.xlu0 %v2584, 16
          %v3120 = vpop.permute.xlu0 %3119
          %3121 = vrot.lane.b32.xlu0 %v2586, 16
          %v3122 = vpop.permute.xlu0 %3121
          %3123 = vrot.lane.b32.xlu0 %v3060, 16
          %v3124 = vpop.permute.xlu0 %3123
          %3125 = vrot.lane.b32.xlu0 %v3062, 16
          %v3126 = vpop.permute.xlu0 %3125
          %vm3159 = vcmask 162944
          %3160 = vst.msk [vmem:[#allocation5] sm:$0xff] %vm3159, %v3064
          %3161 = vst.msk [vmem:[#allocation5 + $0x8] sm:$0xff] %vm3159, %v3066
          %3162 = vst.msk [vmem:[#allocation5 + $0x10] sm:$0xff] %vm3159, %v3068
          %3163 = vst.msk [vmem:[#allocation5 + $0x18] sm:$0xff] %vm3159, %v3070
          %3164 = vst.msk [vmem:[#allocation5 + $0x20] sm:$0xff] %vm3159, %v3072
          %3165 = vst.msk [vmem:[#allocation5 + $0x28] sm:$0xff] %vm3159, %v3074
          %3166 = vst.msk [vmem:[#allocation5 + $0x30] sm:$0xff] %vm3159, %v3076
          %3167 = vst.msk [vmem:[#allocation5 + $0x38] sm:$0xff] %vm3159, %v3078
          %3168 = vst.msk [vmem:[#allocation5 + $0x40] sm:$0xff] %vm3159, %v3080
          %3169 = vst.msk [vmem:[#allocation5 + $0x48] sm:$0xff] %vm3159, %v3082
          %3170 = vst.msk [vmem:[#allocation5 + $0x50] sm:$0xff] %vm3159, %v3084
          %3171 = vst.msk [vmem:[#allocation5 + $0x58] sm:$0xff] %vm3159, %v3086
          %3172 = vst.msk [vmem:[#allocation5 + $0x60] sm:$0xff] %vm3159, %v3088
          %3173 = vst.msk [vmem:[#allocation5 + $0x68] sm:$0xff] %vm3159, %v3090
          %3174 = vst.msk [vmem:[#allocation5 + $0x70] sm:$0xff] %vm3159, %v3092
          %3175 = vst.msk [vmem:[#allocation5 + $0x78] sm:$0xff] %vm3159, %v3094
          %3176 = vst.msk [vmem:[#allocation5 + $0x80] sm:$0xff] %vm3159, %v3096
          %3177 = vst.msk [vmem:[#allocation5 + $0x88] sm:$0xff] %vm3159, %v3098
          %3178 = vst.msk [vmem:[#allocation5 + $0x90] sm:$0xff] %vm3159, %v3100
          %3179 = vst.msk [vmem:[#allocation5 + $0x98] sm:$0xff] %vm3159, %v3102
          %3180 = vst.msk [vmem:[#allocation5 + $0xa0] sm:$0xff] %vm3159, %v3104
          %3181 = vst.msk [vmem:[#allocation5 + $0xa8] sm:$0xff] %vm3159, %v3106
          %3182 = vst.msk [vmem:[#allocation5 + $0xb0] sm:$0xff] %vm3159, %v3108
          %3183 = vst.msk [vmem:[#allocation5 + $0xb8] sm:$0xff] %vm3159, %v3110
          %3184 = vst.msk [vmem:[#allocation5 + $0xc0] sm:$0xff] %vm3159, %v3112
          %3185 = vst.msk [vmem:[#allocation5 + $0xc8] sm:$0xff] %vm3159, %v3114
          %3186 = vst.msk [vmem:[#allocation5 + $0xd0] sm:$0xff] %vm3159, %v3116
          %3187 = vst.msk [vmem:[#allocation5 + $0xd8] sm:$0xff] %vm3159, %v3118
          %3188 = vst.msk [vmem:[#allocation5 + $0xe0] sm:$0xff] %vm3159, %v3120
          %3189 = vst.msk [vmem:[#allocation5 + $0xe8] sm:$0xff] %vm3159, %v3122
          %3190 = vst.msk [vmem:[#allocation5 + $0xf0] sm:$0xff] %vm3159, %v3124
          %3191 = vst.msk [vmem:[#allocation5 + $0xf8] sm:$0xff] %vm3159, %v3126
          %v3192 = vrot.slane %v2415, 2
          %v3193 = vrot.slane %v2416, 2
          %v3194 = vsel %vm2716, %v3192, %v3193
          %v3195 = vrot.slane %v2417, 2
          %v3196 = vsel %vm2716, %v3193, %v3195
          %3197 = vrot.lane.b32.xlu0 %v2724, 20
          %v3198 = vpop.permute.xlu0 %3197
          %3199 = vrot.lane.b32.xlu0 %v2726, 20
          %v3200 = vpop.permute.xlu0 %3199
          %3201 = vrot.lane.b32.xlu0 %v2729, 20
          %v3202 = vpop.permute.xlu0 %3201
          %3203 = vrot.lane.b32.xlu0 %v2731, 20
          %v3204 = vpop.permute.xlu0 %3203
          %3205 = vrot.lane.b32.xlu0 %v2734, 20
          %v3206 = vpop.permute.xlu0 %3205
          %3207 = vrot.lane.b32.xlu0 %v2736, 20
          %v3208 = vpop.permute.xlu0 %3207
          %3209 = vrot.lane.b32.xlu0 %v2739, 20
          %v3210 = vpop.permute.xlu0 %3209
          %3211 = vrot.lane.b32.xlu0 %v2741, 20
          %v3212 = vpop.permute.xlu0 %3211
          %3213 = vrot.lane.b32.xlu0 %v2744, 20
          %v3214 = vpop.permute.xlu0 %3213
          %3215 = vrot.lane.b32.xlu0 %v2746, 20
          %v3216 = vpop.permute.xlu0 %3215
          %3217 = vrot.lane.b32.xlu0 %v2749, 20
          %v3218 = vpop.permute.xlu0 %3217
          %3219 = vrot.lane.b32.xlu0 %v2751, 20
          %v3220 = vpop.permute.xlu0 %3219
          %3221 = vrot.lane.b32.xlu0 %v2754, 20
          %v3222 = vpop.permute.xlu0 %3221
          %3223 = vrot.lane.b32.xlu0 %v2756, 20
          %v3224 = vpop.permute.xlu0 %3223
          %3225 = vrot.lane.b32.xlu0 %v2759, 20
          %v3226 = vpop.permute.xlu0 %3225
          %3227 = vrot.lane.b32.xlu0 %v2761, 20
          %v3228 = vpop.permute.xlu0 %3227
          %3229 = vrot.lane.b32.xlu0 %v2764, 20
          %v3230 = vpop.permute.xlu0 %3229
          %3231 = vrot.lane.b32.xlu0 %v2766, 20
          %v3232 = vpop.permute.xlu0 %3231
          %3233 = vrot.lane.b32.xlu0 %v2769, 20
          %v3234 = vpop.permute.xlu0 %3233
          %3235 = vrot.lane.b32.xlu0 %v2771, 20
          %v3236 = vpop.permute.xlu0 %3235
          %3237 = vrot.lane.b32.xlu0 %v2774, 20
          %v3238 = vpop.permute.xlu0 %3237
          %3239 = vrot.lane.b32.xlu0 %v2776, 20
          %v3240 = vpop.permute.xlu0 %3239
          %3241 = vrot.lane.b32.xlu0 %v2779, 20
          %v3242 = vpop.permute.xlu0 %3241
          %3243 = vrot.lane.b32.xlu0 %v2781, 20
          %v3244 = vpop.permute.xlu0 %3243
          %3245 = vrot.lane.b32.xlu0 %v2784, 20
          %v3246 = vpop.permute.xlu0 %3245
          %3247 = vrot.lane.b32.xlu0 %v2786, 20
          %v3248 = vpop.permute.xlu0 %3247
          %3249 = vrot.lane.b32.xlu0 %v2789, 20
          %v3250 = vpop.permute.xlu0 %3249
          %3251 = vrot.lane.b32.xlu0 %v2791, 20
          %v3252 = vpop.permute.xlu0 %3251
          %3253 = vrot.lane.b32.xlu0 %v2794, 20
          %v3254 = vpop.permute.xlu0 %3253
          %3255 = vrot.lane.b32.xlu0 %v2796, 20
          %v3256 = vpop.permute.xlu0 %3255
          %3257 = vrot.lane.b32.xlu0 %v3194, 20
          %v3258 = vpop.permute.xlu0 %3257
          %3259 = vrot.lane.b32.xlu0 %v3196, 20
          %v3260 = vpop.permute.xlu0 %3259
          %vm3293 = vcmask 195744
          %3294 = vst.msk [vmem:[#allocation5] sm:$0xff] %vm3293, %v3198
          %3295 = vst.msk [vmem:[#allocation5 + $0x8] sm:$0xff] %vm3293, %v3200
          %3296 = vst.msk [vmem:[#allocation5 + $0x10] sm:$0xff] %vm3293, %v3202
          %3297 = vst.msk [vmem:[#allocation5 + $0x18] sm:$0xff] %vm3293, %v3204
          %3298 = vst.msk [vmem:[#allocation5 + $0x20] sm:$0xff] %vm3293, %v3206
          %3299 = vst.msk [vmem:[#allocation5 + $0x28] sm:$0xff] %vm3293, %v3208
          %3300 = vst.msk [vmem:[#allocation5 + $0x30] sm:$0xff] %vm3293, %v3210
          %3301 = vst.msk [vmem:[#allocation5 + $0x38] sm:$0xff] %vm3293, %v3212
          %3302 = vst.msk [vmem:[#allocation5 + $0x40] sm:$0xff] %vm3293, %v3214
          %3303 = vst.msk [vmem:[#allocation5 + $0x48] sm:$0xff] %vm3293, %v3216
          %3304 = vst.msk [vmem:[#allocation5 + $0x50] sm:$0xff] %vm3293, %v3218
          %3305 = vst.msk [vmem:[#allocation5 + $0x58] sm:$0xff] %vm3293, %v3220
          %3306 = vst.msk [vmem:[#allocation5 + $0x60] sm:$0xff] %vm3293, %v3222
          %3307 = vst.msk [vmem:[#allocation5 + $0x68] sm:$0xff] %vm3293, %v3224
          %3308 = vst.msk [vmem:[#allocation5 + $0x70] sm:$0xff] %vm3293, %v3226
          %3309 = vst.msk [vmem:[#allocation5 + $0x78] sm:$0xff] %vm3293, %v3228
          %3310 = vst.msk [vmem:[#allocation5 + $0x80] sm:$0xff] %vm3293, %v3230
          %3311 = vst.msk [vmem:[#allocation5 + $0x88] sm:$0xff] %vm3293, %v3232
          %3312 = vst.msk [vmem:[#allocation5 + $0x90] sm:$0xff] %vm3293, %v3234
          %3313 = vst.msk [vmem:[#allocation5 + $0x98] sm:$0xff] %vm3293, %v3236
          %3314 = vst.msk [vmem:[#allocation5 + $0xa0] sm:$0xff] %vm3293, %v3238
          %3315 = vst.msk [vmem:[#allocation5 + $0xa8] sm:$0xff] %vm3293, %v3240
          %3316 = vst.msk [vmem:[#allocation5 + $0xb0] sm:$0xff] %vm3293, %v3242
          %3317 = vst.msk [vmem:[#allocation5 + $0xb8] sm:$0xff] %vm3293, %v3244
          %3318 = vst.msk [vmem:[#allocation5 + $0xc0] sm:$0xff] %vm3293, %v3246
          %3319 = vst.msk [vmem:[#allocation5 + $0xc8] sm:$0xff] %vm3293, %v3248
          %3320 = vst.msk [vmem:[#allocation5 + $0xd0] sm:$0xff] %vm3293, %v3250
          %3321 = vst.msk [vmem:[#allocation5 + $0xd8] sm:$0xff] %vm3293, %v3252
          %3322 = vst.msk [vmem:[#allocation5 + $0xe0] sm:$0xff] %vm3293, %v3254
          %3323 = vst.msk [vmem:[#allocation5 + $0xe8] sm:$0xff] %vm3293, %v3256
          %3324 = vst.msk [vmem:[#allocation5 + $0xf0] sm:$0xff] %vm3293, %v3258
          %3325 = vst.msk [vmem:[#allocation5 + $0xf8] sm:$0xff] %vm3293, %v3260
          %3328 = vrot.lane.b32.xlu0 %v2373, 24
          %v3329 = vpop.permute.xlu0 %3328
          %3330 = vrot.lane.b32.xlu0 %v2374, 24
          %v3331 = vpop.permute.xlu0 %3330
          %3332 = vrot.lane.b32.xlu0 %v2376, 24
          %v3333 = vpop.permute.xlu0 %3332
          %3334 = vrot.lane.b32.xlu0 %v2377, 24
          %v3335 = vpop.permute.xlu0 %3334
          %3336 = vrot.lane.b32.xlu0 %v2379, 24
          %v3337 = vpop.permute.xlu0 %3336
          %3338 = vrot.lane.b32.xlu0 %v2380, 24
          %v3339 = vpop.permute.xlu0 %3338
          %3340 = vrot.lane.b32.xlu0 %v2382, 24
          %v3341 = vpop.permute.xlu0 %3340
          %3342 = vrot.lane.b32.xlu0 %v2383, 24
          %v3343 = vpop.permute.xlu0 %3342
          %3344 = vrot.lane.b32.xlu0 %v2385, 24
          %v3345 = vpop.permute.xlu0 %3344
          %3346 = vrot.lane.b32.xlu0 %v2386, 24
          %v3347 = vpop.permute.xlu0 %3346
          %3348 = vrot.lane.b32.xlu0 %v2388, 24
          %v3349 = vpop.permute.xlu0 %3348
          %3350 = vrot.lane.b32.xlu0 %v2389, 24
          %v3351 = vpop.permute.xlu0 %3350
          %3352 = vrot.lane.b32.xlu0 %v2391, 24
          %v3353 = vpop.permute.xlu0 %3352
          %3354 = vrot.lane.b32.xlu0 %v2392, 24
          %v3355 = vpop.permute.xlu0 %3354
          %3356 = vrot.lane.b32.xlu0 %v2394, 24
          %v3357 = vpop.permute.xlu0 %3356
          %3358 = vrot.lane.b32.xlu0 %v2395, 24
          %v3359 = vpop.permute.xlu0 %3358
          %3360 = vrot.lane.b32.xlu0 %v2397, 24
          %v3361 = vpop.permute.xlu0 %3360
          %3362 = vrot.lane.b32.xlu0 %v2398, 24
          %v3363 = vpop.permute.xlu0 %3362
          %3364 = vrot.lane.b32.xlu0 %v2400, 24
          %v3365 = vpop.permute.xlu0 %3364
          %3366 = vrot.lane.b32.xlu0 %v2401, 24
          %v3367 = vpop.permute.xlu0 %3366
          %3368 = vrot.lane.b32.xlu0 %v2403, 24
          %v3369 = vpop.permute.xlu0 %3368
          %3370 = vrot.lane.b32.xlu0 %v2404, 24
          %v3371 = vpop.permute.xlu0 %3370
          %3372 = vrot.lane.b32.xlu0 %v2406, 24
          %v3373 = vpop.permute.xlu0 %3372
          %3374 = vrot.lane.b32.xlu0 %v2407, 24
          %v3375 = vpop.permute.xlu0 %3374
          %3376 = vrot.lane.b32.xlu0 %v2409, 24
          %v3377 = vpop.permute.xlu0 %3376
          %3378 = vrot.lane.b32.xlu0 %v2410, 24
          %v3379 = vpop.permute.xlu0 %3378
          %3380 = vrot.lane.b32.xlu0 %v2412, 24
          %v3381 = vpop.permute.xlu0 %3380
          %3382 = vrot.lane.b32.xlu0 %v2413, 24
          %v3383 = vpop.permute.xlu0 %3382
          %3384 = vrot.lane.b32.xlu0 %v2415, 24
          %v3385 = vpop.permute.xlu0 %3384
          %3386 = vrot.lane.b32.xlu0 %v2416, 24
          %v3387 = vpop.permute.xlu0 %3386
          %3388 = vrot.lane.b32.xlu0 %v2418, 24
          %v3389 = vpop.permute.xlu0 %3388
          %3390 = vrot.lane.b32.xlu0 %v2419, 24
          %v3391 = vpop.permute.xlu0 %3390
          %vm3424 = vcmask 228544
          %3425 = vst.msk [vmem:[#allocation5] sm:$0xff] %vm3424, %v3329
          %3426 = vst.msk [vmem:[#allocation5 + $0x8] sm:$0xff] %vm3424, %v3331
          %3427 = vst.msk [vmem:[#allocation5 + $0x10] sm:$0xff] %vm3424, %v3333
          %3428 = vst.msk [vmem:[#allocation5 + $0x18] sm:$0xff] %vm3424, %v3335
          %3429 = vst.msk [vmem:[#allocation5 + $0x20] sm:$0xff] %vm3424, %v3337
          %3430 = vst.msk [vmem:[#allocation5 + $0x28] sm:$0xff] %vm3424, %v3339
          %3431 = vst.msk [vmem:[#allocation5 + $0x30] sm:$0xff] %vm3424, %v3341
          %3432 = vst.msk [vmem:[#allocation5 + $0x38] sm:$0xff] %vm3424, %v3343
          %3433 = vst.msk [vmem:[#allocation5 + $0x40] sm:$0xff] %vm3424, %v3345
          %3434 = vst.msk [vmem:[#allocation5 + $0x48] sm:$0xff] %vm3424, %v3347
          %3435 = vst.msk [vmem:[#allocation5 + $0x50] sm:$0xff] %vm3424, %v3349
          %3436 = vst.msk [vmem:[#allocation5 + $0x58] sm:$0xff] %vm3424, %v3351
          %3437 = vst.msk [vmem:[#allocation5 + $0x60] sm:$0xff] %vm3424, %v3353
          %3438 = vst.msk [vmem:[#allocation5 + $0x68] sm:$0xff] %vm3424, %v3355
          %3439 = vst.msk [vmem:[#allocation5 + $0x70] sm:$0xff] %vm3424, %v3357
          %3440 = vst.msk [vmem:[#allocation5 + $0x78] sm:$0xff] %vm3424, %v3359
          %3441 = vst.msk [vmem:[#allocation5 + $0x80] sm:$0xff] %vm3424, %v3361
          %3442 = vst.msk [vmem:[#allocation5 + $0x88] sm:$0xff] %vm3424, %v3363
          %3443 = vst.msk [vmem:[#allocation5 + $0x90] sm:$0xff] %vm3424, %v3365
          %3444 = vst.msk [vmem:[#allocation5 + $0x98] sm:$0xff] %vm3424, %v3367
          %3445 = vst.msk [vmem:[#allocation5 + $0xa0] sm:$0xff] %vm3424, %v3369
          %3446 = vst.msk [vmem:[#allocation5 + $0xa8] sm:$0xff] %vm3424, %v3371
          %3447 = vst.msk [vmem:[#allocation5 + $0xb0] sm:$0xff] %vm3424, %v3373
          %3448 = vst.msk [vmem:[#allocation5 + $0xb8] sm:$0xff] %vm3424, %v3375
          %3449 = vst.msk [vmem:[#allocation5 + $0xc0] sm:$0xff] %vm3424, %v3377
          %3450 = vst.msk [vmem:[#allocation5 + $0xc8] sm:$0xff] %vm3424, %v3379
          %3451 = vst.msk [vmem:[#allocation5 + $0xd0] sm:$0xff] %vm3424, %v3381
          %3452 = vst.msk [vmem:[#allocation5 + $0xd8] sm:$0xff] %vm3424, %v3383
          %3453 = vst.msk [vmem:[#allocation5 + $0xe0] sm:$0xff] %vm3424, %v3385
          %3454 = vst.msk [vmem:[#allocation5 + $0xe8] sm:$0xff] %vm3424, %v3387
          %3455 = vst.msk [vmem:[#allocation5 + $0xf0] sm:$0xff] %vm3424, %v3389
          %3456 = vst.msk [vmem:[#allocation5 + $0xf8] sm:$0xff] %vm3424, %v3391
          %v3458 = vrot.slane %v2418, 1
          %v3459 = vrot.slane %v2419, 1
          %v3460 = vsel %vm2506, %v3458, %v3459
          %v3461 = vrot.slane %v2420, 1
          %v3462 = vsel %vm2506, %v3459, %v3461
          %3463 = vrot.lane.b32.xlu0 %v2519, 28
          %v3464 = vpop.permute.xlu0 %3463
          %3465 = vrot.lane.b32.xlu0 %v2521, 28
          %v3466 = vpop.permute.xlu0 %3465
          %3467 = vrot.lane.b32.xlu0 %v2524, 28
          %v3468 = vpop.permute.xlu0 %3467
          %3469 = vrot.lane.b32.xlu0 %v2526, 28
          %v3470 = vpop.permute.xlu0 %3469
          %3471 = vrot.lane.b32.xlu0 %v2529, 28
          %v3472 = vpop.permute.xlu0 %3471
          %3473 = vrot.lane.b32.xlu0 %v2531, 28
          %v3474 = vpop.permute.xlu0 %3473
          %3475 = vrot.lane.b32.xlu0 %v2534, 28
          %v3476 = vpop.permute.xlu0 %3475
          %3477 = vrot.lane.b32.xlu0 %v2536, 28
          %v3478 = vpop.permute.xlu0 %3477
          %3479 = vrot.lane.b32.xlu0 %v2539, 28
          %v3480 = vpop.permute.xlu0 %3479
          %3481 = vrot.lane.b32.xlu0 %v2541, 28
          %v3482 = vpop.permute.xlu0 %3481
          %3483 = vrot.lane.b32.xlu0 %v2544, 28
          %v3484 = vpop.permute.xlu0 %3483
          %3485 = vrot.lane.b32.xlu0 %v2546, 28
          %v3486 = vpop.permute.xlu0 %3485
          %3487 = vrot.lane.b32.xlu0 %v2549, 28
          %v3488 = vpop.permute.xlu0 %3487
          %3489 = vrot.lane.b32.xlu0 %v2551, 28
          %v3490 = vpop.permute.xlu0 %3489
          %3491 = vrot.lane.b32.xlu0 %v2554, 28
          %v3492 = vpop.permute.xlu0 %3491
          %3493 = vrot.lane.b32.xlu0 %v2556, 28
          %v3494 = vpop.permute.xlu0 %3493
          %3495 = vrot.lane.b32.xlu0 %v2559, 28
          %v3496 = vpop.permute.xlu0 %3495
          %3497 = vrot.lane.b32.xlu0 %v2561, 28
          %v3498 = vpop.permute.xlu0 %3497
          %3499 = vrot.lane.b32.xlu0 %v2564, 28
          %v3500 = vpop.permute.xlu0 %3499
          %3501 = vrot.lane.b32.xlu0 %v2566, 28
          %v3502 = vpop.permute.xlu0 %3501
          %3503 = vrot.lane.b32.xlu0 %v2569, 28
          %v3504 = vpop.permute.xlu0 %3503
          %3505 = vrot.lane.b32.xlu0 %v2571, 28
          %v3506 = vpop.permute.xlu0 %3505
          %3507 = vrot.lane.b32.xlu0 %v2574, 28
          %v3508 = vpop.permute.xlu0 %3507
          %3509 = vrot.lane.b32.xlu0 %v2576, 28
          %v3510 = vpop.permute.xlu0 %3509
          %3511 = vrot.lane.b32.xlu0 %v2579, 28
          %v3512 = vpop.permute.xlu0 %3511
          %3513 = vrot.lane.b32.xlu0 %v2581, 28
          %v3514 = vpop.permute.xlu0 %3513
          %3515 = vrot.lane.b32.xlu0 %v2584, 28
          %v3516 = vpop.permute.xlu0 %3515
          %3517 = vrot.lane.b32.xlu0 %v2586, 28
          %v3518 = vpop.permute.xlu0 %3517
          %3519 = vrot.lane.b32.xlu0 %v3060, 28
          %v3520 = vpop.permute.xlu0 %3519
          %3521 = vrot.lane.b32.xlu0 %v3062, 28
          %v3522 = vpop.permute.xlu0 %3521
          %3523 = vrot.lane.b32.xlu0 %v3460, 28
          %v3524 = vpop.permute.xlu0 %3523
          %3525 = vrot.lane.b32.xlu0 %v3462, 28
          %v3526 = vpop.permute.xlu0 %3525
          %vm3559 = vcmask 261344
          %3560 = vst.msk [vmem:[#allocation5] sm:$0xff] %vm3559, %v3464
          %3561 = vst.msk [vmem:[#allocation5 + $0x8] sm:$0xff] %vm3559, %v3466
          %3562 = vst.msk [vmem:[#allocation5 + $0x10] sm:$0xff] %vm3559, %v3468
          %3563 = vst.msk [vmem:[#allocation5 + $0x18] sm:$0xff] %vm3559, %v3470
          %3564 = vst.msk [vmem:[#allocation5 + $0x20] sm:$0xff] %vm3559, %v3472
          %3565 = vst.msk [vmem:[#allocation5 + $0x28] sm:$0xff] %vm3559, %v3474
          %3566 = vst.msk [vmem:[#allocation5 + $0x30] sm:$0xff] %vm3559, %v3476
          %3567 = vst.msk [vmem:[#allocation5 + $0x38] sm:$0xff] %vm3559, %v3478
          %3568 = vst.msk [vmem:[#allocation5 + $0x40] sm:$0xff] %vm3559, %v3480
          %3569 = vst.msk [vmem:[#allocation5 + $0x48] sm:$0xff] %vm3559, %v3482
          %3570 = vst.msk [vmem:[#allocation5 + $0x50] sm:$0xff] %vm3559, %v3484
          %3571 = vst.msk [vmem:[#allocation5 + $0x58] sm:$0xff] %vm3559, %v3486
          %3572 = vst.msk [vmem:[#allocation5 + $0x60] sm:$0xff] %vm3559, %v3488
          %3573 = vst.msk [vmem:[#allocation5 + $0x68] sm:$0xff] %vm3559, %v3490
          %3574 = vst.msk [vmem:[#allocation5 + $0x70] sm:$0xff] %vm3559, %v3492
          %3575 = vst.msk [vmem:[#allocation5 + $0x78] sm:$0xff] %vm3559, %v3494
          %3576 = vst.msk [vmem:[#allocation5 + $0x80] sm:$0xff] %vm3559, %v3496
          %3577 = vst.msk [vmem:[#allocation5 + $0x88] sm:$0xff] %vm3559, %v3498
          %3578 = vst.msk [vmem:[#allocation5 + $0x90] sm:$0xff] %vm3559, %v3500
          %3579 = vst.msk [vmem:[#allocation5 + $0x98] sm:$0xff] %vm3559, %v3502
          %3580 = vst.msk [vmem:[#allocation5 + $0xa0] sm:$0xff] %vm3559, %v3504
          %3581 = vst.msk [vmem:[#allocation5 + $0xa8] sm:$0xff] %vm3559, %v3506
          %3582 = vst.msk [vmem:[#allocation5 + $0xb0] sm:$0xff] %vm3559, %v3508
          %3583 = vst.msk [vmem:[#allocation5 + $0xb8] sm:$0xff] %vm3559, %v3510
          %3584 = vst.msk [vmem:[#allocation5 + $0xc0] sm:$0xff] %vm3559, %v3512
          %3585 = vst.msk [vmem:[#allocation5 + $0xc8] sm:$0xff] %vm3559, %v3514
          %3586 = vst.msk [vmem:[#allocation5 + $0xd0] sm:$0xff] %vm3559, %v3516
          %3587 = vst.msk [vmem:[#allocation5 + $0xd8] sm:$0xff] %vm3559, %v3518
          %3588 = vst.msk [vmem:[#allocation5 + $0xe0] sm:$0xff] %vm3559, %v3520
          %3589 = vst.msk [vmem:[#allocation5 + $0xe8] sm:$0xff] %vm3559, %v3522
          %3590 = vst.msk [vmem:[#allocation5 + $0xf0] sm:$0xff] %vm3559, %v3524
          %3591 = vst.msk [vmem:[#allocation5 + $0xf8] sm:$0xff] %vm3559, %v3526
          %v3592 = vrot.slane %v2418, 2
          %v3593 = vrot.slane %v2419, 2
          %v3594 = vsel %vm2716, %v3592, %v3593
          %v3595 = vrot.slane %v2420, 2
          %v3596 = vsel %vm2716, %v3593, %v3595
          %3597 = vrot.lane.b32.xlu0 %v2729, 32
          %v3598 = vpop.permute.xlu0 %3597
          %3599 = vrot.lane.b32.xlu0 %v2731, 32
          %v3600 = vpop.permute.xlu0 %3599
          %3601 = vrot.lane.b32.xlu0 %v2734, 32
          %v3602 = vpop.permute.xlu0 %3601
          %3603 = vrot.lane.b32.xlu0 %v2736, 32
          %v3604 = vpop.permute.xlu0 %3603
          %3605 = vrot.lane.b32.xlu0 %v2739, 32
          %v3606 = vpop.permute.xlu0 %3605
          %3607 = vrot.lane.b32.xlu0 %v2741, 32
          %v3608 = vpop.permute.xlu0 %3607
          %3609 = vrot.lane.b32.xlu0 %v2744, 32
          %v3610 = vpop.permute.xlu0 %3609
          %3611 = vrot.lane.b32.xlu0 %v2746, 32
          %v3612 = vpop.permute.xlu0 %3611
          %3613 = vrot.lane.b32.xlu0 %v2749, 32
          %v3614 = vpop.permute.xlu0 %3613
          %3615 = vrot.lane.b32.xlu0 %v2751, 32
          %v3616 = vpop.permute.xlu0 %3615
          %3617 = vrot.lane.b32.xlu0 %v2754, 32
          %v3618 = vpop.permute.xlu0 %3617
          %3619 = vrot.lane.b32.xlu0 %v2756, 32
          %v3620 = vpop.permute.xlu0 %3619
          %3621 = vrot.lane.b32.xlu0 %v2759, 32
          %v3622 = vpop.permute.xlu0 %3621
          %3623 = vrot.lane.b32.xlu0 %v2761, 32
          %v3624 = vpop.permute.xlu0 %3623
          %3625 = vrot.lane.b32.xlu0 %v2764, 32
          %v3626 = vpop.permute.xlu0 %3625
          %3627 = vrot.lane.b32.xlu0 %v2766, 32
          %v3628 = vpop.permute.xlu0 %3627
          %3629 = vrot.lane.b32.xlu0 %v2769, 32
          %v3630 = vpop.permute.xlu0 %3629
          %3631 = vrot.lane.b32.xlu0 %v2771, 32
          %v3632 = vpop.permute.xlu0 %3631
          %3633 = vrot.lane.b32.xlu0 %v2774, 32
          %v3634 = vpop.permute.xlu0 %3633
          %3635 = vrot.lane.b32.xlu0 %v2776, 32
          %v3636 = vpop.permute.xlu0 %3635
          %3637 = vrot.lane.b32.xlu0 %v2779, 32
          %v3638 = vpop.permute.xlu0 %3637
          %3639 = vrot.lane.b32.xlu0 %v2781, 32
          %v3640 = vpop.permute.xlu0 %3639
          %3641 = vrot.lane.b32.xlu0 %v2784, 32
          %v3642 = vpop.permute.xlu0 %3641
          %3643 = vrot.lane.b32.xlu0 %v2786, 32
          %v3644 = vpop.permute.xlu0 %3643
          %3645 = vrot.lane.b32.xlu0 %v2789, 32
          %v3646 = vpop.permute.xlu0 %3645
          %3647 = vrot.lane.b32.xlu0 %v2791, 32
          %v3648 = vpop.permute.xlu0 %3647
          %3649 = vrot.lane.b32.xlu0 %v2794, 32
          %v3650 = vpop.permute.xlu0 %3649
          %3651 = vrot.lane.b32.xlu0 %v2796, 32
          %v3652 = vpop.permute.xlu0 %3651
          %3653 = vrot.lane.b32.xlu0 %v3194, 32
          %v3654 = vpop.permute.xlu0 %3653
          %3655 = vrot.lane.b32.xlu0 %v3196, 32
          %v3656 = vpop.permute.xlu0 %3655
          %3657 = vrot.lane.b32.xlu0 %v3594, 32
          %v3658 = vpop.permute.xlu0 %3657
          %3659 = vrot.lane.b32.xlu0 %v3596, 32
          %v3660 = vpop.permute.xlu0 %3659
          %vm3693 = vcmask 294144
          %3694 = vst.msk [vmem:[#allocation5] sm:$0xff] %vm3693, %v3598
          %3695 = vst.msk [vmem:[#allocation5 + $0x8] sm:$0xff] %vm3693, %v3600
          %3696 = vst.msk [vmem:[#allocation5 + $0x10] sm:$0xff] %vm3693, %v3602
          %3697 = vst.msk [vmem:[#allocation5 + $0x18] sm:$0xff] %vm3693, %v3604
          %3698 = vst.msk [vmem:[#allocation5 + $0x20] sm:$0xff] %vm3693, %v3606
          %3699 = vst.msk [vmem:[#allocation5 + $0x28] sm:$0xff] %vm3693, %v3608
          %3700 = vst.msk [vmem:[#allocation5 + $0x30] sm:$0xff] %vm3693, %v3610
          %3701 = vst.msk [vmem:[#allocation5 + $0x38] sm:$0xff] %vm3693, %v3612
          %3702 = vst.msk [vmem:[#allocation5 + $0x40] sm:$0xff] %vm3693, %v3614
          %3703 = vst.msk [vmem:[#allocation5 + $0x48] sm:$0xff] %vm3693, %v3616
          %3704 = vst.msk [vmem:[#allocation5 + $0x50] sm:$0xff] %vm3693, %v3618
          %3705 = vst.msk [vmem:[#allocation5 + $0x58] sm:$0xff] %vm3693, %v3620
          %3706 = vst.msk [vmem:[#allocation5 + $0x60] sm:$0xff] %vm3693, %v3622
          %3707 = vst.msk [vmem:[#allocation5 + $0x68] sm:$0xff] %vm3693, %v3624
          %3708 = vst.msk [vmem:[#allocation5 + $0x70] sm:$0xff] %vm3693, %v3626
          %3709 = vst.msk [vmem:[#allocation5 + $0x78] sm:$0xff] %vm3693, %v3628
          %3710 = vst.msk [vmem:[#allocation5 + $0x80] sm:$0xff] %vm3693, %v3630
          %3711 = vst.msk [vmem:[#allocation5 + $0x88] sm:$0xff] %vm3693, %v3632
          %3712 = vst.msk [vmem:[#allocation5 + $0x90] sm:$0xff] %vm3693, %v3634
          %3713 = vst.msk [vmem:[#allocation5 + $0x98] sm:$0xff] %vm3693, %v3636
          %3714 = vst.msk [vmem:[#allocation5 + $0xa0] sm:$0xff] %vm3693, %v3638
          %3715 = vst.msk [vmem:[#allocation5 + $0xa8] sm:$0xff] %vm3693, %v3640
          %3716 = vst.msk [vmem:[#allocation5 + $0xb0] sm:$0xff] %vm3693, %v3642
          %3717 = vst.msk [vmem:[#allocation5 + $0xb8] sm:$0xff] %vm3693, %v3644
          %3718 = vst.msk [vmem:[#allocation5 + $0xc0] sm:$0xff] %vm3693, %v3646
          %3719 = vst.msk [vmem:[#allocation5 + $0xc8] sm:$0xff] %vm3693, %v3648
          %3720 = vst.msk [vmem:[#allocation5 + $0xd0] sm:$0xff] %vm3693, %v3650
          %3721 = vst.msk [vmem:[#allocation5 + $0xd8] sm:$0xff] %vm3693, %v3652
          %3722 = vst.msk [vmem:[#allocation5 + $0xe0] sm:$0xff] %vm3693, %v3654
          %3723 = vst.msk [vmem:[#allocation5 + $0xe8] sm:$0xff] %vm3693, %v3656
          %3724 = vst.msk [vmem:[#allocation5 + $0xf0] sm:$0xff] %vm3693, %v3658
          %3725 = vst.msk [vmem:[#allocation5 + $0xf8] sm:$0xff] %vm3693, %v3660
          %v3726 = vld [vmem:[#allocation5] sm:$0xff]
          %v3727 = vld [vmem:[#allocation5 + $0x8] sm:$0xff]
          %v3728 = vld [vmem:[#allocation5 + $0x10] sm:$0xff]
          %v3729 = vld [vmem:[#allocation5 + $0x18] sm:$0xff]
          %v3730 = vld [vmem:[#allocation5 + $0x20] sm:$0xff]
          %v3731 = vld [vmem:[#allocation5 + $0x28] sm:$0xff]
          %v3732 = vld [vmem:[#allocation5 + $0x30] sm:$0xff]
          %v3733 = vld [vmem:[#allocation5 + $0x38] sm:$0xff]
          %v3734 = vld [vmem:[#allocation5 + $0x40] sm:$0xff]
          %v3735 = vld [vmem:[#allocation5 + $0x48] sm:$0xff]
          %v3736 = vld [vmem:[#allocation5 + $0x50] sm:$0xff]
          %v3737 = vld [vmem:[#allocation5 + $0x58] sm:$0xff]
          %v3738 = vld [vmem:[#allocation5 + $0x60] sm:$0xff]
          %v3739 = vld [vmem:[#allocation5 + $0x68] sm:$0xff]
          %v3740 = vld [vmem:[#allocation5 + $0x70] sm:$0xff]
          %v3741 = vld [vmem:[#allocation5 + $0x78] sm:$0xff]
          %v3742 = vld [vmem:[#allocation5 + $0x80] sm:$0xff]
          %v3743 = vld [vmem:[#allocation5 + $0x88] sm:$0xff]
          %v3744 = vld [vmem:[#allocation5 + $0x90] sm:$0xff]
          %v3745 = vld [vmem:[#allocation5 + $0x98] sm:$0xff]
          %v3746 = vld [vmem:[#allocation5 + $0xa0] sm:$0xff]
          %v3747 = vld [vmem:[#allocation5 + $0xa8] sm:$0xff]
          %v3748 = vld [vmem:[#allocation5 + $0xb0] sm:$0xff]
          %v3749 = vld [vmem:[#allocation5 + $0xb8] sm:$0xff]
          %v3750 = vld [vmem:[#allocation5 + $0xc0] sm:$0xff]
          %v3751 = vld [vmem:[#allocation5 + $0xc8] sm:$0xff]
          %v3752 = vld [vmem:[#allocation5 + $0xd0] sm:$0xff]
          %v3753 = vld [vmem:[#allocation5 + $0xd8] sm:$0xff]
          %v3754 = vld [vmem:[#allocation5 + $0xe0] sm:$0xff]
          %v3755 = vld [vmem:[#allocation5 + $0xe8] sm:$0xff]
          %v3756 = vld [vmem:[#allocation5 + $0xf0] sm:$0xff]
          %v3757 = vld [vmem:[#allocation5 + $0xf8] sm:$0xff]
          %vm3758 = vcmask 293888
          %v3760 = vsel %vm3758, %v3726, 0
          %v3763 = vsel %vm3758, %v3727, 0
          %v3766 = vsel %vm3758, %v3728, 0
          %v3769 = vsel %vm3758, %v3729, 0
          %v3772 = vsel %vm3758, %v3730, 0
          %v3775 = vsel %vm3758, %v3731, 0
          %v3778 = vsel %vm3758, %v3732, 0
          %v3781 = vsel %vm3758, %v3733, 0
          %v3784 = vsel %vm3758, %v3734, 0
          %v3787 = vsel %vm3758, %v3735, 0
          %v3790 = vsel %vm3758, %v3736, 0
          %v3793 = vsel %vm3758, %v3737, 0
          %v3796 = vsel %vm3758, %v3738, 0
          %v3799 = vsel %vm3758, %v3739, 0
          %v3802 = vsel %vm3758, %v3740, 0
          %v3805 = vsel %vm3758, %v3741, 0
          %v3808 = vsel %vm3758, %v3742, 0
          %v3811 = vsel %vm3758, %v3743, 0
          %v3814 = vsel %vm3758, %v3744, 0
          %v3817 = vsel %vm3758, %v3745, 0
          %v3820 = vsel %vm3758, %v3746, 0
          %v3823 = vsel %vm3758, %v3747, 0
          %v3826 = vsel %vm3758, %v3748, 0
          %v3829 = vsel %vm3758, %v3749, 0
          %v3832 = vsel %vm3758, %v3750, 0
          %v3835 = vsel %vm3758, %v3751, 0
          %v3838 = vsel %vm3758, %v3752, 0
          %v3841 = vsel %vm3758, %v3753, 0
          %v3844 = vsel %vm3758, %v3754, 0
          %v3847 = vsel %vm3758, %v3755, 0
          %v3850 = vsel %vm3758, %v3756, 0
          %v3853 = vsel %vm3758, %v3757, 0
          %vm3855 = vcmask 1043456
          %v3857 = vsel %vm3855, %v2425, 0
          %3859 = vmatprep.subr.mxu0 0.0
          %3860 = vmatpush1.msra.mxu0 %v2421
          %3861 = vmatprep.subr.mxu0 0.0
          %3862 = vmatpush1.msra.mxu0 %v2422
          %3863 = vmatprep.subr.mxu0 0.0
          %3864 = vmatpush1.msra.mxu0 %v2423
          %3865 = vmatprep.subr.mxu0 0.0
          %3866 = vmatpush1.msra.mxu0 %v2424
          %3867 = vmatprep.subr.mxu0 0.0
          %3868 = vmatpush1.msra.mxu0 %v3857
          %3869 = vmatprep.subr.mxu0 0.0
          %3870 = vmatpush1.msra.mxu0 0.0
          %3871 = vmatprep.subr.mxu0 0.0
          %3872 = vmatpush1.msra.mxu0 0.0
          %3873 = vmatprep.subr.mxu0 0.0
          %3874 = vmatpush1.msra.mxu0 0.0
          %3875 = vmatprep.subr.mxu0 0.0
          %3876 = vmatpush1.msra.mxu0 0.0
          %3877 = vmatprep.subr.mxu0 0.0
          %3878 = vmatpush1.msra.mxu0 0.0
          %3879 = vmatprep.subr.mxu0 0.0
          %3880 = vmatpush1.msra.mxu0 0.0
          %3881 = vmatprep.subr.mxu0 0.0
          %3882 = vmatpush1.msra.mxu0 0.0
          %3883 = vmatprep.subr.mxu0 0.0
          %3884 = vmatpush1.msra.mxu0 0.0
          %3885 = vmatprep.subr.mxu0 0.0
          %3886 = vmatpush1.msra.mxu0 0.0
          %3887 = vmatprep.subr.mxu0 0.0
          %3888 = vmatpush1.msra.mxu0 0.0
          %3889 = vmatprep.subr.mxu0 0.0
          %3890 = vmatpush1.msra.mxu0 0.0
          %3891 = vmatprep.subr.mxu0 0.0
          %3892 = vmatpush1.msra.mxu0 0.0
          %3893 = vmatprep.subr.mxu0 0.0
          %3894 = vmatpush1.msra.mxu0 0.0
          %3895 = vmatprep.subr.mxu0 0.0
          %3896 = vmatpush1.msra.mxu0 0.0
          %3897 = vmatprep.subr.mxu0 0.0
          %3898 = vmatpush1.msra.mxu0 0.0
          %3899 = vmatprep.subr.mxu0 0.0
          %3900 = vmatpush1.msra.mxu0 0.0
          %3901 = vmatprep.subr.mxu0 0.0
          %3902 = vmatpush1.msra.mxu0 0.0
          %3903 = vmatprep.subr.mxu0 0.0
          %3904 = vmatpush1.msra.mxu0 0.0
          %3905 = vmatprep.subr.mxu0 0.0
          %3906 = vmatpush1.msra.mxu0 0.0
          %3907 = vmatprep.subr.mxu0 0.0
          %3908 = vmatpush1.msra.mxu0 0.0
          %3909 = vmatprep.subr.mxu0 0.0
          %3910 = vmatpush1.msra.mxu0 0.0
          %3911 = vmatprep.subr.mxu0 0.0
          %3912 = vmatpush1.msra.mxu0 0.0
          %3913 = vmatprep.subr.mxu0 0.0
          %3914 = vmatpush1.msra.mxu0 0.0
          %3915 = vmatprep.subr.mxu0 0.0
          %3916 = vmatpush1.msra.mxu0 0.0
          %3917 = vmatprep.subr.mxu0 0.0
          %3918 = vmatpush1.msra.mxu0 0.0
          %3919 = vmatprep.subr.mxu0 0.0
          %3920 = vmatpush1.msra.mxu0 0.0
          %3921 = vmatprep.subr.mxu0 0.0
          %3922 = vmatpush1.msra.mxu0 0.0
          %3923 = vmatprep.mubr.f32.mxu0 0.0
          %3924 = vmatmul.mubr.f32.gmra.mrb[0].mxu0 %v3760
          %v3925 = vpop.f32.mrb[0].mxu0
          %v3926 = vadd.f32 0.0, %v3925
          %v3927 = vpop.f32.mrb[0].mxu0
          %3928 = vmatprep.mubr.f32.mxu0 0.0
          %3929 = vmatmul.mubr.f32.gmra.mrb[0].mxu0 %v3763
          %v3930 = vpop.f32.mrb[0].mxu0
          %v3931 = vadd.f32 0.0, %v3930
          %v3932 = vpop.f32.mrb[0].mxu0
          %3933 = vmatprep.mubr.f32.mxu0 0.0
          %3934 = vmatmul.mubr.f32.gmra.mrb[0].mxu0 %v3766
          %v3935 = vpop.f32.mrb[0].mxu0
          %v3936 = vadd.f32 0.0, %v3935
          %v3937 = vpop.f32.mrb[0].mxu0
          %3938 = vmatprep.mubr.f32.mxu0 0.0
          %3939 = vmatmul.mubr.f32.gmra.mrb[0].mxu0 %v3769
          %v3940 = vpop.f32.mrb[0].mxu0
          %v3941 = vadd.f32 0.0, %v3940
          %v3942 = vpop.f32.mrb[0].mxu0
          %3943 = vmatprep.mubr.f32.mxu0 0.0
          %3944 = vmatmul.mubr.f32.gmra.mrb[0].mxu0 %v3772
          %v3945 = vpop.f32.mrb[0].mxu0
          %v3946 = vadd.f32 0.0, %v3945
          %v3947 = vpop.f32.mrb[0].mxu0
          %3948 = vmatprep.mubr.f32.mxu0 0.0
          %3949 = vmatmul.mubr.f32.gmra.mrb[0].mxu0 %v3775
          %v3950 = vpop.f32.mrb[0].mxu0
          %v3951 = vadd.f32 0.0, %v3950
          %v3952 = vpop.f32.mrb[0].mxu0
          %3953 = vmatprep.mubr.f32.mxu0 0.0
          %3954 = vmatmul.mubr.f32.gmra.mrb[0].mxu0 %v3778
          %v3955 = vpop.f32.mrb[0].mxu0
          %v3956 = vadd.f32 0.0, %v3955
          %v3957 = vpop.f32.mrb[0].mxu0
          %3958 = vmatprep.mubr.f32.mxu0 0.0
          %3959 = vmatmul.mubr.f32.gmra.mrb[0].mxu0 %v3781
          %v3960 = vpop.f32.mrb[0].mxu0
          %v3961 = vadd.f32 0.0, %v3960
          %v3962 = vpop.f32.mrb[0].mxu0
          %3963 = vmatprep.mubr.f32.mxu0 0.0
          %3964 = vmatmul.mubr.f32.gmra.mrb[0].mxu0 %v3784
          %v3965 = vpop.f32.mrb[0].mxu0
          %v3966 = vadd.f32 0.0, %v3965
          %v3967 = vpop.f32.mrb[0].mxu0
          %3968 = vmatprep.mubr.f32.mxu0 0.0
          %3969 = vmatmul.mubr.f32.gmra.mrb[0].mxu0 %v3787
          %v3970 = vpop.f32.mrb[0].mxu0
          %v3971 = vadd.f32 0.0, %v3970
          %v3972 = vpop.f32.mrb[0].mxu0
          %3973 = vmatprep.mubr.f32.mxu0 0.0
          %3974 = vmatmul.mubr.f32.gmra.mrb[0].mxu0 %v3790
          %v3975 = vpop.f32.mrb[0].mxu0
          %v3976 = vadd.f32 0.0, %v3975
          %v3977 = vpop.f32.mrb[0].mxu0
          %3978 = vmatprep.mubr.f32.mxu0 0.0
          %3979 = vmatmul.mubr.f32.gmra.mrb[0].mxu0 %v3793
          %v3980 = vpop.f32.mrb[0].mxu0
          %v3981 = vadd.f32 0.0, %v3980
          %v3982 = vpop.f32.mrb[0].mxu0
          %3983 = vmatprep.mubr.f32.mxu0 0.0
          %3984 = vmatmul.mubr.f32.gmra.mrb[0].mxu0 %v3796
          %v3985 = vpop.f32.mrb[0].mxu0
          %v3986 = vadd.f32 0.0, %v3985
          %v3987 = vpop.f32.mrb[0].mxu0
          %3988 = vmatprep.mubr.f32.mxu0 0.0
          %3989 = vmatmul.mubr.f32.gmra.mrb[0].mxu0 %v3799
          %v3990 = vpop.f32.mrb[0].mxu0
          %v3991 = vadd.f32 0.0, %v3990
          %v3992 = vpop.f32.mrb[0].mxu0
          %3993 = vmatprep.mubr.f32.mxu0 0.0
          %3994 = vmatmul.mubr.f32.gmra.mrb[0].mxu0 %v3802
          %v3995 = vpop.f32.mrb[0].mxu0
          %v3996 = vadd.f32 0.0, %v3995
          %v3997 = vpop.f32.mrb[0].mxu0
          %3998 = vmatprep.mubr.f32.mxu0 0.0
          %3999 = vmatmul.mubr.f32.gmra.mrb[0].mxu0 %v3805
          %v4000 = vpop.f32.mrb[0].mxu0
          %v4001 = vadd.f32 0.0, %v4000
          %v4002 = vpop.f32.mrb[0].mxu0
          %4003 = vmatprep.mubr.f32.mxu0 0.0
          %4004 = vmatmul.mubr.f32.gmra.mrb[0].mxu0 %v3808
          %v4005 = vpop.f32.mrb[0].mxu0
          %v4006 = vadd.f32 0.0, %v4005
          %v4007 = vpop.f32.mrb[0].mxu0
          %4008 = vmatprep.mubr.f32.mxu0 0.0
          %4009 = vmatmul.mubr.f32.gmra.mrb[0].mxu0 %v3811
          %v4010 = vpop.f32.mrb[0].mxu0
          %v4011 = vadd.f32 0.0, %v4010
          %v4012 = vpop.f32.mrb[0].mxu0
          %4013 = vmatprep.mubr.f32.mxu0 0.0
          %4014 = vmatmul.mubr.f32.gmra.mrb[0].mxu0 %v3814
          %v4015 = vpop.f32.mrb[0].mxu0
          %v4016 = vadd.f32 0.0, %v4015
          %v4017 = vpop.f32.mrb[0].mxu0
          %4018 = vmatprep.mubr.f32.mxu0 0.0
          %4019 = vmatmul.mubr.f32.gmra.mrb[0].mxu0 %v3817
          %v4020 = vpop.f32.mrb[0].mxu0
          %v4021 = vadd.f32 0.0, %v4020
          %v4022 = vpop.f32.mrb[0].mxu0
          %4023 = vmatprep.mubr.f32.mxu0 0.0
          %4024 = vmatmul.mubr.f32.gmra.mrb[0].mxu0 %v3820
          %v4025 = vpop.f32.mrb[0].mxu0
          %v4026 = vadd.f32 0.0, %v4025
          %v4027 = vpop.f32.mrb[0].mxu0
          %4028 = vmatprep.mubr.f32.mxu0 0.0
          %4029 = vmatmul.mubr.f32.gmra.mrb[0].mxu0 %v3823
          %v4030 = vpop.f32.mrb[0].mxu0
          %v4031 = vadd.f32 0.0, %v4030
          %v4032 = vpop.f32.mrb[0].mxu0
          %4033 = vmatprep.mubr.f32.mxu0 0.0
          %4034 = vmatmul.mubr.f32.gmra.mrb[0].mxu0 %v3826
          %v4035 = vpop.f32.mrb[0].mxu0
          %v4036 = vadd.f32 0.0, %v4035
          %v4037 = vpop.f32.mrb[0].mxu0
          %4038 = vmatprep.mubr.f32.mxu0 0.0
          %4039 = vmatmul.mubr.f32.gmra.mrb[0].mxu0 %v3829
          %v4040 = vpop.f32.mrb[0].mxu0
          %v4041 = vadd.f32 0.0, %v4040
          %v4042 = vpop.f32.mrb[0].mxu0
          %4043 = vmatprep.mubr.f32.mxu0 0.0
          %4044 = vmatmul.mubr.f32.gmra.mrb[0].mxu0 %v3832
          %v4045 = vpop.f32.mrb[0].mxu0
          %v4046 = vadd.f32 0.0, %v4045
          %v4047 = vpop.f32.mrb[0].mxu0
          %4048 = vmatprep.mubr.f32.mxu0 0.0
          %4049 = vmatmul.mubr.f32.gmra.mrb[0].mxu0 %v3835
          %v4050 = vpop.f32.mrb[0].mxu0
          %v4051 = vadd.f32 0.0, %v4050
          %v4052 = vpop.f32.mrb[0].mxu0
          %4053 = vmatprep.mubr.f32.mxu0 0.0
          %4054 = vmatmul.mubr.f32.gmra.mrb[0].mxu0 %v3838
          %v4055 = vpop.f32.mrb[0].mxu0
          %v4056 = vadd.f32 0.0, %v4055
          %v4057 = vpop.f32.mrb[0].mxu0
          %4058 = vmatprep.mubr.f32.mxu0 0.0
          %4059 = vmatmul.mubr.f32.gmra.mrb[0].mxu0 %v3841
          %v4060 = vpop.f32.mrb[0].mxu0
          %v4061 = vadd.f32 0.0, %v4060
          %v4062 = vpop.f32.mrb[0].mxu0
          %4063 = vmatprep.mubr.f32.mxu0 0.0
          %4064 = vmatmul.mubr.f32.gmra.mrb[0].mxu0 %v3844
          %v4065 = vpop.f32.mrb[0].mxu0
          %v4066 = vadd.f32 0.0, %v4065
          %v4067 = vpop.f32.mrb[0].mxu0
          %4068 = vmatprep.mubr.f32.mxu0 0.0
          %4069 = vmatmul.mubr.f32.gmra.mrb[0].mxu0 %v3847
          %v4070 = vpop.f32.mrb[0].mxu0
          %v4071 = vadd.f32 0.0, %v4070
          %v4072 = vpop.f32.mrb[0].mxu0
          %4073 = vmatprep.mubr.f32.mxu0 0.0
          %4074 = vmatmul.mubr.f32.gmra.mrb[0].mxu0 %v3850
          %v4075 = vpop.f32.mrb[0].mxu0
          %v4076 = vadd.f32 0.0, %v4075
          %v4077 = vpop.f32.mrb[0].mxu0
          %4078 = vmatprep.mubr.f32.mxu0 0.0
          %4079 = vmatmul.mubr.f32.gmra.mrb[0].mxu0 %v3853
          %v4080 = vpop.f32.mrb[0].mxu0
          %v4081 = vadd.f32 0.0, %v4080
          %v4082 = vpop.f32.mrb[0].mxu0
          %4083 = vdwg.mxu0
          %4084 = vxpose.xlu0.b32.start [1/16] %v3926, 128
          %4085 = vxpose.xlu0.b32.cont [2/16] %v3931, 128
          %4086 = vxpose.xlu0.b32.cont [3/16] %v3936, 128
          %4087 = vxpose.xlu0.b32.cont [4/16] %v3941, 128
          %4088 = vxpose.xlu0.b32.cont [5/16] %v3946, 128
          %4089 = vxpose.xlu0.b32.cont [6/16] %v3951, 128
          %4090 = vxpose.xlu0.b32.cont [7/16] %v3956, 128
          %4091 = vxpose.xlu0.b32.cont [8/16] %v3961, 128
          %4092 = vxpose.xlu0.b32.cont [9/16] %v3966, 128
          %4093 = vxpose.xlu0.b32.cont [10/16] %v3971, 128
          %4094 = vxpose.xlu0.b32.cont [11/16] %v3976, 128
          %4095 = vxpose.xlu0.b32.cont [12/16] %v3981, 128
          %4096 = vxpose.xlu0.b32.cont [13/16] %v3986, 128
          %4097 = vxpose.xlu0.b32.cont [14/16] %v3991, 128
          %4098 = vxpose.xlu0.b32.cont [15/16] %v3996, 128
          %4099 = vxpose.xlu0.b32.end [16/16] %v4001, 128
          %v4100 = vpop.trf.xlu0
          %v4101 = vpop.trf.xlu0
          %v4102 = vpop.trf.xlu0
          %v4103 = vpop.trf.xlu0
          %v4104 = vpop.trf.xlu0
          %v4105 = vpop.trf.xlu0
          %v4106 = vpop.trf.xlu0
          %v4107 = vpop.trf.xlu0
          %v4108 = vpop.trf.xlu0
          %v4109 = vpop.trf.xlu0
          %v4110 = vpop.trf.xlu0
          %v4111 = vpop.trf.xlu0
          %v4112 = vpop.trf.xlu0
          %v4113 = vpop.trf.xlu0
          %v4114 = vpop.trf.xlu0
          %v4115 = vpop.trf.xlu0
          %4116 = vxpose.xlu0.b32.start [1/16] %v4006, 128
          %4117 = vxpose.xlu0.b32.cont [2/16] %v4011, 128
          %4118 = vxpose.xlu0.b32.cont [3/16] %v4016, 128
          %4119 = vxpose.xlu0.b32.cont [4/16] %v4021, 128
          %4120 = vxpose.xlu0.b32.cont [5/16] %v4026, 128
          %4121 = vxpose.xlu0.b32.cont [6/16] %v4031, 128
          %4122 = vxpose.xlu0.b32.cont [7/16] %v4036, 128
          %4123 = vxpose.xlu0.b32.cont [8/16] %v4041, 128
          %4124 = vxpose.xlu0.b32.cont [9/16] %v4046, 128
          %4125 = vxpose.xlu0.b32.cont [10/16] %v4051, 128
          %4126 = vxpose.xlu0.b32.cont [11/16] %v4056, 128
          %4127 = vxpose.xlu0.b32.cont [12/16] %v4061, 128
          %4128 = vxpose.xlu0.b32.cont [13/16] %v4066, 128
          %4129 = vxpose.xlu0.b32.cont [14/16] %v4071, 128
          %4130 = vxpose.xlu0.b32.cont [15/16] %v4076, 128
          %4131 = vxpose.xlu0.b32.end [16/16] %v4081, 128
          %v4132 = vpop.trf.xlu0
          %v4133 = vpop.trf.xlu0
          %v4134 = vpop.trf.xlu0
          %v4135 = vpop.trf.xlu0
          %v4136 = vpop.trf.xlu0
          %v4137 = vpop.trf.xlu0
          %v4138 = vpop.trf.xlu0
          %v4139 = vpop.trf.xlu0
          %v4140 = vpop.trf.xlu0
          %v4141 = vpop.trf.xlu0
          %v4142 = vpop.trf.xlu0
          %v4143 = vpop.trf.xlu0
          %v4144 = vpop.trf.xlu0
          %v4145 = vpop.trf.xlu0
          %v4146 = vpop.trf.xlu0
          %v4147 = vpop.trf.xlu0
          %v4150 = vcombine.low %v4100, %v4132
          %s4152 = smul.u32 %s22, 2
          %s4153 = smul.addr %s4152, 4
          %s4154 = scalar_lea.vmem [#allocation3], %s4153
          %4155 = vst [vmem:[%s4154] sm:$0xff] %v4150
          %v4156 = vld [vmem:[#allocation7] sm:$0xf]
          %v4157 = vsel %vm3855, %v4100, 0.0
          %v4158 = vsel %vm3855, %v4132, 0.0
          %v4159 = vadd.f32 %v4157, %v4158
          %4160 = vadd.xlane.f32.xlu0 %v4159
          %v4161 = vpop.xlane.xlu0 %4160
          %v4162 = vadd.f32 %v4156, %v4161
          %vm4163 = vcmask 3072
          %4164 = vst.msk [vmem:[#allocation7] sm:$0xf] %vm4163, %v4162
          %v4165 = vld [vmem:[#allocation7] sm:$0xf]
          %v4166 = vmul.f32 %v4100, %v4100
          %v4167 = vmul.f32 %v4132, %v4132
          %v4168 = vsel %vm3855, %v4166, 0.0
          %v4169 = vsel %vm3855, %v4167, 0.0
          %v4170 = vadd.f32 %v4168, %v4169
          %4171 = vadd.xlane.f32.xlu0 %v4170
          %v4172 = vpop.xlane.xlu0 %4171
          %v4173 = vadd.f32 %v4165, %v4172
          %vm4174 = vcmask 11272
          %4175 = vst.msk [vmem:[#allocation7] sm:$0xf] %vm4174, %v4173
        $region48: #{tpu_custom_call.1} parent=31 // pred_fallthru
          _
        %p4176 = scmp.eq.s32.totalorder %s21, 2
        // Predicated region
        $region49: #{tpu_custom_call.1} parent=31 // pred_check
          %p4177 = pneg %p4176
        $region50: #{tpu_custom_call.1} parent=31 // pred_check_branch
          %4179 = sbr.rel (%p4177) target = $region52
        $region51: #{tpu_custom_call.1} parent=31 // pred_region
          %v4180 = vld [vmem:[#allocation7] sm:$0xf]
          %v4181 = vmul.f32 %v4180, 0.001953125
          %v4182 = vmul.f32 %v4181, %v4181
          %4184 = vrot.lane.b32.xlu0 %v4182, 1
          %v4185 = vpop.permute.xlu0 %4184
          %v4187 = vsub.f32 %v4181, %v4185
          %v4188 = vadd.f32 %v4187, 1e-05
          %v4189 = vrsqrt.pop %v4188
          %v4190 = vld [vmem:[%s180 + $0x18] sm:$0xff]
          %v4191 = vld [vmem:[%s180 + $0x20] sm:$0xff]
          %v4192 = vld [vmem:[%s180 + $0x28] sm:$0x3]
          %v4193 = vld [vmem:[%s180 + $0x30] sm:$0xff]
          %v4194 = vld [vmem:[%s180 + $0x38] sm:$0xff]
          %v4195 = vld [vmem:[%s180 + $0x40] sm:$0x3]
          %v4196 = vld [vmem:[%s180 + $0x48] sm:$0xff]
          %v4197 = vld [vmem:[%s180 + $0x50] sm:$0xff]
          %v4198 = vld [vmem:[%s180 + $0x58] sm:$0x3]
          %v4199 = vld [vmem:[%s180 + $0x60] sm:$0xff]
          %v4200 = vld [vmem:[%s180 + $0x68] sm:$0xff]
          %v4201 = vld [vmem:[%s180 + $0x70] sm:$0x3]
          %v4202 = vld [vmem:[%s180 + $0x78] sm:$0xff]
          %v4203 = vld [vmem:[%s180 + $0x80] sm:$0xff]
          %v4204 = vld [vmem:[%s180 + $0x88] sm:$0x3]
          %v4205 = vld [vmem:[%s180 + $0x90] sm:$0xff]
          %v4206 = vld [vmem:[%s180 + $0x98] sm:$0xff]
          %v4207 = vld [vmem:[%s180 + $0xa0] sm:$0x3]
          %v4208 = vld [vmem:[%s180 + $0xa8] sm:$0xff]
          %v4209 = vld [vmem:[%s180 + $0xb0] sm:$0xff]
          %v4210 = vld [vmem:[%s180 + $0xb8] sm:$0x3]
          %v4211 = vld [vmem:[%s180 + $0xc0] sm:$0xff]
          %v4212 = vld [vmem:[%s180 + $0xc8] sm:$0xff]
          %v4213 = vld [vmem:[%s180 + $0xd0] sm:$0x3]
          %v4214 = vld [vmem:[%s180 + $0xd8] sm:$0xff]
          %v4215 = vld [vmem:[%s180 + $0xe0] sm:$0xff]
          %v4216 = vld [vmem:[%s180 + $0xe8] sm:$0x3]
          %v4217 = vld [vmem:[%s180 + $0xf0] sm:$0xff]
          %v4218 = vld [vmem:[%s180 + $0xf8] sm:$0xff]
          %v4219 = vld [vmem:[%s180 + $0x100] sm:$0x3]
          %v4220 = vld [vmem:[%s180 + $0x108] sm:$0xff]
          %v4221 = vld [vmem:[%s180 + $0x110] sm:$0xff]
          %v4222 = vld [vmem:[%s180 + $0x118] sm:$0x3]
          %v4223 = vld [vmem:[%s180 + $0x120] sm:$0xff]
          %v4224 = vld [vmem:[%s180 + $0x128] sm:$0xff]
          %v4225 = vld [vmem:[%s180 + $0x130] sm:$0x3]
          %v4226 = vld [vmem:[%s180 + $0x138] sm:$0xff]
          %v4227 = vld [vmem:[%s180 + $0x140] sm:$0xff]
          %v4228 = vld [vmem:[%s180 + $0x148] sm:$0x3]
          %v4229 = vld [vmem:[%s180 + $0x150] sm:$0xff]
          %v4230 = vld [vmem:[%s180 + $0x158] sm:$0xff]
          %v4231 = vld [vmem:[%s180 + $0x160] sm:$0x3]
          %v4232 = vld [vmem:[%s180 + $0x168] sm:$0xff]
          %v4233 = vld [vmem:[%s180 + $0x170] sm:$0xff]
          %v4234 = vld [vmem:[%s180 + $0x178] sm:$0x3]
          %v4235 = vld [vmem:[%s180 + $0x180] sm:$0xff]
          %v4236 = vld [vmem:[%s180 + $0x188] sm:$0xff]
          %v4237 = vld [vmem:[%s180 + $0x190] sm:$0x3]
          %vm4286 = vcmask 1046528
          %v4287 = vrot.slane %v4190, 1
          %v4288 = vrot.slane %v4191, 1
          %v4289 = vsel %vm4286, %v4287, %v4288
          %v4290 = vrot.slane %v4192, 1
          %v4291 = vsel %vm4286, %v4288, %v4290
          %v4292 = vrot.slane %v4193, 1
          %v4293 = vrot.slane %v4194, 1
          %v4294 = vsel %vm4286, %v4292, %v4293
          %v4295 = vrot.slane %v4195, 1
          %v4296 = vsel %vm4286, %v4293, %v4295
          %v4297 = vrot.slane %v4196, 1
          %v4298 = vrot.slane %v4197, 1
          %v4299 = vsel %vm4286, %v4297, %v4298
          %v4300 = vrot.slane %v4198, 1
          %v4301 = vsel %vm4286, %v4298, %v4300
          %v4302 = vrot.slane %v4199, 1
          %v4303 = vrot.slane %v4200, 1
          %v4304 = vsel %vm4286, %v4302, %v4303
          %v4305 = vrot.slane %v4201, 1
          %v4306 = vsel %vm4286, %v4303, %v4305
          %v4307 = vrot.slane %v4202, 1
          %v4308 = vrot.slane %v4203, 1
          %v4309 = vsel %vm4286, %v4307, %v4308
          %v4310 = vrot.slane %v4204, 1
          %v4311 = vsel %vm4286, %v4308, %v4310
          %v4312 = vrot.slane %v4205, 1
          %v4313 = vrot.slane %v4206, 1
          %v4314 = vsel %vm4286, %v4312, %v4313
          %v4315 = vrot.slane %v4207, 1
          %v4316 = vsel %vm4286, %v4313, %v4315
          %v4317 = vrot.slane %v4208, 1
          %v4318 = vrot.slane %v4209, 1
          %v4319 = vsel %vm4286, %v4317, %v4318
          %v4320 = vrot.slane %v4210, 1
          %v4321 = vsel %vm4286, %v4318, %v4320
          %v4322 = vrot.slane %v4211, 1
          %v4323 = vrot.slane %v4212, 1
          %v4324 = vsel %vm4286, %v4322, %v4323
          %v4325 = vrot.slane %v4213, 1
          %v4326 = vsel %vm4286, %v4323, %v4325
          %v4327 = vrot.slane %v4214, 1
          %v4328 = vrot.slane %v4215, 1
          %v4329 = vsel %vm4286, %v4327, %v4328
          %v4330 = vrot.slane %v4216, 1
          %v4331 = vsel %vm4286, %v4328, %v4330
          %v4332 = vrot.slane %v4217, 1
          %v4333 = vrot.slane %v4218, 1
          %v4334 = vsel %vm4286, %v4332, %v4333
          %v4335 = vrot.slane %v4219, 1
          %v4336 = vsel %vm4286, %v4333, %v4335
          %v4337 = vrot.slane %v4220, 1
          %v4338 = vrot.slane %v4221, 1
          %v4339 = vsel %vm4286, %v4337, %v4338
          %v4340 = vrot.slane %v4222, 1
          %v4341 = vsel %vm4286, %v4338, %v4340
          %v4342 = vrot.slane %v4223, 1
          %v4343 = vrot.slane %v4224, 1
          %v4344 = vsel %vm4286, %v4342, %v4343
          %v4345 = vrot.slane %v4225, 1
          %v4346 = vsel %vm4286, %v4343, %v4345
          %v4347 = vrot.slane %v4226, 1
          %v4348 = vrot.slane %v4227, 1
          %v4349 = vsel %vm4286, %v4347, %v4348
          %v4350 = vrot.slane %v4228, 1
          %v4351 = vsel %vm4286, %v4348, %v4350
          %v4352 = vrot.slane %v4229, 1
          %v4353 = vrot.slane %v4230, 1
          %v4354 = vsel %vm4286, %v4352, %v4353
          %v4355 = vrot.slane %v4231, 1
          %v4356 = vsel %vm4286, %v4353, %v4355
          %v4357 = vrot.slane %v4232, 1
          %v4358 = vrot.slane %v4233, 1
          %v4359 = vsel %vm4286, %v4357, %v4358
          %v4360 = vrot.slane %v4234, 1
          %v4361 = vsel %vm4286, %v4358, %v4360
          %v4362 = vrot.slane %v4235, 1
          %v4363 = vrot.slane %v4236, 1
          %v4364 = vsel %vm4286, %v4362, %v4363
          %v4365 = vrot.slane %v4237, 1
          %v4366 = vsel %vm4286, %v4363, %v4365
          %s4399 = smul.u32 %s22, 2
          %s4400 = smul.addr %s4399, 4
          %s4401 = scalar_lea.vmem [#allocation3], %s4400
          %v4402 = vld [vmem:[%s4401] sm:$0xff]
          %4404 = vset.pattern.permute.xlu0 0
          %4405 = vperm.xlu0 %4404, %v4181
          %v4406 = vpop.permute.xlu0 %4405
          %v4408 = vunpack.c.l.s4 839922192
          %v4409 = vunpack.c.0.s8 %v4408
          %v4410 = vlaneseq
          %v4411 = vshrl.u32 %v4410, 7
          %v4412 = vsub.s32 %v4409, %v4411
          %v4413 = vrot.slane %v4406, %v4412
          %v4415 = vsub.f32 %v4402, %v4413
          %4417 = vset.pattern.permute.xlu0 1
          %4418 = vperm.xlu0 %4417, %v4189
          %v4419 = vpop.permute.xlu0 %4418
          %v4421 = vunpack.c.l.s4 839922192
          %v4422 = vunpack.c.0.s8 %v4421
          %v4423 = vlaneseq
          %v4424 = vshrl.u32 %v4423, 7
          %v4425 = vsub.s32 %v4422, %v4424
          %v4426 = vrot.slane %v4419, %v4425
          %v4428 = vmul.f32 %v4415, %v4426
          %4429 = vxpose.xlu0.b32.start [1/16] %v4289, 128
          %4430 = vxpose.xlu0.b32.cont [2/16] %v4291, 128
          %4431 = vxpose.xlu0.b32.cont [3/16] %v4294, 128
          %4432 = vxpose.xlu0.b32.cont [4/16] %v4296, 128
          %4433 = vxpose.xlu0.b32.cont [5/16] %v4299, 128
          %4434 = vxpose.xlu0.b32.cont [6/16] %v4301, 128
          %4435 = vxpose.xlu0.b32.cont [7/16] %v4304, 128
          %4436 = vxpose.xlu0.b32.cont [8/16] %v4306, 128
          %4437 = vxpose.xlu0.b32.cont [9/16] %v4309, 128
          %4438 = vxpose.xlu0.b32.cont [10/16] %v4311, 128
          %4439 = vxpose.xlu0.b32.cont [11/16] %v4314, 128
          %4440 = vxpose.xlu0.b32.cont [12/16] %v4316, 128
          %4441 = vxpose.xlu0.b32.cont [13/16] %v4319, 128
          %4442 = vxpose.xlu0.b32.cont [14/16] %v4321, 128
          %4443 = vxpose.xlu0.b32.cont [15/16] %v4324, 128
          %4444 = vxpose.xlu0.b32.end [16/16] %v4326, 128
          %v4445 = vpop.trf.xlu0
          %v4446 = vpop.trf.xlu0
          %v4447 = vpop.trf.xlu0
          %v4448 = vpop.trf.xlu0
          %v4449 = vpop.trf.xlu0
          %v4450 = vpop.trf.xlu0
          %v4451 = vpop.trf.xlu0
          %v4452 = vpop.trf.xlu0
          %v4453 = vpop.trf.xlu0
          %v4454 = vpop.trf.xlu0
          %v4455 = vpop.trf.xlu0
          %v4456 = vpop.trf.xlu0
          %v4457 = vpop.trf.xlu0
          %v4458 = vpop.trf.xlu0
          %v4459 = vpop.trf.xlu0
          %v4460 = vpop.trf.xlu0
          %4461 = vxpose.xlu0.b32.start [1/16] %v4329, 128
          %4462 = vxpose.xlu0.b32.cont [2/16] %v4331, 128
          %4463 = vxpose.xlu0.b32.cont [3/16] %v4334, 128
          %4464 = vxpose.xlu0.b32.cont [4/16] %v4336, 128
          %4465 = vxpose.xlu0.b32.cont [5/16] %v4339, 128
          %4466 = vxpose.xlu0.b32.cont [6/16] %v4341, 128
          %4467 = vxpose.xlu0.b32.cont [7/16] %v4344, 128
          %4468 = vxpose.xlu0.b32.cont [8/16] %v4346, 128
          %4469 = vxpose.xlu0.b32.cont [9/16] %v4349, 128
          %4470 = vxpose.xlu0.b32.cont [10/16] %v4351, 128
          %4471 = vxpose.xlu0.b32.cont [11/16] %v4354, 128
          %4472 = vxpose.xlu0.b32.cont [12/16] %v4356, 128
          %4473 = vxpose.xlu0.b32.cont [13/16] %v4359, 128
          %4474 = vxpose.xlu0.b32.cont [14/16] %v4361, 128
          %4475 = vxpose.xlu0.b32.cont [15/16] %v4364, 128
          %4476 = vxpose.xlu0.b32.end [16/16] %v4366, 128
          %v4477 = vpop.trf.xlu0
          %v4478 = vpop.trf.xlu0
          %v4479 = vpop.trf.xlu0
          %v4480 = vpop.trf.xlu0
          %v4481 = vpop.trf.xlu0
          %v4482 = vpop.trf.xlu0
          %v4483 = vpop.trf.xlu0
          %v4484 = vpop.trf.xlu0
          %v4485 = vpop.trf.xlu0
          %v4486 = vpop.trf.xlu0
          %v4487 = vpop.trf.xlu0
          %v4488 = vpop.trf.xlu0
          %v4489 = vpop.trf.xlu0
          %v4490 = vpop.trf.xlu0
          %v4491 = vpop.trf.xlu0
          %v4492 = vpop.trf.xlu0
          %v4495 = vcombine.low %v4445, %v4477
          %v4497 = vadd.f32 %v4428, %v4495
          %v4498 = vmax.f32 %v4497, 0.0
          %4499 = vst [vmem:[%s175] sm:$0xff] %v4498
        $region52: #{tpu_custom_call.1} parent=31 // pred_fallthru
          _
        %s4500 = sand.u32 %s105, 1
        %s4501 = scalar_lea.sflag [#allocation9], %s4500
        %s4502 = sand.u32 %s105, 1
        %s4503 = smul.addr %s4502, 8
        %s4504 = scalar_lea.vmem [#allocation8], %s4503
        // Predicated region
        $region53: #{tpu_custom_call.1} parent=31 // pred_check
          %p4505 = pneg %p115
        $region54: #{tpu_custom_call.1} parent=31 // pred_check_branch
          %4507 = sbr.rel (%p4505) target = $region56
        $region55: #{tpu_custom_call.1} parent=31 // pred_region
          %s4509 = ssub.s32 128, 128
          %4510 = vsyncadd %s4501, %s4509
          %s4511 = smul.addr %s22, 2
          %s4512 = smul.addr %s4511, 64
          %s4513 = scalar_lea.hbm %s3, %s4512
          %s4515 = sshll.u32 %s4504, 4
          %s4516 = int_to_ptr.vmem [resolvable:$true] %s4515
          %4518 = dma.vmem_to_hbm [thread:$0]  %s4516, 128, %s4513, %s4501
        $region56: #{tpu_custom_call.1} parent=31 // pred_fallthru
          _
      $region32: #{tpu_custom_call.1} parent=5 // pred_fallthru
        _
      %p4519 = scmp.le.s32.totalorder 2, %s12
      // Predicated region
      $region57: #{tpu_custom_call.1} parent=5 // pred_check
        %p4520 = pneg %p4519
      $region58: #{tpu_custom_call.1} parent=5 // pred_check_branch
        %4522 = sbr.rel (%p4520) target = $region60
      $region59: #{tpu_custom_call.1} parent=5 // pred_region
        %s4523 = ssub.s32 %s12, 2
        // Predicated region
        $region61: #{tpu_custom_call.1} parent=59 // pred_check
          %p4524 = pneg %p121
        $region62: #{tpu_custom_call.1} parent=59 // pred_check_branch
          %4526 = sbr.rel (%p4524) target = $region64
        $region63: #{tpu_custom_call.1} parent=59 // pred_region
          %s4527 = sand.u32 %s106, 1
          %s4528 = scalar_lea.sflag [#allocation9], %s4527
          %s4529 = sand.u32 %s106, 1
          %s4530 = smul.addr %s4529, 8
          %s4531 = scalar_lea.vmem [#allocation8], %s4530
          %4532 = dma.done %s4528, 128
        $region64: #{tpu_custom_call.1} parent=59 // pred_fallthru
          _
      $region60: #{tpu_custom_call.1} parent=5 // pred_fallthru
        _
    $region6: #{tpu_custom_call.1} parent=1 // loop_footer
      %s16 = sadd.s32 1, %s12
    $region7: #{tpu_custom_call.1} parent=1 // loop_footer_branch
      %11 = sbr.rel target = $region3
    $region8: #{tpu_custom_call.1} parent=1 // loop_exit
      _
    %4533 = vsyncpa [#allocation9], 1
    %s4534 = scalar_lea.sflag [#allocation9], 1
    %4535 = vsyncpa %s4534, 1

</llo_original>
